<compile_context>
chip_gen: v7x
topology: tpu7x:2x2x1
jax: 0.10.0
libtpu: 0.0.40
codegen_flags: <defaults>
</compile_context>

<pallas_src>
import jax
import jax.numpy as jnp
from jax.experimental import pallas as pl
from jax.experimental.pallas import tpu as pltpu


def _round_up(x: int, m: int) -> int:
    return ((x + m - 1) // m) * m


def untied_linear_kernel(x_ref, w_ref, b_ref, o_ref):
    # x_ref: (B, tn, C)  w_ref: (tn, C, td)  b_ref: (tn, td)  o_ref: (B, tn, td)
    # Batched matmul over the token axis; native input dtype, f32 accumulation.
    y = jnp.einsum(
        "btc,tcd->btd", x_ref[...], w_ref[...],
        preferred_element_type=jnp.float32)               # (B, tn, td) f32
    y = y + b_ref[...].astype(jnp.float32)[None, :, :]    # VPU bias add
    o_ref[...] = y.astype(o_ref.dtype)


def _choose_tiles(B, N, C, D, x_isz, w_isz, o_isz, b_isz, budget_bytes):
    def tile_bytes(tn, td):
        # Every block is double-buffered by the Pallas pipeline.
        return 2 * (tn * C * td * w_isz        # weight tile (dominant)
                    + B * tn * C * x_isz       # x tile
                    + B * tn * td * o_isz      # output tile
                    + tn * td * b_isz)         # bias tile

    # Block D (multiples of 128) only if a minimal token tile with full D
    # does not fit the VMEM budget.
    td = D
    while td > 128 and tile_bytes(8, td) > budget_bytes:
        td = _round_up(td // 2, 128)

    # Largest token tile (multiple of 8, capped at 512) that fits the budget.
    tn_cap = min(512, _round_up(N, 8))
    tn = 8
    while tn * 2 <= tn_cap and tile_bytes(tn * 2, td) <= budget_bytes:
        tn *= 2
    return min(tn, tn_cap), td


def untied_linear(x, weight, bias=None, *, vmem_budget_bytes=36 * 1024 * 1024):
    """UntiedLinear forward.

    x:      (B, N, C)
    weight: (N, D, C)   (PyTorch layout: seq_len, out_features, in_features)
    bias:   (N, D) or None
    returns (B, N, D)
    """
    B, N, C = x.shape
    Nw, D, Cw = weight.shape
    assert Nw == N and Cw == C, "weight must be (seq_len, out_features, in_features)"
    if bias is None:
        bias = jnp.zeros((N, D), weight.dtype)
    assert bias.shape == (N, D)

    out_dtype = x.dtype
    tn, td = _choose_tiles(
        B, N, C, D,
        x.dtype.itemsize, weight.dtype.itemsize,
        jnp.zeros((), out_dtype).dtype.itemsize, bias.dtype.itemsize,
        vmem_budget_bytes)

    # Wrapper-side layout plumbing: out_features last (lane axis).
    w_t = jnp.transpose(weight, (0, 2, 1))               # (N, C, D)

    # Pad ragged token / output dims up to a multiple of the tile sizes.
    Npad, Dpad = _round_up(N, tn), _round_up(D, td)
    x_p = jnp.pad(x, ((0, 0), (0, Npad - N), (0, 0))) if Npad != N else x
    w_p = (jnp.pad(w_t, ((0, Npad - N), (0, 0), (0, Dpad - D)))
           if (Npad, Dpad) != (N, D) else w_t)
    b_p = (jnp.pad(bias, ((0, Npad - N), (0, Dpad - D)))
           if (Npad, Dpad) != (N, D) else bias)

    grid = (Npad // tn, Dpad // td)

    bytes_accessed = (x.size * x.dtype.itemsize
                      + weight.size * weight.dtype.itemsize
                      + bias.size * bias.dtype.itemsize
                      + B * N * D * jnp.zeros((), out_dtype).dtype.itemsize)

    out = pl.pallas_call(
        untied_linear_kernel,
        out_shape=jax.ShapeDtypeStruct((B, Npad, Dpad), out_dtype),
        grid_spec=pltpu.PrefetchScalarGridSpec(
            num_scalar_prefetch=0,
            grid=grid,
            in_specs=[
                pl.BlockSpec((B, tn, C), lambda i, j: (0, i, 0)),    # x tile
                pl.BlockSpec((tn, C, td), lambda i, j: (i, 0, j)),   # weight tile
                pl.BlockSpec((tn, td), lambda i, j: (i, j)),         # bias tile
            ],
            out_specs=pl.BlockSpec((B, tn, td), lambda i, j: (0, i, j)),
        ),
        compiler_params=pltpu.CompilerParams(
            dimension_semantics=("parallel", "parallel"),
            vmem_limit_bytes=48 * 1024 * 1024),
        cost_estimate=pl.CostEstimate(
            flops=2 * B * N * C * D,
            transcendentals=0,
            bytes_accessed=int(bytes_accessed)),
    )(x_p, w_p, b_p)

    if (Npad, Dpad) != (N, D):
        out = out[:, :N, :D]
    # TODO(synk): for very large in_features (C), add an "arbitrary" reduction
    # grid axis over C with an f32 VMEM accumulator instead of holding full C.
    return out


if __name__ == "__main__":
    B, N, C, D = 2, 16, 32, 32   # batch, seq_len, in_features, out_features

    key = jax.random.PRNGKey(0)
    k1, k2, k3 = jax.random.split(key, 3)

    x = jax.random.normal(k1, (B, N, C), jnp.float32)
    # trunc_normal(std=0.02) init, PyTorch layout (seq_len, out, in).
    weight = 0.02 * jax.random.truncated_normal(k2, -2.0, 2.0, (N, D, C), jnp.float32)
    # PyTorch init is zeros; use small nonzero values so the bias path is exercised.
    bias = 0.02 * jax.random.normal(k3, (N, D), jnp.float32)

    out = jax.block_until_ready(untied_linear(x, weight, bias))

    # Plain-JAX reference mirroring the PyTorch forward:
    #   output = einsum('bnc,ndc->bnd', input, weight) + bias
    ref = jnp.einsum("bnc,ndc->bnd", x, weight) + bias[None]

    assert out.shape == (B, N, D)
    assert jnp.allclose(out, ref, atol=1e-4, rtol=1e-4)
    print("KERNEL_OK")
</pallas_src>

<mosaic_0001>
module attributes {stable_mosaic.version = 11 : i64} {
  func.func @untied_linear_kernel(%arg0: i32, %arg1: i32, %arg2: memref<2x16x32xf32, #tpu.memory_space<vmem>>, %arg3: memref<16x32x32xf32, #tpu.memory_space<vmem>>, %arg4: memref<16x32xf32, #tpu.memory_space<vmem>>, %arg5: memref<2x16x32xf32, #tpu.memory_space<vmem>>) attributes {dimension_semantics = [#tpu.dimension_semantics<parallel>, #tpu.dimension_semantics<parallel>], iteration_bounds = array<i64: 1, 1>, scalar_prefetch = 0 : i64, scratch_operands = 0 : i64, tpu.core_type = #tpu.core_type<tc>, window_params = [{transform_indices = @transform_0, window_bounds = array<i64: 2, 16, 32>}, {transform_indices = @transform_1, window_bounds = array<i64: 16, 32, 32>}, {transform_indices = @transform_2, window_bounds = array<i64: 16, 32>}, {transform_indices = @transform_3, window_bounds = array<i64: 2, 16, 32>}]} {
    %c0 = arith.constant 0 : index
    %c0_0 = arith.constant 0 : index
    %c0_1 = arith.constant 0 : index
    %0 = vector.load %arg2[%c0, %c0_0, %c0_1] : memref<2x16x32xf32, #tpu.memory_space<vmem>>, vector<2x16x32xf32>
    %c0_2 = arith.constant 0 : index
    %c0_3 = arith.constant 0 : index
    %c0_4 = arith.constant 0 : index
    %1 = vector.load %arg3[%c0_2, %c0_3, %c0_4] : memref<16x32x32xf32, #tpu.memory_space<vmem>>, vector<16x32x32xf32>
    "tpu.trace_start"() <{level = 10 : i32, message = "btc,tcd->btd"}> : () -> ()
    %cst = arith.constant dense<0.000000e+00> : vector<16x32x2xf32>
    %2 = tpu.matmul %1, %0, %cst {dimension_numbers = #tpu.dot_dimension_numbers<[1], [2], [2], [0], [0, 0, 0, 2, 1, 0], [0], [1]>} : vector<16x32x32xf32>, vector<2x16x32xf32>, vector<16x32x2xf32> -> vector<16x32x2xf32>
    %3 = tpu.transpose %2, [2, 0, 1] : vector<16x32x2xf32> -> vector<2x16x32xf32>
    "tpu.trace_stop"() : () -> ()
    %c0_5 = arith.constant 0 : index
    %c0_6 = arith.constant 0 : index
    %4 = vector.load %arg4[%c0_5, %c0_6] : memref<16x32xf32, #tpu.memory_space<vmem>>, vector<16x32xf32>
    %5 = vector.shape_cast %4 : vector<16x32xf32> to vector<1x16x32xf32>
    %6 = vector.broadcast %5 : vector<1x16x32xf32> to vector<2x16x32xf32>
    %7 = arith.addf %3, %6 : vector<2x16x32xf32>
    %c0_7 = arith.constant 0 : index
    %c0_8 = arith.constant 0 : index
    %c0_9 = arith.constant 0 : index
    %8 = vector.load %arg5[%c0_7, %c0_8, %c0_9] : memref<2x16x32xf32, #tpu.memory_space<vmem>>, vector<2x16x32xf32>
    tpu.vector_store %arg5[%c0_7, %c0_8, %c0_9], %7 {strides = array<i32>} : memref<2x16x32xf32, #tpu.memory_space<vmem>>, vector<2x16x32xf32>,
    return
  }
  func.func @transform_0(%arg0: i32, %arg1: i32) -> (i32, i32, i32) {
    %c0_i32 = arith.constant 0 : i32
    %c0_i32_0 = arith.constant 0 : i32
    %c0_i32_1 = arith.constant 0 : i32
    return %c0_i32, %arg0, %c0_i32_0 : i32, i32, i32
  }
  func.func @transform_1(%arg0: i32, %arg1: i32) -> (i32, i32, i32) {
    %c0_i32 = arith.constant 0 : i32
    %c0_i32_0 = arith.constant 0 : i32
    return %arg0, %c0_i32, %arg1 : i32, i32, i32
  }
  func.func @transform_2(%arg0: i32, %arg1: i32) -> (i32, i32) {
    %c0_i32 = arith.constant 0 : i32
    return %arg0, %arg1 : i32, i32
  }
  func.func @transform_3(%arg0: i32, %arg1: i32) -> (i32, i32, i32) {
    %c0_i32 = arith.constant 0 : i32
    %c0_i32_0 = arith.constant 0 : i32
    return %c0_i32, %arg0, %arg1 : i32, i32, i32
  }
}

</mosaic_0001>

<llo_original>
// kernel: tpu_custom_call.1
$region0: #{tpu_custom_call.1}
  #allocation0 [shape = 'u32[]', space=smem, size = 0x4, offset = 0x4, fixed_abs, tag = 'smem constant byte address 0x4 - core index']
  #allocation1 [shape = 'u32[144,128]{1,0:T(1,128)}', space=vmem, size = 0x12000, scoped, tag = 'internal scratch']
  %s0 = inlined_call_operand.hbm [shape: f32[2,16,32], index: 0, kind: input, shape index: {}]
  %s1 = inlined_call_operand.hbm [shape: f32[16,32,32], index: 1, kind: input, shape index: {}]
  %s2 = inlined_call_operand.hbm [shape: f32[16,32], index: 2, kind: input, shape index: {}]
  %s3 = inlined_call_operand.hbm [shape: f32[2,16,32], index: 3, kind: output, shape index: {}]
  %s4 = sld [smem:[#allocation0]]
  $region34: #{tpu_custom_call.1} parent=0
    _
  %s6 = ssub.s32 1, %s4
  %s7 = scalar_select 0, %s6, %s4
  $region1: #{tpu_custom_call.1} parent=0
    #allocation2 [shape = 'u8[16384]{0}', space=vmem, size = 0x4000, scoped, tag = 'input window, operand 0, single buffered']
    #allocation3 [shape = 's32[1]{0}', space=sflag, size = 0x4, scoped, tag = 'scoped memory for tpu_custom_call.1']
    #allocation4 [shape = 's32[1]{0}', space=sflag, size = 0x4, scoped, tag = 'scoped memory for tpu_custom_call.1']
    #allocation5 [shape = 'u8[262144]{0}', space=vmem, size = 0x40000, scoped, tag = 'input window, operand 1, single buffered']
    #allocation6 [shape = 's32[1]{0}', space=sflag, size = 0x4, scoped, tag = 'scoped memory for tpu_custom_call.1']
    #allocation7 [shape = 'u8[8192]{0}', space=vmem, size = 0x2000, scoped, tag = 'input window, operand 2, single buffered']
    #allocation8 [shape = 'u8[16384]{0}', space=vmem, size = 0x4000, scoped, tag = 'output window, operand 0, single buffered']
    %8 = vsyncpa [#allocation3], 0
    %9 = vsyncpa [#allocation6], 0
    %10 = vsyncpa [#allocation4], 0
    // Predicated region
    $region2: #{tpu_custom_call.1} parent=1 // pred_check
      _
    $region3: #{tpu_custom_call.1} parent=1 // pred_check_branch
      %12 = sbr.rel (0) target = $region5
    $region4: #{tpu_custom_call.1} parent=1 // pred_region
      %s14 = ssub.s32 512, 512
      %15 = vsyncadd [#allocation3], %s14
      %s16 = sshll.u32 [#allocation2], 4
      %s17 = int_to_ptr.vmem [resolvable:$true] %s16
      %22 = dma.hbm_to_vmem [thread:$0]  %s0, 512, %s17, [#allocation3], 128, 128, 8
    $region5: #{tpu_custom_call.1} parent=1 // pred_fallthru
      _
    // Predicated region
    $region6: #{tpu_custom_call.1} parent=1 // pred_check
      _
    $region7: #{tpu_custom_call.1} parent=1 // pred_check_branch
      %24 = sbr.rel (0) target = $region9
    $region8: #{tpu_custom_call.1} parent=1 // pred_region
      %s26 = ssub.s32 8192, 8192
      %27 = vsyncadd [#allocation6], %s26
      %s28 = sshll.u32 [#allocation5], 4
      %s29 = int_to_ptr.vmem [resolvable:$true] %s28
      %34 = dma.hbm_to_vmem [thread:$0]  %s1, 8192, %s29, [#allocation6], 128, 128, 8
    $region9: #{tpu_custom_call.1} parent=1 // pred_fallthru
      _
    // Predicated region
    $region10: #{tpu_custom_call.1} parent=1 // pred_check
      _
    $region11: #{tpu_custom_call.1} parent=1 // pred_check_branch
      %36 = sbr.rel (0) target = $region13
    $region12: #{tpu_custom_call.1} parent=1 // pred_region
      %s38 = ssub.s32 256, 256
      %39 = vsyncadd [#allocation6], %s38
      %s40 = sshll.u32 [#allocation7], 4
      %s41 = int_to_ptr.vmem [resolvable:$true] %s40
      %46 = dma.hbm_to_vmem [thread:$0]  %s2, 256, %s41, [#allocation6], 128, 128, 8
    $region13: #{tpu_custom_call.1} parent=1 // pred_fallthru
      _
    // Predicated region
    $region14: #{tpu_custom_call.1} parent=1 // pred_check
      _
    $region15: #{tpu_custom_call.1} parent=1 // pred_check_branch
      %48 = sbr.rel (0) target = $region17
    $region16: #{tpu_custom_call.1} parent=1 // pred_region
      %49 = dma.done [#allocation3], 512
    $region17: #{tpu_custom_call.1} parent=1 // pred_fallthru
      _
    // Predicated region
    $region18: #{tpu_custom_call.1} parent=1 // pred_check
      _
    $region19: #{tpu_custom_call.1} parent=1 // pred_check_branch
      %51 = sbr.rel (0) target = $region21
    $region20: #{tpu_custom_call.1} parent=1 // pred_region
      %52 = dma.done [#allocation6], 8192
    $region21: #{tpu_custom_call.1} parent=1 // pred_fallthru
      _
    // Predicated region
    $region22: #{tpu_custom_call.1} parent=1 // pred_check
      _
    $region23: #{tpu_custom_call.1} parent=1 // pred_check_branch
      %54 = sbr.rel (0) target = $region25
    $region24: #{tpu_custom_call.1} parent=1 // pred_region
      %55 = dma.done [#allocation6], 256
    $region25: #{tpu_custom_call.1} parent=1 // pred_fallthru
      _
    %v56 = vld [vmem:[#allocation2] sm:$0xff]
    %v57 = vld [vmem:[#allocation2 + $0x8] sm:$0xff]
    %v58 = vld [vmem:[#allocation2 + $0x10] sm:$0xff]
    %v59 = vld [vmem:[#allocation2 + $0x18] sm:$0xff]
    %v60 = vld [vmem:[#allocation5] sm:$0xff]
    %v61 = vld [vmem:[#allocation5 + $0x8] sm:$0xff]
    %v62 = vld [vmem:[#allocation5 + $0x10] sm:$0xff]
    %v63 = vld [vmem:[#allocation5 + $0x18] sm:$0xff]
    %v64 = vld [vmem:[#allocation5 + $0x20] sm:$0xff]
    %v65 = vld [vmem:[#allocation5 + $0x28] sm:$0xff]
    %v66 = vld [vmem:[#allocation5 + $0x30] sm:$0xff]
    %v67 = vld [vmem:[#allocation5 + $0x38] sm:$0xff]
    %v68 = vld [vmem:[#allocation5 + $0x40] sm:$0xff]
    %v69 = vld [vmem:[#allocation5 + $0x48] sm:$0xff]
    %v70 = vld [vmem:[#allocation5 + $0x50] sm:$0xff]
    %v71 = vld [vmem:[#allocation5 + $0x58] sm:$0xff]
    %v72 = vld [vmem:[#allocation5 + $0x60] sm:$0xff]
    %v73 = vld [vmem:[#allocation5 + $0x68] sm:$0xff]
    %v74 = vld [vmem:[#allocation5 + $0x70] sm:$0xff]
    %v75 = vld [vmem:[#allocation5 + $0x78] sm:$0xff]
    %v76 = vld [vmem:[#allocation5 + $0x80] sm:$0xff]
    %v77 = vld [vmem:[#allocation5 + $0x88] sm:$0xff]
    %v78 = vld [vmem:[#allocation5 + $0x90] sm:$0xff]
    %v79 = vld [vmem:[#allocation5 + $0x98] sm:$0xff]
    %v80 = vld [vmem:[#allocation5 + $0xa0] sm:$0xff]
    %v81 = vld [vmem:[#allocation5 + $0xa8] sm:$0xff]
    %v82 = vld [vmem:[#allocation5 + $0xb0] sm:$0xff]
    %v83 = vld [vmem:[#allocation5 + $0xb8] sm:$0xff]
    %v84 = vld [vmem:[#allocation5 + $0xc0] sm:$0xff]
    %v85 = vld [vmem:[#allocation5 + $0xc8] sm:$0xff]
    %v86 = vld [vmem:[#allocation5 + $0xd0] sm:$0xff]
    %v87 = vld [vmem:[#allocation5 + $0xd8] sm:$0xff]
    %v88 = vld [vmem:[#allocation5 + $0xe0] sm:$0xff]
    %v89 = vld [vmem:[#allocation5 + $0xe8] sm:$0xff]
    %v90 = vld [vmem:[#allocation5 + $0xf0] sm:$0xff]
    %v91 = vld [vmem:[#allocation5 + $0xf8] sm:$0xff]
    %v92 = vld [vmem:[#allocation5 + $0x100] sm:$0xff]
    %v93 = vld [vmem:[#allocation5 + $0x108] sm:$0xff]
    %v94 = vld [vmem:[#allocation5 + $0x110] sm:$0xff]
    %v95 = vld [vmem:[#allocation5 + $0x118] sm:$0xff]
    %v96 = vld [vmem:[#allocation5 + $0x120] sm:$0xff]
    %v97 = vld [vmem:[#allocation5 + $0x128] sm:$0xff]
    %v98 = vld [vmem:[#allocation5 + $0x130] sm:$0xff]
    %v99 = vld [vmem:[#allocation5 + $0x138] sm:$0xff]
    %v100 = vld [vmem:[#allocation5 + $0x140] sm:$0xff]
    %v101 = vld [vmem:[#allocation5 + $0x148] sm:$0xff]
    %v102 = vld [vmem:[#allocation5 + $0x150] sm:$0xff]
    %v103 = vld [vmem:[#allocation5 + $0x158] sm:$0xff]
    %v104 = vld [vmem:[#allocation5 + $0x160] sm:$0xff]
    %v105 = vld [vmem:[#allocation5 + $0x168] sm:$0xff]
    %v106 = vld [vmem:[#allocation5 + $0x170] sm:$0xff]
    %v107 = vld [vmem:[#allocation5 + $0x178] sm:$0xff]
    %v108 = vld [vmem:[#allocation5 + $0x180] sm:$0xff]
    %v109 = vld [vmem:[#allocation5 + $0x188] sm:$0xff]
    %v110 = vld [vmem:[#allocation5 + $0x190] sm:$0xff]
    %v111 = vld [vmem:[#allocation5 + $0x198] sm:$0xff]
    %v112 = vld [vmem:[#allocation5 + $0x1a0] sm:$0xff]
    %v113 = vld [vmem:[#allocation5 + $0x1a8] sm:$0xff]
    %v114 = vld [vmem:[#allocation5 + $0x1b0] sm:$0xff]
    %v115 = vld [vmem:[#allocation5 + $0x1b8] sm:$0xff]
    %v116 = vld [vmem:[#allocation5 + $0x1c0] sm:$0xff]
    %v117 = vld [vmem:[#allocation5 + $0x1c8] sm:$0xff]
    %v118 = vld [vmem:[#allocation5 + $0x1d0] sm:$0xff]
    %v119 = vld [vmem:[#allocation5 + $0x1d8] sm:$0xff]
    %v120 = vld [vmem:[#allocation5 + $0x1e0] sm:$0xff]
    %v121 = vld [vmem:[#allocation5 + $0x1e8] sm:$0xff]
    %v122 = vld [vmem:[#allocation5 + $0x1f0] sm:$0xff]
    %v123 = vld [vmem:[#allocation5 + $0x1f8] sm:$0xff]
    %124 = vxpose.xlu0.b32.start [1/16] %v56, 128
    %125 = vxpose.xlu0.b32.cont [2/16] %v57, 128
    %126 = vxpose.xlu0.b32.cont [3/16] 0.0, 128
    %127 = vxpose.xlu0.b32.cont [4/16] 0.0, 128
    %128 = vxpose.xlu0.b32.cont [5/16] 0.0, 128
    %129 = vxpose.xlu0.b32.cont [6/16] 0.0, 128
    %130 = vxpose.xlu0.b32.cont [7/16] 0.0, 128
    %131 = vxpose.xlu0.b32.cont [8/16] 0.0, 128
    %132 = vxpose.xlu0.b32.cont [9/16] 0.0, 128
    %133 = vxpose.xlu0.b32.cont [10/16] 0.0, 128
    %134 = vxpose.xlu0.b32.cont [11/16] 0.0, 128
    %135 = vxpose.xlu0.b32.cont [12/16] 0.0, 128
    %136 = vxpose.xlu0.b32.cont [13/16] 0.0, 128
    %137 = vxpose.xlu0.b32.cont [14/16] 0.0, 128
    %138 = vxpose.xlu0.b32.cont [15/16] 0.0, 128
    %139 = vxpose.xlu0.b32.end [16/16] 0.0, 128
    %v140 = vpop.trf.xlu0
    %v141 = vpop.trf.xlu0
    %v142 = vpop.trf.xlu0
    %v143 = vpop.trf.xlu0
    %v144 = vpop.trf.xlu0
    %v145 = vpop.trf.xlu0
    %v146 = vpop.trf.xlu0
    %v147 = vpop.trf.xlu0
    %v148 = vpop.trf.xlu0
    %v149 = vpop.trf.xlu0
    %v150 = vpop.trf.xlu0
    %v151 = vpop.trf.xlu0
    %v152 = vpop.trf.xlu0
    %v153 = vpop.trf.xlu0
    %v154 = vpop.trf.xlu0
    %v155 = vpop.trf.xlu0
    %156 = vxpose.xlu0.b32.start [1/16] %v58, 128
    %157 = vxpose.xlu0.b32.cont [2/16] %v59, 128
    %158 = vxpose.xlu0.b32.cont [3/16] 0.0, 128
    %159 = vxpose.xlu0.b32.cont [4/16] 0.0, 128
    %160 = vxpose.xlu0.b32.cont [5/16] 0.0, 128
    %161 = vxpose.xlu0.b32.cont [6/16] 0.0, 128
    %162 = vxpose.xlu0.b32.cont [7/16] 0.0, 128
    %163 = vxpose.xlu0.b32.cont [8/16] 0.0, 128
    %164 = vxpose.xlu0.b32.cont [9/16] 0.0, 128
    %165 = vxpose.xlu0.b32.cont [10/16] 0.0, 128
    %166 = vxpose.xlu0.b32.cont [11/16] 0.0, 128
    %167 = vxpose.xlu0.b32.cont [12/16] 0.0, 128
    %168 = vxpose.xlu0.b32.cont [13/16] 0.0, 128
    %169 = vxpose.xlu0.b32.cont [14/16] 0.0, 128
    %170 = vxpose.xlu0.b32.cont [15/16] 0.0, 128
    %171 = vxpose.xlu0.b32.end [16/16] 0.0, 128
    %v172 = vpop.trf.xlu0
    %v173 = vpop.trf.xlu0
    %v174 = vpop.trf.xlu0
    %v175 = vpop.trf.xlu0
    %v176 = vpop.trf.xlu0
    %v177 = vpop.trf.xlu0
    %v178 = vpop.trf.xlu0
    %v179 = vpop.trf.xlu0
    %v180 = vpop.trf.xlu0
    %v181 = vpop.trf.xlu0
    %v182 = vpop.trf.xlu0
    %v183 = vpop.trf.xlu0
    %v184 = vpop.trf.xlu0
    %v185 = vpop.trf.xlu0
    %v186 = vpop.trf.xlu0
    %v187 = vpop.trf.xlu0
    %v188 = vcombine.high %v140, 0.0
    %v190 = vunpack.c.l.s4 1983009808
    %v191 = vunpack.c.0.s8 %v190
    %v192 = vlaneseq
    %v193 = vshrl.u32 %v192, 7
    %v194 = vsub.s32 %v191, %v193
    %v195 = vrot.slane %v140, %v194
    %v197 = vunpack.c.l.s4 1983009808
    %v198 = vunpack.c.0.s8 %v197
    %v199 = vlaneseq
    %v200 = vshrl.u32 %v199, 7
    %v201 = vsub.s32 %v198, %v200
    %v202 = vrot.slane %v188, %v201
    %v203 = vcombine.high %v172, 0.0
    %v205 = vunpack.c.l.s4 1983009808
    %v206 = vunpack.c.0.s8 %v205
    %v207 = vlaneseq
    %v208 = vshrl.u32 %v207, 7
    %v209 = vsub.s32 %v206, %v208
    %v210 = vrot.slane %v172, %v209
    %v212 = vunpack.c.l.s4 1983009808
    %v213 = vunpack.c.0.s8 %v212
    %v214 = vlaneseq
    %v215 = vshrl.u32 %v214, 7
    %v216 = vsub.s32 %v213, %v215
    %v217 = vrot.slane %v203, %v216
    %v218 = vcombine.low %v195, %v210
    %v219 = vcombine.high %v195, %v210
    %v221 = vunpack.c.l.s4 1934713408
    %v222 = vunpack.c.0.s8 %v221
    %v223 = vlaneseq
    %v224 = vshrl.u32 %v223, 7
    %v225 = vsub.s32 %v222, %v224
    %v226 = vrot.slane %v218, %v225
    %v228 = vunpack.c.l.s4 1934713408
    %v229 = vunpack.c.0.s8 %v228
    %v230 = vlaneseq
    %v231 = vshrl.u32 %v230, 7
    %v232 = vsub.s32 %v229, %v231
    %v233 = vrot.slane %v219, %v232
    %v234 = vcombine.low %v202, %v217
    %v235 = vcombine.high %v202, %v217
    %v237 = vunpack.c.l.s4 1934713408
    %v238 = vunpack.c.0.s8 %v237
    %v239 = vlaneseq
    %v240 = vshrl.u32 %v239, 7
    %v241 = vsub.s32 %v238, %v240
    %v242 = vrot.slane %v234, %v241
    %v244 = vunpack.c.l.s4 1934713408
    %v245 = vunpack.c.0.s8 %v244
    %v246 = vlaneseq
    %v247 = vshrl.u32 %v246, 7
    %v248 = vsub.s32 %v245, %v247
    %v249 = vrot.slane %v235, %v248
    %v250 = vcombine.high %v226, 0.0
    %v251 = vcombine.high %v233, 0.0
    %v252 = vcombine.high %v242, 0.0
    %v253 = vcombine.high %v249, 0.0
    %v254 = vcombine.high %v141, 0.0
    %v256 = vunpack.c.l.s4 1983009808
    %v257 = vunpack.c.0.s8 %v256
    %v258 = vlaneseq
    %v259 = vshrl.u32 %v258, 7
    %v260 = vsub.s32 %v257, %v259
    %v261 = vrot.slane %v141, %v260
    %v263 = vunpack.c.l.s4 1983009808
    %v264 = vunpack.c.0.s8 %v263
    %v265 = vlaneseq
    %v266 = vshrl.u32 %v265, 7
    %v267 = vsub.s32 %v264, %v266
    %v268 = vrot.slane %v254, %v267
    %v269 = vcombine.high %v173, 0.0
    %v271 = vunpack.c.l.s4 1983009808
    %v272 = vunpack.c.0.s8 %v271
    %v273 = vlaneseq
    %v274 = vshrl.u32 %v273, 7
    %v275 = vsub.s32 %v272, %v274
    %v276 = vrot.slane %v173, %v275
    %v278 = vunpack.c.l.s4 1983009808
    %v279 = vunpack.c.0.s8 %v278
    %v280 = vlaneseq
    %v281 = vshrl.u32 %v280, 7
    %v282 = vsub.s32 %v279, %v281
    %v283 = vrot.slane %v269, %v282
    %v284 = vcombine.low %v261, %v276
    %v285 = vcombine.high %v261, %v276
    %v287 = vunpack.c.l.s4 1934713408
    %v288 = vunpack.c.0.s8 %v287
    %v289 = vlaneseq
    %v290 = vshrl.u32 %v289, 7
    %v291 = vsub.s32 %v288, %v290
    %v292 = vrot.slane %v284, %v291
    %v294 = vunpack.c.l.s4 1934713408
    %v295 = vunpack.c.0.s8 %v294
    %v296 = vlaneseq
    %v297 = vshrl.u32 %v296, 7
    %v298 = vsub.s32 %v295, %v297
    %v299 = vrot.slane %v285, %v298
    %v300 = vcombine.low %v268, %v283
    %v301 = vcombine.high %v268, %v283
    %v303 = vunpack.c.l.s4 1934713408
    %v304 = vunpack.c.0.s8 %v303
    %v305 = vlaneseq
    %v306 = vshrl.u32 %v305, 7
    %v307 = vsub.s32 %v304, %v306
    %v308 = vrot.slane %v300, %v307
    %v310 = vunpack.c.l.s4 1934713408
    %v311 = vunpack.c.0.s8 %v310
    %v312 = vlaneseq
    %v313 = vshrl.u32 %v312, 7
    %v314 = vsub.s32 %v311, %v313
    %v315 = vrot.slane %v301, %v314
    %v316 = vcombine.high %v292, 0.0
    %v317 = vcombine.high %v299, 0.0
    %v318 = vcombine.high %v308, 0.0
    %v319 = vcombine.high %v315, 0.0
    %v320 = vcombine.high %v142, 0.0
    %v322 = vunpack.c.l.s4 1983009808
    %v323 = vunpack.c.0.s8 %v322
    %v324 = vlaneseq
    %v325 = vshrl.u32 %v324, 7
    %v326 = vsub.s32 %v323, %v325
    %v327 = vrot.slane %v142, %v326
    %v329 = vunpack.c.l.s4 1983009808
    %v330 = vunpack.c.0.s8 %v329
    %v331 = vlaneseq
    %v332 = vshrl.u32 %v331, 7
    %v333 = vsub.s32 %v330, %v332
    %v334 = vrot.slane %v320, %v333
    %v335 = vcombine.high %v174, 0.0
    %v337 = vunpack.c.l.s4 1983009808
    %v338 = vunpack.c.0.s8 %v337
    %v339 = vlaneseq
    %v340 = vshrl.u32 %v339, 7
    %v341 = vsub.s32 %v338, %v340
    %v342 = vrot.slane %v174, %v341
    %v344 = vunpack.c.l.s4 1983009808
    %v345 = vunpack.c.0.s8 %v344
    %v346 = vlaneseq
    %v347 = vshrl.u32 %v346, 7
    %v348 = vsub.s32 %v345, %v347
    %v349 = vrot.slane %v335, %v348
    %v350 = vcombine.low %v327, %v342
    %v351 = vcombine.high %v327, %v342
    %v353 = vunpack.c.l.s4 1934713408
    %v354 = vunpack.c.0.s8 %v353
    %v355 = vlaneseq
    %v356 = vshrl.u32 %v355, 7
    %v357 = vsub.s32 %v354, %v356
    %v358 = vrot.slane %v350, %v357
    %v360 = vunpack.c.l.s4 1934713408
    %v361 = vunpack.c.0.s8 %v360
    %v362 = vlaneseq
    %v363 = vshrl.u32 %v362, 7
    %v364 = vsub.s32 %v361, %v363
    %v365 = vrot.slane %v351, %v364
    %v366 = vcombine.low %v334, %v349
    %v367 = vcombine.high %v334, %v349
    %v369 = vunpack.c.l.s4 1934713408
    %v370 = vunpack.c.0.s8 %v369
    %v371 = vlaneseq
    %v372 = vshrl.u32 %v371, 7
    %v373 = vsub.s32 %v370, %v372
    %v374 = vrot.slane %v366, %v373
    %v376 = vunpack.c.l.s4 1934713408
    %v377 = vunpack.c.0.s8 %v376
    %v378 = vlaneseq
    %v379 = vshrl.u32 %v378, 7
    %v380 = vsub.s32 %v377, %v379
    %v381 = vrot.slane %v367, %v380
    %v382 = vcombine.high %v358, 0.0
    %v383 = vcombine.high %v365, 0.0
    %v384 = vcombine.high %v374, 0.0
    %v385 = vcombine.high %v381, 0.0
    %v386 = vcombine.high %v143, 0.0
    %v388 = vunpack.c.l.s4 1983009808
    %v389 = vunpack.c.0.s8 %v388
    %v390 = vlaneseq
    %v391 = vshrl.u32 %v390, 7
    %v392 = vsub.s32 %v389, %v391
    %v393 = vrot.slane %v143, %v392
    %v395 = vunpack.c.l.s4 1983009808
    %v396 = vunpack.c.0.s8 %v395
    %v397 = vlaneseq
    %v398 = vshrl.u32 %v397, 7
    %v399 = vsub.s32 %v396, %v398
    %v400 = vrot.slane %v386, %v399
    %v401 = vcombine.high %v175, 0.0
    %v403 = vunpack.c.l.s4 1983009808
    %v404 = vunpack.c.0.s8 %v403
    %v405 = vlaneseq
    %v406 = vshrl.u32 %v405, 7
    %v407 = vsub.s32 %v404, %v406
    %v408 = vrot.slane %v175, %v407
    %v410 = vunpack.c.l.s4 1983009808
    %v411 = vunpack.c.0.s8 %v410
    %v412 = vlaneseq
    %v413 = vshrl.u32 %v412, 7
    %v414 = vsub.s32 %v411, %v413
    %v415 = vrot.slane %v401, %v414
    %v416 = vcombine.low %v393, %v408
    %v417 = vcombine.high %v393, %v408
    %v419 = vunpack.c.l.s4 1934713408
    %v420 = vunpack.c.0.s8 %v419
    %v421 = vlaneseq
    %v422 = vshrl.u32 %v421, 7
    %v423 = vsub.s32 %v420, %v422
    %v424 = vrot.slane %v416, %v423
    %v426 = vunpack.c.l.s4 1934713408
    %v427 = vunpack.c.0.s8 %v426
    %v428 = vlaneseq
    %v429 = vshrl.u32 %v428, 7
    %v430 = vsub.s32 %v427, %v429
    %v431 = vrot.slane %v417, %v430
    %v432 = vcombine.low %v400, %v415
    %v433 = vcombine.high %v400, %v415
    %v435 = vunpack.c.l.s4 1934713408
    %v436 = vunpack.c.0.s8 %v435
    %v437 = vlaneseq
    %v438 = vshrl.u32 %v437, 7
    %v439 = vsub.s32 %v436, %v438
    %v440 = vrot.slane %v432, %v439
    %v442 = vunpack.c.l.s4 1934713408
    %v443 = vunpack.c.0.s8 %v442
    %v444 = vlaneseq
    %v445 = vshrl.u32 %v444, 7
    %v446 = vsub.s32 %v443, %v445
    %v447 = vrot.slane %v433, %v446
    %v448 = vcombine.high %v424, 0.0
    %v449 = vcombine.high %v431, 0.0
    %v450 = vcombine.high %v440, 0.0
    %v451 = vcombine.high %v447, 0.0
    %452 = vxpose.xlu0.b32.start [1/16] %v226, 128
    %453 = vxpose.xlu0.b32.cont [2/16] 0.0, 128
    %454 = vxpose.xlu0.b32.cont [3/16] 0.0, 128
    %455 = vxpose.xlu0.b32.cont [4/16] 0.0, 128
    %456 = vxpose.xlu0.b32.cont [5/16] 0.0, 128
    %457 = vxpose.xlu0.b32.cont [6/16] 0.0, 128
    %458 = vxpose.xlu0.b32.cont [7/16] 0.0, 128
    %459 = vxpose.xlu0.b32.cont [8/16] 0.0, 128
    %460 = vxpose.xlu0.b32.cont [9/16] 0.0, 128
    %461 = vxpose.xlu0.b32.cont [10/16] 0.0, 128
    %462 = vxpose.xlu0.b32.cont [11/16] 0.0, 128
    %463 = vxpose.xlu0.b32.cont [12/16] 0.0, 128
    %464 = vxpose.xlu0.b32.cont [13/16] 0.0, 128
    %465 = vxpose.xlu0.b32.cont [14/16] 0.0, 128
    %466 = vxpose.xlu0.b32.cont [15/16] 0.0, 128
    %467 = vxpose.xlu0.b32.end [16/16] 0.0, 128
    %v468 = vpop.trf.xlu0
    %v469 = vpop.trf.xlu0
    %v470 = vpop.trf.xlu0
    %v471 = vpop.trf.xlu0
    %v472 = vpop.trf.xlu0
    %v473 = vpop.trf.xlu0
    %v474 = vpop.trf.xlu0
    %v475 = vpop.trf.xlu0
    %v476 = vpop.trf.xlu0
    %v477 = vpop.trf.xlu0
    %v478 = vpop.trf.xlu0
    %v479 = vpop.trf.xlu0
    %v480 = vpop.trf.xlu0
    %v481 = vpop.trf.xlu0
    %v482 = vpop.trf.xlu0
    %v483 = vpop.trf.xlu0
    %484 = vxpose.xlu0.b32.start [1/16] %v250, 128
    %485 = vxpose.xlu0.b32.cont [2/16] 0.0, 128
    %486 = vxpose.xlu0.b32.cont [3/16] 0.0, 128
    %487 = vxpose.xlu0.b32.cont [4/16] 0.0, 128
    %488 = vxpose.xlu0.b32.cont [5/16] 0.0, 128
    %489 = vxpose.xlu0.b32.cont [6/16] 0.0, 128
    %490 = vxpose.xlu0.b32.cont [7/16] 0.0, 128
    %491 = vxpose.xlu0.b32.cont [8/16] 0.0, 128
    %492 = vxpose.xlu0.b32.cont [9/16] 0.0, 128
    %493 = vxpose.xlu0.b32.cont [10/16] 0.0, 128
    %494 = vxpose.xlu0.b32.cont [11/16] 0.0, 128
    %495 = vxpose.xlu0.b32.cont [12/16] 0.0, 128
    %496 = vxpose.xlu0.b32.cont [13/16] 0.0, 128
    %497 = vxpose.xlu0.b32.cont [14/16] 0.0, 128
    %498 = vxpose.xlu0.b32.cont [15/16] 0.0, 128
    %499 = vxpose.xlu0.b32.end [16/16] 0.0, 128
    %v500 = vpop.trf.xlu0
    %v501 = vpop.trf.xlu0
    %v502 = vpop.trf.xlu0
    %v503 = vpop.trf.xlu0
    %v504 = vpop.trf.xlu0
    %v505 = vpop.trf.xlu0
    %v506 = vpop.trf.xlu0
    %v507 = vpop.trf.xlu0
    %v508 = vpop.trf.xlu0
    %v509 = vpop.trf.xlu0
    %v510 = vpop.trf.xlu0
    %v511 = vpop.trf.xlu0
    %v512 = vpop.trf.xlu0
    %v513 = vpop.trf.xlu0
    %v514 = vpop.trf.xlu0
    %v515 = vpop.trf.xlu0
    %516 = vxpose.xlu0.b32.start [1/16] %v233, 128
    %517 = vxpose.xlu0.b32.cont [2/16] 0.0, 128
    %518 = vxpose.xlu0.b32.cont [3/16] 0.0, 128
    %519 = vxpose.xlu0.b32.cont [4/16] 0.0, 128
    %520 = vxpose.xlu0.b32.cont [5/16] 0.0, 128
    %521 = vxpose.xlu0.b32.cont [6/16] 0.0, 128
    %522 = vxpose.xlu0.b32.cont [7/16] 0.0, 128
    %523 = vxpose.xlu0.b32.cont [8/16] 0.0, 128
    %524 = vxpose.xlu0.b32.cont [9/16] 0.0, 128
    %525 = vxpose.xlu0.b32.cont [10/16] 0.0, 128
    %526 = vxpose.xlu0.b32.cont [11/16] 0.0, 128
    %527 = vxpose.xlu0.b32.cont [12/16] 0.0, 128
    %528 = vxpose.xlu0.b32.cont [13/16] 0.0, 128
    %529 = vxpose.xlu0.b32.cont [14/16] 0.0, 128
    %530 = vxpose.xlu0.b32.cont [15/16] 0.0, 128
    %531 = vxpose.xlu0.b32.end [16/16] 0.0, 128
    %v532 = vpop.trf.xlu0
    %v533 = vpop.trf.xlu0
    %v534 = vpop.trf.xlu0
    %v535 = vpop.trf.xlu0
    %v536 = vpop.trf.xlu0
    %v537 = vpop.trf.xlu0
    %v538 = vpop.trf.xlu0
    %v539 = vpop.trf.xlu0
    %v540 = vpop.trf.xlu0
    %v541 = vpop.trf.xlu0
    %v542 = vpop.trf.xlu0
    %v543 = vpop.trf.xlu0
    %v544 = vpop.trf.xlu0
    %v545 = vpop.trf.xlu0
    %v546 = vpop.trf.xlu0
    %v547 = vpop.trf.xlu0
    %548 = vxpose.xlu0.b32.start [1/16] %v251, 128
    %549 = vxpose.xlu0.b32.cont [2/16] 0.0, 128
    %550 = vxpose.xlu0.b32.cont [3/16] 0.0, 128
    %551 = vxpose.xlu0.b32.cont [4/16] 0.0, 128
    %552 = vxpose.xlu0.b32.cont [5/16] 0.0, 128
    %553 = vxpose.xlu0.b32.cont [6/16] 0.0, 128
    %554 = vxpose.xlu0.b32.cont [7/16] 0.0, 128
    %555 = vxpose.xlu0.b32.cont [8/16] 0.0, 128
    %556 = vxpose.xlu0.b32.cont [9/16] 0.0, 128
    %557 = vxpose.xlu0.b32.cont [10/16] 0.0, 128
    %558 = vxpose.xlu0.b32.cont [11/16] 0.0, 128
    %559 = vxpose.xlu0.b32.cont [12/16] 0.0, 128
    %560 = vxpose.xlu0.b32.cont [13/16] 0.0, 128
    %561 = vxpose.xlu0.b32.cont [14/16] 0.0, 128
    %562 = vxpose.xlu0.b32.cont [15/16] 0.0, 128
    %563 = vxpose.xlu0.b32.end [16/16] 0.0, 128
    %v564 = vpop.trf.xlu0
    %v565 = vpop.trf.xlu0
    %v566 = vpop.trf.xlu0
    %v567 = vpop.trf.xlu0
    %v568 = vpop.trf.xlu0
    %v569 = vpop.trf.xlu0
    %v570 = vpop.trf.xlu0
    %v571 = vpop.trf.xlu0
    %v572 = vpop.trf.xlu0
    %v573 = vpop.trf.xlu0
    %v574 = vpop.trf.xlu0
    %v575 = vpop.trf.xlu0
    %v576 = vpop.trf.xlu0
    %v577 = vpop.trf.xlu0
    %v578 = vpop.trf.xlu0
    %v579 = vpop.trf.xlu0
    %580 = vxpose.xlu0.b32.start [1/16] %v242, 128
    %581 = vxpose.xlu0.b32.cont [2/16] 0.0, 128
    %582 = vxpose.xlu0.b32.cont [3/16] 0.0, 128
    %583 = vxpose.xlu0.b32.cont [4/16] 0.0, 128
    %584 = vxpose.xlu0.b32.cont [5/16] 0.0, 128
    %585 = vxpose.xlu0.b32.cont [6/16] 0.0, 128
    %586 = vxpose.xlu0.b32.cont [7/16] 0.0, 128
    %587 = vxpose.xlu0.b32.cont [8/16] 0.0, 128
    %588 = vxpose.xlu0.b32.cont [9/16] 0.0, 128
    %589 = vxpose.xlu0.b32.cont [10/16] 0.0, 128
    %590 = vxpose.xlu0.b32.cont [11/16] 0.0, 128
    %591 = vxpose.xlu0.b32.cont [12/16] 0.0, 128
    %592 = vxpose.xlu0.b32.cont [13/16] 0.0, 128
    %593 = vxpose.xlu0.b32.cont [14/16] 0.0, 128
    %594 = vxpose.xlu0.b32.cont [15/16] 0.0, 128
    %595 = vxpose.xlu0.b32.end [16/16] 0.0, 128
    %v596 = vpop.trf.xlu0
    %v597 = vpop.trf.xlu0
    %v598 = vpop.trf.xlu0
    %v599 = vpop.trf.xlu0
    %v600 = vpop.trf.xlu0
    %v601 = vpop.trf.xlu0
    %v602 = vpop.trf.xlu0
    %v603 = vpop.trf.xlu0
    %v604 = vpop.trf.xlu0
    %v605 = vpop.trf.xlu0
    %v606 = vpop.trf.xlu0
    %v607 = vpop.trf.xlu0
    %v608 = vpop.trf.xlu0
    %v609 = vpop.trf.xlu0
    %v610 = vpop.trf.xlu0
    %v611 = vpop.trf.xlu0
    %612 = vxpose.xlu0.b32.start [1/16] %v252, 128
    %613 = vxpose.xlu0.b32.cont [2/16] 0.0, 128
    %614 = vxpose.xlu0.b32.cont [3/16] 0.0, 128
    %615 = vxpose.xlu0.b32.cont [4/16] 0.0, 128
    %616 = vxpose.xlu0.b32.cont [5/16] 0.0, 128
    %617 = vxpose.xlu0.b32.cont [6/16] 0.0, 128
    %618 = vxpose.xlu0.b32.cont [7/16] 0.0, 128
    %619 = vxpose.xlu0.b32.cont [8/16] 0.0, 128
    %620 = vxpose.xlu0.b32.cont [9/16] 0.0, 128
    %621 = vxpose.xlu0.b32.cont [10/16] 0.0, 128
    %622 = vxpose.xlu0.b32.cont [11/16] 0.0, 128
    %623 = vxpose.xlu0.b32.cont [12/16] 0.0, 128
    %624 = vxpose.xlu0.b32.cont [13/16] 0.0, 128
    %625 = vxpose.xlu0.b32.cont [14/16] 0.0, 128
    %626 = vxpose.xlu0.b32.cont [15/16] 0.0, 128
    %627 = vxpose.xlu0.b32.end [16/16] 0.0, 128
    %v628 = vpop.trf.xlu0
    %v629 = vpop.trf.xlu0
    %v630 = vpop.trf.xlu0
    %v631 = vpop.trf.xlu0
    %v632 = vpop.trf.xlu0
    %v633 = vpop.trf.xlu0
    %v634 = vpop.trf.xlu0
    %v635 = vpop.trf.xlu0
    %v636 = vpop.trf.xlu0
    %v637 = vpop.trf.xlu0
    %v638 = vpop.trf.xlu0
    %v639 = vpop.trf.xlu0
    %v640 = vpop.trf.xlu0
    %v641 = vpop.trf.xlu0
    %v642 = vpop.trf.xlu0
    %v643 = vpop.trf.xlu0
    %644 = vxpose.xlu0.b32.start [1/16] %v249, 128
    %645 = vxpose.xlu0.b32.cont [2/16] 0.0, 128
    %646 = vxpose.xlu0.b32.cont [3/16] 0.0, 128
    %647 = vxpose.xlu0.b32.cont [4/16] 0.0, 128
    %648 = vxpose.xlu0.b32.cont [5/16] 0.0, 128
    %649 = vxpose.xlu0.b32.cont [6/16] 0.0, 128
    %650 = vxpose.xlu0.b32.cont [7/16] 0.0, 128
    %651 = vxpose.xlu0.b32.cont [8/16] 0.0, 128
    %652 = vxpose.xlu0.b32.cont [9/16] 0.0, 128
    %653 = vxpose.xlu0.b32.cont [10/16] 0.0, 128
    %654 = vxpose.xlu0.b32.cont [11/16] 0.0, 128
    %655 = vxpose.xlu0.b32.cont [12/16] 0.0, 128
    %656 = vxpose.xlu0.b32.cont [13/16] 0.0, 128
    %657 = vxpose.xlu0.b32.cont [14/16] 0.0, 128
    %658 = vxpose.xlu0.b32.cont [15/16] 0.0, 128
    %659 = vxpose.xlu0.b32.end [16/16] 0.0, 128
    %v660 = vpop.trf.xlu0
    %v661 = vpop.trf.xlu0
    %v662 = vpop.trf.xlu0
    %v663 = vpop.trf.xlu0
    %v664 = vpop.trf.xlu0
    %v665 = vpop.trf.xlu0
    %v666 = vpop.trf.xlu0
    %v667 = vpop.trf.xlu0
    %v668 = vpop.trf.xlu0
    %v669 = vpop.trf.xlu0
    %v670 = vpop.trf.xlu0
    %v671 = vpop.trf.xlu0
    %v672 = vpop.trf.xlu0
    %v673 = vpop.trf.xlu0
    %v674 = vpop.trf.xlu0
    %v675 = vpop.trf.xlu0
    %676 = vxpose.xlu0.b32.start [1/16] %v253, 128
    %677 = vxpose.xlu0.b32.cont [2/16] 0.0, 128
    %678 = vxpose.xlu0.b32.cont [3/16] 0.0, 128
    %679 = vxpose.xlu0.b32.cont [4/16] 0.0, 128
    %680 = vxpose.xlu0.b32.cont [5/16] 0.0, 128
    %681 = vxpose.xlu0.b32.cont [6/16] 0.0, 128
    %682 = vxpose.xlu0.b32.cont [7/16] 0.0, 128
    %683 = vxpose.xlu0.b32.cont [8/16] 0.0, 128
    %684 = vxpose.xlu0.b32.cont [9/16] 0.0, 128
    %685 = vxpose.xlu0.b32.cont [10/16] 0.0, 128
    %686 = vxpose.xlu0.b32.cont [11/16] 0.0, 128
    %687 = vxpose.xlu0.b32.cont [12/16] 0.0, 128
    %688 = vxpose.xlu0.b32.cont [13/16] 0.0, 128
    %689 = vxpose.xlu0.b32.cont [14/16] 0.0, 128
    %690 = vxpose.xlu0.b32.cont [15/16] 0.0, 128
    %691 = vxpose.xlu0.b32.end [16/16] 0.0, 128
    %v692 = vpop.trf.xlu0
    %v693 = vpop.trf.xlu0
    %v694 = vpop.trf.xlu0
    %v695 = vpop.trf.xlu0
    %v696 = vpop.trf.xlu0
    %v697 = vpop.trf.xlu0
    %v698 = vpop.trf.xlu0
    %v699 = vpop.trf.xlu0
    %v700 = vpop.trf.xlu0
    %v701 = vpop.trf.xlu0
    %v702 = vpop.trf.xlu0
    %v703 = vpop.trf.xlu0
    %v704 = vpop.trf.xlu0
    %v705 = vpop.trf.xlu0
    %v706 = vpop.trf.xlu0
    %v707 = vpop.trf.xlu0
    %708 = vxpose.xlu0.b32.start [1/16] %v292, 128
    %709 = vxpose.xlu0.b32.cont [2/16] 0.0, 128
    %710 = vxpose.xlu0.b32.cont [3/16] 0.0, 128
    %711 = vxpose.xlu0.b32.cont [4/16] 0.0, 128
    %712 = vxpose.xlu0.b32.cont [5/16] 0.0, 128
    %713 = vxpose.xlu0.b32.cont [6/16] 0.0, 128
    %714 = vxpose.xlu0.b32.cont [7/16] 0.0, 128
    %715 = vxpose.xlu0.b32.cont [8/16] 0.0, 128
    %716 = vxpose.xlu0.b32.cont [9/16] 0.0, 128
    %717 = vxpose.xlu0.b32.cont [10/16] 0.0, 128
    %718 = vxpose.xlu0.b32.cont [11/16] 0.0, 128
    %719 = vxpose.xlu0.b32.cont [12/16] 0.0, 128
    %720 = vxpose.xlu0.b32.cont [13/16] 0.0, 128
    %721 = vxpose.xlu0.b32.cont [14/16] 0.0, 128
    %722 = vxpose.xlu0.b32.cont [15/16] 0.0, 128
    %723 = vxpose.xlu0.b32.end [16/16] 0.0, 128
    %v724 = vpop.trf.xlu0
    %v725 = vpop.trf.xlu0
    %v726 = vpop.trf.xlu0
    %v727 = vpop.trf.xlu0
    %v728 = vpop.trf.xlu0
    %v729 = vpop.trf.xlu0
    %v730 = vpop.trf.xlu0
    %v731 = vpop.trf.xlu0
    %v732 = vpop.trf.xlu0
    %v733 = vpop.trf.xlu0
    %v734 = vpop.trf.xlu0
    %v735 = vpop.trf.xlu0
    %v736 = vpop.trf.xlu0
    %v737 = vpop.trf.xlu0
    %v738 = vpop.trf.xlu0
    %v739 = vpop.trf.xlu0
    %740 = vxpose.xlu0.b32.start [1/16] %v316, 128
    %741 = vxpose.xlu0.b32.cont [2/16] 0.0, 128
    %742 = vxpose.xlu0.b32.cont [3/16] 0.0, 128
    %743 = vxpose.xlu0.b32.cont [4/16] 0.0, 128
    %744 = vxpose.xlu0.b32.cont [5/16] 0.0, 128
    %745 = vxpose.xlu0.b32.cont [6/16] 0.0, 128
    %746 = vxpose.xlu0.b32.cont [7/16] 0.0, 128
    %747 = vxpose.xlu0.b32.cont [8/16] 0.0, 128
    %748 = vxpose.xlu0.b32.cont [9/16] 0.0, 128
    %749 = vxpose.xlu0.b32.cont [10/16] 0.0, 128
    %750 = vxpose.xlu0.b32.cont [11/16] 0.0, 128
    %751 = vxpose.xlu0.b32.cont [12/16] 0.0, 128
    %752 = vxpose.xlu0.b32.cont [13/16] 0.0, 128
    %753 = vxpose.xlu0.b32.cont [14/16] 0.0, 128
    %754 = vxpose.xlu0.b32.cont [15/16] 0.0, 128
    %755 = vxpose.xlu0.b32.end [16/16] 0.0, 128
    %v756 = vpop.trf.xlu0
    %v757 = vpop.trf.xlu0
    %v758 = vpop.trf.xlu0
    %v759 = vpop.trf.xlu0
    %v760 = vpop.trf.xlu0
    %v761 = vpop.trf.xlu0
    %v762 = vpop.trf.xlu0
    %v763 = vpop.trf.xlu0
    %v764 = vpop.trf.xlu0
    %v765 = vpop.trf.xlu0
    %v766 = vpop.trf.xlu0
    %v767 = vpop.trf.xlu0
    %v768 = vpop.trf.xlu0
    %v769 = vpop.trf.xlu0
    %v770 = vpop.trf.xlu0
    %v771 = vpop.trf.xlu0
    %772 = vxpose.xlu0.b32.start [1/16] %v299, 128
    %773 = vxpose.xlu0.b32.cont [2/16] 0.0, 128
    %774 = vxpose.xlu0.b32.cont [3/16] 0.0, 128
    %775 = vxpose.xlu0.b32.cont [4/16] 0.0, 128
    %776 = vxpose.xlu0.b32.cont [5/16] 0.0, 128
    %777 = vxpose.xlu0.b32.cont [6/16] 0.0, 128
    %778 = vxpose.xlu0.b32.cont [7/16] 0.0, 128
    %779 = vxpose.xlu0.b32.cont [8/16] 0.0, 128
    %780 = vxpose.xlu0.b32.cont [9/16] 0.0, 128
    %781 = vxpose.xlu0.b32.cont [10/16] 0.0, 128
    %782 = vxpose.xlu0.b32.cont [11/16] 0.0, 128
    %783 = vxpose.xlu0.b32.cont [12/16] 0.0, 128
    %784 = vxpose.xlu0.b32.cont [13/16] 0.0, 128
    %785 = vxpose.xlu0.b32.cont [14/16] 0.0, 128
    %786 = vxpose.xlu0.b32.cont [15/16] 0.0, 128
    %787 = vxpose.xlu0.b32.end [16/16] 0.0, 128
    %v788 = vpop.trf.xlu0
    %v789 = vpop.trf.xlu0
    %v790 = vpop.trf.xlu0
    %v791 = vpop.trf.xlu0
    %v792 = vpop.trf.xlu0
    %v793 = vpop.trf.xlu0
    %v794 = vpop.trf.xlu0
    %v795 = vpop.trf.xlu0
    %v796 = vpop.trf.xlu0
    %v797 = vpop.trf.xlu0
    %v798 = vpop.trf.xlu0
    %v799 = vpop.trf.xlu0
    %v800 = vpop.trf.xlu0
    %v801 = vpop.trf.xlu0
    %v802 = vpop.trf.xlu0
    %v803 = vpop.trf.xlu0
    %804 = vxpose.xlu0.b32.start [1/16] %v317, 128
    %805 = vxpose.xlu0.b32.cont [2/16] 0.0, 128
    %806 = vxpose.xlu0.b32.cont [3/16] 0.0, 128
    %807 = vxpose.xlu0.b32.cont [4/16] 0.0, 128
    %808 = vxpose.xlu0.b32.cont [5/16] 0.0, 128
    %809 = vxpose.xlu0.b32.cont [6/16] 0.0, 128
    %810 = vxpose.xlu0.b32.cont [7/16] 0.0, 128
    %811 = vxpose.xlu0.b32.cont [8/16] 0.0, 128
    %812 = vxpose.xlu0.b32.cont [9/16] 0.0, 128
    %813 = vxpose.xlu0.b32.cont [10/16] 0.0, 128
    %814 = vxpose.xlu0.b32.cont [11/16] 0.0, 128
    %815 = vxpose.xlu0.b32.cont [12/16] 0.0, 128
    %816 = vxpose.xlu0.b32.cont [13/16] 0.0, 128
    %817 = vxpose.xlu0.b32.cont [14/16] 0.0, 128
    %818 = vxpose.xlu0.b32.cont [15/16] 0.0, 128
    %819 = vxpose.xlu0.b32.end [16/16] 0.0, 128
    %v820 = vpop.trf.xlu0
    %v821 = vpop.trf.xlu0
    %v822 = vpop.trf.xlu0
    %v823 = vpop.trf.xlu0
    %v824 = vpop.trf.xlu0
    %v825 = vpop.trf.xlu0
    %v826 = vpop.trf.xlu0
    %v827 = vpop.trf.xlu0
    %v828 = vpop.trf.xlu0
    %v829 = vpop.trf.xlu0
    %v830 = vpop.trf.xlu0
    %v831 = vpop.trf.xlu0
    %v832 = vpop.trf.xlu0
    %v833 = vpop.trf.xlu0
    %v834 = vpop.trf.xlu0
    %v835 = vpop.trf.xlu0
    %836 = vxpose.xlu0.b32.start [1/16] %v308, 128
    %837 = vxpose.xlu0.b32.cont [2/16] 0.0, 128
    %838 = vxpose.xlu0.b32.cont [3/16] 0.0, 128
    %839 = vxpose.xlu0.b32.cont [4/16] 0.0, 128
    %840 = vxpose.xlu0.b32.cont [5/16] 0.0, 128
    %841 = vxpose.xlu0.b32.cont [6/16] 0.0, 128
    %842 = vxpose.xlu0.b32.cont [7/16] 0.0, 128
    %843 = vxpose.xlu0.b32.cont [8/16] 0.0, 128
    %844 = vxpose.xlu0.b32.cont [9/16] 0.0, 128
    %845 = vxpose.xlu0.b32.cont [10/16] 0.0, 128
    %846 = vxpose.xlu0.b32.cont [11/16] 0.0, 128
    %847 = vxpose.xlu0.b32.cont [12/16] 0.0, 128
    %848 = vxpose.xlu0.b32.cont [13/16] 0.0, 128
    %849 = vxpose.xlu0.b32.cont [14/16] 0.0, 128
    %850 = vxpose.xlu0.b32.cont [15/16] 0.0, 128
    %851 = vxpose.xlu0.b32.end [16/16] 0.0, 128
    %v852 = vpop.trf.xlu0
    %v853 = vpop.trf.xlu0
    %v854 = vpop.trf.xlu0
    %v855 = vpop.trf.xlu0
    %v856 = vpop.trf.xlu0
    %v857 = vpop.trf.xlu0
    %v858 = vpop.trf.xlu0
    %v859 = vpop.trf.xlu0
    %v860 = vpop.trf.xlu0
    %v861 = vpop.trf.xlu0
    %v862 = vpop.trf.xlu0
    %v863 = vpop.trf.xlu0
    %v864 = vpop.trf.xlu0
    %v865 = vpop.trf.xlu0
    %v866 = vpop.trf.xlu0
    %v867 = vpop.trf.xlu0
    %868 = vxpose.xlu0.b32.start [1/16] %v318, 128
    %869 = vxpose.xlu0.b32.cont [2/16] 0.0, 128
    %870 = vxpose.xlu0.b32.cont [3/16] 0.0, 128
    %871 = vxpose.xlu0.b32.cont [4/16] 0.0, 128
    %872 = vxpose.xlu0.b32.cont [5/16] 0.0, 128
    %873 = vxpose.xlu0.b32.cont [6/16] 0.0, 128
    %874 = vxpose.xlu0.b32.cont [7/16] 0.0, 128
    %875 = vxpose.xlu0.b32.cont [8/16] 0.0, 128
    %876 = vxpose.xlu0.b32.cont [9/16] 0.0, 128
    %877 = vxpose.xlu0.b32.cont [10/16] 0.0, 128
    %878 = vxpose.xlu0.b32.cont [11/16] 0.0, 128
    %879 = vxpose.xlu0.b32.cont [12/16] 0.0, 128
    %880 = vxpose.xlu0.b32.cont [13/16] 0.0, 128
    %881 = vxpose.xlu0.b32.cont [14/16] 0.0, 128
    %882 = vxpose.xlu0.b32.cont [15/16] 0.0, 128
    %883 = vxpose.xlu0.b32.end [16/16] 0.0, 128
    %v884 = vpop.trf.xlu0
    %v885 = vpop.trf.xlu0
    %v886 = vpop.trf.xlu0
    %v887 = vpop.trf.xlu0
    %v888 = vpop.trf.xlu0
    %v889 = vpop.trf.xlu0
    %v890 = vpop.trf.xlu0
    %v891 = vpop.trf.xlu0
    %v892 = vpop.trf.xlu0
    %v893 = vpop.trf.xlu0
    %v894 = vpop.trf.xlu0
    %v895 = vpop.trf.xlu0
    %v896 = vpop.trf.xlu0
    %v897 = vpop.trf.xlu0
    %v898 = vpop.trf.xlu0
    %v899 = vpop.trf.xlu0
    %900 = vxpose.xlu0.b32.start [1/16] %v315, 128
    %901 = vxpose.xlu0.b32.cont [2/16] 0.0, 128
    %902 = vxpose.xlu0.b32.cont [3/16] 0.0, 128
    %903 = vxpose.xlu0.b32.cont [4/16] 0.0, 128
    %904 = vxpose.xlu0.b32.cont [5/16] 0.0, 128
    %905 = vxpose.xlu0.b32.cont [6/16] 0.0, 128
    %906 = vxpose.xlu0.b32.cont [7/16] 0.0, 128
    %907 = vxpose.xlu0.b32.cont [8/16] 0.0, 128
    %908 = vxpose.xlu0.b32.cont [9/16] 0.0, 128
    %909 = vxpose.xlu0.b32.cont [10/16] 0.0, 128
    %910 = vxpose.xlu0.b32.cont [11/16] 0.0, 128
    %911 = vxpose.xlu0.b32.cont [12/16] 0.0, 128
    %912 = vxpose.xlu0.b32.cont [13/16] 0.0, 128
    %913 = vxpose.xlu0.b32.cont [14/16] 0.0, 128
    %914 = vxpose.xlu0.b32.cont [15/16] 0.0, 128
    %915 = vxpose.xlu0.b32.end [16/16] 0.0, 128
    %v916 = vpop.trf.xlu0
    %v917 = vpop.trf.xlu0
    %v918 = vpop.trf.xlu0
    %v919 = vpop.trf.xlu0
    %v920 = vpop.trf.xlu0
    %v921 = vpop.trf.xlu0
    %v922 = vpop.trf.xlu0
    %v923 = vpop.trf.xlu0
    %v924 = vpop.trf.xlu0
    %v925 = vpop.trf.xlu0
    %v926 = vpop.trf.xlu0
    %v927 = vpop.trf.xlu0
    %v928 = vpop.trf.xlu0
    %v929 = vpop.trf.xlu0
    %v930 = vpop.trf.xlu0
    %v931 = vpop.trf.xlu0
    %932 = vxpose.xlu0.b32.start [1/16] %v319, 128
    %933 = vxpose.xlu0.b32.cont [2/16] 0.0, 128
    %934 = vxpose.xlu0.b32.cont [3/16] 0.0, 128
    %935 = vxpose.xlu0.b32.cont [4/16] 0.0, 128
    %936 = vxpose.xlu0.b32.cont [5/16] 0.0, 128
    %937 = vxpose.xlu0.b32.cont [6/16] 0.0, 128
    %938 = vxpose.xlu0.b32.cont [7/16] 0.0, 128
    %939 = vxpose.xlu0.b32.cont [8/16] 0.0, 128
    %940 = vxpose.xlu0.b32.cont [9/16] 0.0, 128
    %941 = vxpose.xlu0.b32.cont [10/16] 0.0, 128
    %942 = vxpose.xlu0.b32.cont [11/16] 0.0, 128
    %943 = vxpose.xlu0.b32.cont [12/16] 0.0, 128
    %944 = vxpose.xlu0.b32.cont [13/16] 0.0, 128
    %945 = vxpose.xlu0.b32.cont [14/16] 0.0, 128
    %946 = vxpose.xlu0.b32.cont [15/16] 0.0, 128
    %947 = vxpose.xlu0.b32.end [16/16] 0.0, 128
    %v948 = vpop.trf.xlu0
    %v949 = vpop.trf.xlu0
    %v950 = vpop.trf.xlu0
    %v951 = vpop.trf.xlu0
    %v952 = vpop.trf.xlu0
    %v953 = vpop.trf.xlu0
    %v954 = vpop.trf.xlu0
    %v955 = vpop.trf.xlu0
    %v956 = vpop.trf.xlu0
    %v957 = vpop.trf.xlu0
    %v958 = vpop.trf.xlu0
    %v959 = vpop.trf.xlu0
    %v960 = vpop.trf.xlu0
    %v961 = vpop.trf.xlu0
    %v962 = vpop.trf.xlu0
    %v963 = vpop.trf.xlu0
    %964 = vxpose.xlu0.b32.start [1/16] %v358, 128
    %965 = vxpose.xlu0.b32.cont [2/16] 0.0, 128
    %966 = vxpose.xlu0.b32.cont [3/16] 0.0, 128
    %967 = vxpose.xlu0.b32.cont [4/16] 0.0, 128
    %968 = vxpose.xlu0.b32.cont [5/16] 0.0, 128
    %969 = vxpose.xlu0.b32.cont [6/16] 0.0, 128
    %970 = vxpose.xlu0.b32.cont [7/16] 0.0, 128
    %971 = vxpose.xlu0.b32.cont [8/16] 0.0, 128
    %972 = vxpose.xlu0.b32.cont [9/16] 0.0, 128
    %973 = vxpose.xlu0.b32.cont [10/16] 0.0, 128
    %974 = vxpose.xlu0.b32.cont [11/16] 0.0, 128
    %975 = vxpose.xlu0.b32.cont [12/16] 0.0, 128
    %976 = vxpose.xlu0.b32.cont [13/16] 0.0, 128
    %977 = vxpose.xlu0.b32.cont [14/16] 0.0, 128
    %978 = vxpose.xlu0.b32.cont [15/16] 0.0, 128
    %979 = vxpose.xlu0.b32.end [16/16] 0.0, 128
    %v980 = vpop.trf.xlu0
    %v981 = vpop.trf.xlu0
    %v982 = vpop.trf.xlu0
    %v983 = vpop.trf.xlu0
    %v984 = vpop.trf.xlu0
    %v985 = vpop.trf.xlu0
    %v986 = vpop.trf.xlu0
    %v987 = vpop.trf.xlu0
    %v988 = vpop.trf.xlu0
    %v989 = vpop.trf.xlu0
    %v990 = vpop.trf.xlu0
    %v991 = vpop.trf.xlu0
    %v992 = vpop.trf.xlu0
    %v993 = vpop.trf.xlu0
    %v994 = vpop.trf.xlu0
    %v995 = vpop.trf.xlu0
    %996 = vxpose.xlu0.b32.start [1/16] %v382, 128
    %997 = vxpose.xlu0.b32.cont [2/16] 0.0, 128
    %998 = vxpose.xlu0.b32.cont [3/16] 0.0, 128
    %999 = vxpose.xlu0.b32.cont [4/16] 0.0, 128
    %1000 = vxpose.xlu0.b32.cont [5/16] 0.0, 128
    %1001 = vxpose.xlu0.b32.cont [6/16] 0.0, 128
    %1002 = vxpose.xlu0.b32.cont [7/16] 0.0, 128
    %1003 = vxpose.xlu0.b32.cont [8/16] 0.0, 128
    %1004 = vxpose.xlu0.b32.cont [9/16] 0.0, 128
    %1005 = vxpose.xlu0.b32.cont [10/16] 0.0, 128
    %1006 = vxpose.xlu0.b32.cont [11/16] 0.0, 128
    %1007 = vxpose.xlu0.b32.cont [12/16] 0.0, 128
    %1008 = vxpose.xlu0.b32.cont [13/16] 0.0, 128
    %1009 = vxpose.xlu0.b32.cont [14/16] 0.0, 128
    %1010 = vxpose.xlu0.b32.cont [15/16] 0.0, 128
    %1011 = vxpose.xlu0.b32.end [16/16] 0.0, 128
    %v1012 = vpop.trf.xlu0
    %v1013 = vpop.trf.xlu0
    %v1014 = vpop.trf.xlu0
    %v1015 = vpop.trf.xlu0
    %v1016 = vpop.trf.xlu0
    %v1017 = vpop.trf.xlu0
    %v1018 = vpop.trf.xlu0
    %v1019 = vpop.trf.xlu0
    %v1020 = vpop.trf.xlu0
    %v1021 = vpop.trf.xlu0
    %v1022 = vpop.trf.xlu0
    %v1023 = vpop.trf.xlu0
    %v1024 = vpop.trf.xlu0
    %v1025 = vpop.trf.xlu0
    %v1026 = vpop.trf.xlu0
    %v1027 = vpop.trf.xlu0
    %1028 = vxpose.xlu0.b32.start [1/16] %v365, 128
    %1029 = vxpose.xlu0.b32.cont [2/16] 0.0, 128
    %1030 = vxpose.xlu0.b32.cont [3/16] 0.0, 128
    %1031 = vxpose.xlu0.b32.cont [4/16] 0.0, 128
    %1032 = vxpose.xlu0.b32.cont [5/16] 0.0, 128
    %1033 = vxpose.xlu0.b32.cont [6/16] 0.0, 128
    %1034 = vxpose.xlu0.b32.cont [7/16] 0.0, 128
    %1035 = vxpose.xlu0.b32.cont [8/16] 0.0, 128
    %1036 = vxpose.xlu0.b32.cont [9/16] 0.0, 128
    %1037 = vxpose.xlu0.b32.cont [10/16] 0.0, 128
    %1038 = vxpose.xlu0.b32.cont [11/16] 0.0, 128
    %1039 = vxpose.xlu0.b32.cont [12/16] 0.0, 128
    %1040 = vxpose.xlu0.b32.cont [13/16] 0.0, 128
    %1041 = vxpose.xlu0.b32.cont [14/16] 0.0, 128
    %1042 = vxpose.xlu0.b32.cont [15/16] 0.0, 128
    %1043 = vxpose.xlu0.b32.end [16/16] 0.0, 128
    %v1044 = vpop.trf.xlu0
    %v1045 = vpop.trf.xlu0
    %v1046 = vpop.trf.xlu0
    %v1047 = vpop.trf.xlu0
    %v1048 = vpop.trf.xlu0
    %v1049 = vpop.trf.xlu0
    %v1050 = vpop.trf.xlu0
    %v1051 = vpop.trf.xlu0
    %v1052 = vpop.trf.xlu0
    %v1053 = vpop.trf.xlu0
    %v1054 = vpop.trf.xlu0
    %v1055 = vpop.trf.xlu0
    %v1056 = vpop.trf.xlu0
    %v1057 = vpop.trf.xlu0
    %v1058 = vpop.trf.xlu0
    %v1059 = vpop.trf.xlu0
    %1060 = vxpose.xlu0.b32.start [1/16] %v383, 128
    %1061 = vxpose.xlu0.b32.cont [2/16] 0.0, 128
    %1062 = vxpose.xlu0.b32.cont [3/16] 0.0, 128
    %1063 = vxpose.xlu0.b32.cont [4/16] 0.0, 128
    %1064 = vxpose.xlu0.b32.cont [5/16] 0.0, 128
    %1065 = vxpose.xlu0.b32.cont [6/16] 0.0, 128
    %1066 = vxpose.xlu0.b32.cont [7/16] 0.0, 128
    %1067 = vxpose.xlu0.b32.cont [8/16] 0.0, 128
    %1068 = vxpose.xlu0.b32.cont [9/16] 0.0, 128
    %1069 = vxpose.xlu0.b32.cont [10/16] 0.0, 128
    %1070 = vxpose.xlu0.b32.cont [11/16] 0.0, 128
    %1071 = vxpose.xlu0.b32.cont [12/16] 0.0, 128
    %1072 = vxpose.xlu0.b32.cont [13/16] 0.0, 128
    %1073 = vxpose.xlu0.b32.cont [14/16] 0.0, 128
    %1074 = vxpose.xlu0.b32.cont [15/16] 0.0, 128
    %1075 = vxpose.xlu0.b32.end [16/16] 0.0, 128
    %v1076 = vpop.trf.xlu0
    %v1077 = vpop.trf.xlu0
    %v1078 = vpop.trf.xlu0
    %v1079 = vpop.trf.xlu0
    %v1080 = vpop.trf.xlu0
    %v1081 = vpop.trf.xlu0
    %v1082 = vpop.trf.xlu0
    %v1083 = vpop.trf.xlu0
    %v1084 = vpop.trf.xlu0
    %v1085 = vpop.trf.xlu0
    %v1086 = vpop.trf.xlu0
    %v1087 = vpop.trf.xlu0
    %v1088 = vpop.trf.xlu0
    %v1089 = vpop.trf.xlu0
    %v1090 = vpop.trf.xlu0
    %v1091 = vpop.trf.xlu0
    %1092 = vxpose.xlu0.b32.start [1/16] %v374, 128
    %1093 = vxpose.xlu0.b32.cont [2/16] 0.0, 128
    %1094 = vxpose.xlu0.b32.cont [3/16] 0.0, 128
    %1095 = vxpose.xlu0.b32.cont [4/16] 0.0, 128
    %1096 = vxpose.xlu0.b32.cont [5/16] 0.0, 128
    %1097 = vxpose.xlu0.b32.cont [6/16] 0.0, 128
    %1098 = vxpose.xlu0.b32.cont [7/16] 0.0, 128
    %1099 = vxpose.xlu0.b32.cont [8/16] 0.0, 128
    %1100 = vxpose.xlu0.b32.cont [9/16] 0.0, 128
    %1101 = vxpose.xlu0.b32.cont [10/16] 0.0, 128
    %1102 = vxpose.xlu0.b32.cont [11/16] 0.0, 128
    %1103 = vxpose.xlu0.b32.cont [12/16] 0.0, 128
    %1104 = vxpose.xlu0.b32.cont [13/16] 0.0, 128
    %1105 = vxpose.xlu0.b32.cont [14/16] 0.0, 128
    %1106 = vxpose.xlu0.b32.cont [15/16] 0.0, 128
    %1107 = vxpose.xlu0.b32.end [16/16] 0.0, 128
    %v1108 = vpop.trf.xlu0
    %v1109 = vpop.trf.xlu0
    %v1110 = vpop.trf.xlu0
    %v1111 = vpop.trf.xlu0
    %v1112 = vpop.trf.xlu0
    %v1113 = vpop.trf.xlu0
    %v1114 = vpop.trf.xlu0
    %v1115 = vpop.trf.xlu0
    %v1116 = vpop.trf.xlu0
    %v1117 = vpop.trf.xlu0
    %v1118 = vpop.trf.xlu0
    %v1119 = vpop.trf.xlu0
    %v1120 = vpop.trf.xlu0
    %v1121 = vpop.trf.xlu0
    %v1122 = vpop.trf.xlu0
    %v1123 = vpop.trf.xlu0
    %1124 = vxpose.xlu0.b32.start [1/16] %v384, 128
    %1125 = vxpose.xlu0.b32.cont [2/16] 0.0, 128
    %1126 = vxpose.xlu0.b32.cont [3/16] 0.0, 128
    %1127 = vxpose.xlu0.b32.cont [4/16] 0.0, 128
    %1128 = vxpose.xlu0.b32.cont [5/16] 0.0, 128
    %1129 = vxpose.xlu0.b32.cont [6/16] 0.0, 128
    %1130 = vxpose.xlu0.b32.cont [7/16] 0.0, 128
    %1131 = vxpose.xlu0.b32.cont [8/16] 0.0, 128
    %1132 = vxpose.xlu0.b32.cont [9/16] 0.0, 128
    %1133 = vxpose.xlu0.b32.cont [10/16] 0.0, 128
    %1134 = vxpose.xlu0.b32.cont [11/16] 0.0, 128
    %1135 = vxpose.xlu0.b32.cont [12/16] 0.0, 128
    %1136 = vxpose.xlu0.b32.cont [13/16] 0.0, 128
    %1137 = vxpose.xlu0.b32.cont [14/16] 0.0, 128
    %1138 = vxpose.xlu0.b32.cont [15/16] 0.0, 128
    %1139 = vxpose.xlu0.b32.end [16/16] 0.0, 128
    %v1140 = vpop.trf.xlu0
    %v1141 = vpop.trf.xlu0
    %v1142 = vpop.trf.xlu0
    %v1143 = vpop.trf.xlu0
    %v1144 = vpop.trf.xlu0
    %v1145 = vpop.trf.xlu0
    %v1146 = vpop.trf.xlu0
    %v1147 = vpop.trf.xlu0
    %v1148 = vpop.trf.xlu0
    %v1149 = vpop.trf.xlu0
    %v1150 = vpop.trf.xlu0
    %v1151 = vpop.trf.xlu0
    %v1152 = vpop.trf.xlu0
    %v1153 = vpop.trf.xlu0
    %v1154 = vpop.trf.xlu0
    %v1155 = vpop.trf.xlu0
    %1156 = vxpose.xlu0.b32.start [1/16] %v381, 128
    %1157 = vxpose.xlu0.b32.cont [2/16] 0.0, 128
    %1158 = vxpose.xlu0.b32.cont [3/16] 0.0, 128
    %1159 = vxpose.xlu0.b32.cont [4/16] 0.0, 128
    %1160 = vxpose.xlu0.b32.cont [5/16] 0.0, 128
    %1161 = vxpose.xlu0.b32.cont [6/16] 0.0, 128
    %1162 = vxpose.xlu0.b32.cont [7/16] 0.0, 128
    %1163 = vxpose.xlu0.b32.cont [8/16] 0.0, 128
    %1164 = vxpose.xlu0.b32.cont [9/16] 0.0, 128
    %1165 = vxpose.xlu0.b32.cont [10/16] 0.0, 128
    %1166 = vxpose.xlu0.b32.cont [11/16] 0.0, 128
    %1167 = vxpose.xlu0.b32.cont [12/16] 0.0, 128
    %1168 = vxpose.xlu0.b32.cont [13/16] 0.0, 128
    %1169 = vxpose.xlu0.b32.cont [14/16] 0.0, 128
    %1170 = vxpose.xlu0.b32.cont [15/16] 0.0, 128
    %1171 = vxpose.xlu0.b32.end [16/16] 0.0, 128
    %v1172 = vpop.trf.xlu0
    %v1173 = vpop.trf.xlu0
    %v1174 = vpop.trf.xlu0
    %v1175 = vpop.trf.xlu0
    %v1176 = vpop.trf.xlu0
    %v1177 = vpop.trf.xlu0
    %v1178 = vpop.trf.xlu0
    %v1179 = vpop.trf.xlu0
    %v1180 = vpop.trf.xlu0
    %v1181 = vpop.trf.xlu0
    %v1182 = vpop.trf.xlu0
    %v1183 = vpop.trf.xlu0
    %v1184 = vpop.trf.xlu0
    %v1185 = vpop.trf.xlu0
    %v1186 = vpop.trf.xlu0
    %v1187 = vpop.trf.xlu0
    %1188 = vxpose.xlu0.b32.start [1/16] %v385, 128
    %1189 = vxpose.xlu0.b32.cont [2/16] 0.0, 128
    %1190 = vxpose.xlu0.b32.cont [3/16] 0.0, 128
    %1191 = vxpose.xlu0.b32.cont [4/16] 0.0, 128
    %1192 = vxpose.xlu0.b32.cont [5/16] 0.0, 128
    %1193 = vxpose.xlu0.b32.cont [6/16] 0.0, 128
    %1194 = vxpose.xlu0.b32.cont [7/16] 0.0, 128
    %1195 = vxpose.xlu0.b32.cont [8/16] 0.0, 128
    %1196 = vxpose.xlu0.b32.cont [9/16] 0.0, 128
    %1197 = vxpose.xlu0.b32.cont [10/16] 0.0, 128
    %1198 = vxpose.xlu0.b32.cont [11/16] 0.0, 128
    %1199 = vxpose.xlu0.b32.cont [12/16] 0.0, 128
    %1200 = vxpose.xlu0.b32.cont [13/16] 0.0, 128
    %1201 = vxpose.xlu0.b32.cont [14/16] 0.0, 128
    %1202 = vxpose.xlu0.b32.cont [15/16] 0.0, 128
    %1203 = vxpose.xlu0.b32.end [16/16] 0.0, 128
    %v1204 = vpop.trf.xlu0
    %v1205 = vpop.trf.xlu0
    %v1206 = vpop.trf.xlu0
    %v1207 = vpop.trf.xlu0
    %v1208 = vpop.trf.xlu0
    %v1209 = vpop.trf.xlu0
    %v1210 = vpop.trf.xlu0
    %v1211 = vpop.trf.xlu0
    %v1212 = vpop.trf.xlu0
    %v1213 = vpop.trf.xlu0
    %v1214 = vpop.trf.xlu0
    %v1215 = vpop.trf.xlu0
    %v1216 = vpop.trf.xlu0
    %v1217 = vpop.trf.xlu0
    %v1218 = vpop.trf.xlu0
    %v1219 = vpop.trf.xlu0
    %1220 = vxpose.xlu0.b32.start [1/16] %v424, 128
    %1221 = vxpose.xlu0.b32.cont [2/16] 0.0, 128
    %1222 = vxpose.xlu0.b32.cont [3/16] 0.0, 128
    %1223 = vxpose.xlu0.b32.cont [4/16] 0.0, 128
    %1224 = vxpose.xlu0.b32.cont [5/16] 0.0, 128
    %1225 = vxpose.xlu0.b32.cont [6/16] 0.0, 128
    %1226 = vxpose.xlu0.b32.cont [7/16] 0.0, 128
    %1227 = vxpose.xlu0.b32.cont [8/16] 0.0, 128
    %1228 = vxpose.xlu0.b32.cont [9/16] 0.0, 128
    %1229 = vxpose.xlu0.b32.cont [10/16] 0.0, 128
    %1230 = vxpose.xlu0.b32.cont [11/16] 0.0, 128
    %1231 = vxpose.xlu0.b32.cont [12/16] 0.0, 128
    %1232 = vxpose.xlu0.b32.cont [13/16] 0.0, 128
    %1233 = vxpose.xlu0.b32.cont [14/16] 0.0, 128
    %1234 = vxpose.xlu0.b32.cont [15/16] 0.0, 128
    %1235 = vxpose.xlu0.b32.end [16/16] 0.0, 128
    %v1236 = vpop.trf.xlu0
    %v1237 = vpop.trf.xlu0
    %v1238 = vpop.trf.xlu0
    %v1239 = vpop.trf.xlu0
    %v1240 = vpop.trf.xlu0
    %v1241 = vpop.trf.xlu0
    %v1242 = vpop.trf.xlu0
    %v1243 = vpop.trf.xlu0
    %v1244 = vpop.trf.xlu0
    %v1245 = vpop.trf.xlu0
    %v1246 = vpop.trf.xlu0
    %v1247 = vpop.trf.xlu0
    %v1248 = vpop.trf.xlu0
    %v1249 = vpop.trf.xlu0
    %v1250 = vpop.trf.xlu0
    %v1251 = vpop.trf.xlu0
    %1252 = vxpose.xlu0.b32.start [1/16] %v448, 128
    %1253 = vxpose.xlu0.b32.cont [2/16] 0.0, 128
    %1254 = vxpose.xlu0.b32.cont [3/16] 0.0, 128
    %1255 = vxpose.xlu0.b32.cont [4/16] 0.0, 128
    %1256 = vxpose.xlu0.b32.cont [5/16] 0.0, 128
    %1257 = vxpose.xlu0.b32.cont [6/16] 0.0, 128
    %1258 = vxpose.xlu0.b32.cont [7/16] 0.0, 128
    %1259 = vxpose.xlu0.b32.cont [8/16] 0.0, 128
    %1260 = vxpose.xlu0.b32.cont [9/16] 0.0, 128
    %1261 = vxpose.xlu0.b32.cont [10/16] 0.0, 128
    %1262 = vxpose.xlu0.b32.cont [11/16] 0.0, 128
    %1263 = vxpose.xlu0.b32.cont [12/16] 0.0, 128
    %1264 = vxpose.xlu0.b32.cont [13/16] 0.0, 128
    %1265 = vxpose.xlu0.b32.cont [14/16] 0.0, 128
    %1266 = vxpose.xlu0.b32.cont [15/16] 0.0, 128
    %1267 = vxpose.xlu0.b32.end [16/16] 0.0, 128
    %v1268 = vpop.trf.xlu0
    %v1269 = vpop.trf.xlu0
    %v1270 = vpop.trf.xlu0
    %v1271 = vpop.trf.xlu0
    %v1272 = vpop.trf.xlu0
    %v1273 = vpop.trf.xlu0
    %v1274 = vpop.trf.xlu0
    %v1275 = vpop.trf.xlu0
    %v1276 = vpop.trf.xlu0
    %v1277 = vpop.trf.xlu0
    %v1278 = vpop.trf.xlu0
    %v1279 = vpop.trf.xlu0
    %v1280 = vpop.trf.xlu0
    %v1281 = vpop.trf.xlu0
    %v1282 = vpop.trf.xlu0
    %v1283 = vpop.trf.xlu0
    %1284 = vxpose.xlu0.b32.start [1/16] %v431, 128
    %1285 = vxpose.xlu0.b32.cont [2/16] 0.0, 128
    %1286 = vxpose.xlu0.b32.cont [3/16] 0.0, 128
    %1287 = vxpose.xlu0.b32.cont [4/16] 0.0, 128
    %1288 = vxpose.xlu0.b32.cont [5/16] 0.0, 128
    %1289 = vxpose.xlu0.b32.cont [6/16] 0.0, 128
    %1290 = vxpose.xlu0.b32.cont [7/16] 0.0, 128
    %1291 = vxpose.xlu0.b32.cont [8/16] 0.0, 128
    %1292 = vxpose.xlu0.b32.cont [9/16] 0.0, 128
    %1293 = vxpose.xlu0.b32.cont [10/16] 0.0, 128
    %1294 = vxpose.xlu0.b32.cont [11/16] 0.0, 128
    %1295 = vxpose.xlu0.b32.cont [12/16] 0.0, 128
    %1296 = vxpose.xlu0.b32.cont [13/16] 0.0, 128
    %1297 = vxpose.xlu0.b32.cont [14/16] 0.0, 128
    %1298 = vxpose.xlu0.b32.cont [15/16] 0.0, 128
    %1299 = vxpose.xlu0.b32.end [16/16] 0.0, 128
    %v1300 = vpop.trf.xlu0
    %v1301 = vpop.trf.xlu0
    %v1302 = vpop.trf.xlu0
    %v1303 = vpop.trf.xlu0
    %v1304 = vpop.trf.xlu0
    %v1305 = vpop.trf.xlu0
    %v1306 = vpop.trf.xlu0
    %v1307 = vpop.trf.xlu0
    %v1308 = vpop.trf.xlu0
    %v1309 = vpop.trf.xlu0
    %v1310 = vpop.trf.xlu0
    %v1311 = vpop.trf.xlu0
    %v1312 = vpop.trf.xlu0
    %v1313 = vpop.trf.xlu0
    %v1314 = vpop.trf.xlu0
    %v1315 = vpop.trf.xlu0
    %1316 = vxpose.xlu0.b32.start [1/16] %v449, 128
    %1317 = vxpose.xlu0.b32.cont [2/16] 0.0, 128
    %1318 = vxpose.xlu0.b32.cont [3/16] 0.0, 128
    %1319 = vxpose.xlu0.b32.cont [4/16] 0.0, 128
    %1320 = vxpose.xlu0.b32.cont [5/16] 0.0, 128
    %1321 = vxpose.xlu0.b32.cont [6/16] 0.0, 128
    %1322 = vxpose.xlu0.b32.cont [7/16] 0.0, 128
    %1323 = vxpose.xlu0.b32.cont [8/16] 0.0, 128
    %1324 = vxpose.xlu0.b32.cont [9/16] 0.0, 128
    %1325 = vxpose.xlu0.b32.cont [10/16] 0.0, 128
    %1326 = vxpose.xlu0.b32.cont [11/16] 0.0, 128
    %1327 = vxpose.xlu0.b32.cont [12/16] 0.0, 128
    %1328 = vxpose.xlu0.b32.cont [13/16] 0.0, 128
    %1329 = vxpose.xlu0.b32.cont [14/16] 0.0, 128
    %1330 = vxpose.xlu0.b32.cont [15/16] 0.0, 128
    %1331 = vxpose.xlu0.b32.end [16/16] 0.0, 128
    %v1332 = vpop.trf.xlu0
    %v1333 = vpop.trf.xlu0
    %v1334 = vpop.trf.xlu0
    %v1335 = vpop.trf.xlu0
    %v1336 = vpop.trf.xlu0
    %v1337 = vpop.trf.xlu0
    %v1338 = vpop.trf.xlu0
    %v1339 = vpop.trf.xlu0
    %v1340 = vpop.trf.xlu0
    %v1341 = vpop.trf.xlu0
    %v1342 = vpop.trf.xlu0
    %v1343 = vpop.trf.xlu0
    %v1344 = vpop.trf.xlu0
    %v1345 = vpop.trf.xlu0
    %v1346 = vpop.trf.xlu0
    %v1347 = vpop.trf.xlu0
    %1348 = vxpose.xlu0.b32.start [1/16] %v440, 128
    %1349 = vxpose.xlu0.b32.cont [2/16] 0.0, 128
    %1350 = vxpose.xlu0.b32.cont [3/16] 0.0, 128
    %1351 = vxpose.xlu0.b32.cont [4/16] 0.0, 128
    %1352 = vxpose.xlu0.b32.cont [5/16] 0.0, 128
    %1353 = vxpose.xlu0.b32.cont [6/16] 0.0, 128
    %1354 = vxpose.xlu0.b32.cont [7/16] 0.0, 128
    %1355 = vxpose.xlu0.b32.cont [8/16] 0.0, 128
    %1356 = vxpose.xlu0.b32.cont [9/16] 0.0, 128
    %1357 = vxpose.xlu0.b32.cont [10/16] 0.0, 128
    %1358 = vxpose.xlu0.b32.cont [11/16] 0.0, 128
    %1359 = vxpose.xlu0.b32.cont [12/16] 0.0, 128
    %1360 = vxpose.xlu0.b32.cont [13/16] 0.0, 128
    %1361 = vxpose.xlu0.b32.cont [14/16] 0.0, 128
    %1362 = vxpose.xlu0.b32.cont [15/16] 0.0, 128
    %1363 = vxpose.xlu0.b32.end [16/16] 0.0, 128
    %v1364 = vpop.trf.xlu0
    %v1365 = vpop.trf.xlu0
    %v1366 = vpop.trf.xlu0
    %v1367 = vpop.trf.xlu0
    %v1368 = vpop.trf.xlu0
    %v1369 = vpop.trf.xlu0
    %v1370 = vpop.trf.xlu0
    %v1371 = vpop.trf.xlu0
    %v1372 = vpop.trf.xlu0
    %v1373 = vpop.trf.xlu0
    %v1374 = vpop.trf.xlu0
    %v1375 = vpop.trf.xlu0
    %v1376 = vpop.trf.xlu0
    %v1377 = vpop.trf.xlu0
    %v1378 = vpop.trf.xlu0
    %v1379 = vpop.trf.xlu0
    %1380 = vxpose.xlu0.b32.start [1/16] %v450, 128
    %1381 = vxpose.xlu0.b32.cont [2/16] 0.0, 128
    %1382 = vxpose.xlu0.b32.cont [3/16] 0.0, 128
    %1383 = vxpose.xlu0.b32.cont [4/16] 0.0, 128
    %1384 = vxpose.xlu0.b32.cont [5/16] 0.0, 128
    %1385 = vxpose.xlu0.b32.cont [6/16] 0.0, 128
    %1386 = vxpose.xlu0.b32.cont [7/16] 0.0, 128
    %1387 = vxpose.xlu0.b32.cont [8/16] 0.0, 128
    %1388 = vxpose.xlu0.b32.cont [9/16] 0.0, 128
    %1389 = vxpose.xlu0.b32.cont [10/16] 0.0, 128
    %1390 = vxpose.xlu0.b32.cont [11/16] 0.0, 128
    %1391 = vxpose.xlu0.b32.cont [12/16] 0.0, 128
    %1392 = vxpose.xlu0.b32.cont [13/16] 0.0, 128
    %1393 = vxpose.xlu0.b32.cont [14/16] 0.0, 128
    %1394 = vxpose.xlu0.b32.cont [15/16] 0.0, 128
    %1395 = vxpose.xlu0.b32.end [16/16] 0.0, 128
    %v1396 = vpop.trf.xlu0
    %v1397 = vpop.trf.xlu0
    %v1398 = vpop.trf.xlu0
    %v1399 = vpop.trf.xlu0
    %v1400 = vpop.trf.xlu0
    %v1401 = vpop.trf.xlu0
    %v1402 = vpop.trf.xlu0
    %v1403 = vpop.trf.xlu0
    %v1404 = vpop.trf.xlu0
    %v1405 = vpop.trf.xlu0
    %v1406 = vpop.trf.xlu0
    %v1407 = vpop.trf.xlu0
    %v1408 = vpop.trf.xlu0
    %v1409 = vpop.trf.xlu0
    %v1410 = vpop.trf.xlu0
    %v1411 = vpop.trf.xlu0
    %1412 = vxpose.xlu0.b32.start [1/16] %v447, 128
    %1413 = vxpose.xlu0.b32.cont [2/16] 0.0, 128
    %1414 = vxpose.xlu0.b32.cont [3/16] 0.0, 128
    %1415 = vxpose.xlu0.b32.cont [4/16] 0.0, 128
    %1416 = vxpose.xlu0.b32.cont [5/16] 0.0, 128
    %1417 = vxpose.xlu0.b32.cont [6/16] 0.0, 128
    %1418 = vxpose.xlu0.b32.cont [7/16] 0.0, 128
    %1419 = vxpose.xlu0.b32.cont [8/16] 0.0, 128
    %1420 = vxpose.xlu0.b32.cont [9/16] 0.0, 128
    %1421 = vxpose.xlu0.b32.cont [10/16] 0.0, 128
    %1422 = vxpose.xlu0.b32.cont [11/16] 0.0, 128
    %1423 = vxpose.xlu0.b32.cont [12/16] 0.0, 128
    %1424 = vxpose.xlu0.b32.cont [13/16] 0.0, 128
    %1425 = vxpose.xlu0.b32.cont [14/16] 0.0, 128
    %1426 = vxpose.xlu0.b32.cont [15/16] 0.0, 128
    %1427 = vxpose.xlu0.b32.end [16/16] 0.0, 128
    %v1428 = vpop.trf.xlu0
    %v1429 = vpop.trf.xlu0
    %v1430 = vpop.trf.xlu0
    %v1431 = vpop.trf.xlu0
    %v1432 = vpop.trf.xlu0
    %v1433 = vpop.trf.xlu0
    %v1434 = vpop.trf.xlu0
    %v1435 = vpop.trf.xlu0
    %v1436 = vpop.trf.xlu0
    %v1437 = vpop.trf.xlu0
    %v1438 = vpop.trf.xlu0
    %v1439 = vpop.trf.xlu0
    %v1440 = vpop.trf.xlu0
    %v1441 = vpop.trf.xlu0
    %v1442 = vpop.trf.xlu0
    %v1443 = vpop.trf.xlu0
    %1444 = vxpose.xlu0.b32.start [1/16] %v451, 128
    %1445 = vxpose.xlu0.b32.cont [2/16] 0.0, 128
    %1446 = vxpose.xlu0.b32.cont [3/16] 0.0, 128
    %1447 = vxpose.xlu0.b32.cont [4/16] 0.0, 128
    %1448 = vxpose.xlu0.b32.cont [5/16] 0.0, 128
    %1449 = vxpose.xlu0.b32.cont [6/16] 0.0, 128
    %1450 = vxpose.xlu0.b32.cont [7/16] 0.0, 128
    %1451 = vxpose.xlu0.b32.cont [8/16] 0.0, 128
    %1452 = vxpose.xlu0.b32.cont [9/16] 0.0, 128
    %1453 = vxpose.xlu0.b32.cont [10/16] 0.0, 128
    %1454 = vxpose.xlu0.b32.cont [11/16] 0.0, 128
    %1455 = vxpose.xlu0.b32.cont [12/16] 0.0, 128
    %1456 = vxpose.xlu0.b32.cont [13/16] 0.0, 128
    %1457 = vxpose.xlu0.b32.cont [14/16] 0.0, 128
    %1458 = vxpose.xlu0.b32.cont [15/16] 0.0, 128
    %1459 = vxpose.xlu0.b32.end [16/16] 0.0, 128
    %v1460 = vpop.trf.xlu0
    %v1461 = vpop.trf.xlu0
    %v1462 = vpop.trf.xlu0
    %v1463 = vpop.trf.xlu0
    %v1464 = vpop.trf.xlu0
    %v1465 = vpop.trf.xlu0
    %v1466 = vpop.trf.xlu0
    %v1467 = vpop.trf.xlu0
    %v1468 = vpop.trf.xlu0
    %v1469 = vpop.trf.xlu0
    %v1470 = vpop.trf.xlu0
    %v1471 = vpop.trf.xlu0
    %v1472 = vpop.trf.xlu0
    %v1473 = vpop.trf.xlu0
    %v1474 = vpop.trf.xlu0
    %v1475 = vpop.trf.xlu0
    %v1476 = vcombine.low %v468, %v532
    %v1477 = vcombine.high %v468, %v532
    %v1479 = vunpack.c.l.s4 1983009808
    %v1480 = vunpack.c.0.s8 %v1479
    %v1481 = vlaneseq
    %v1482 = vshrl.u32 %v1481, 7
    %v1483 = vsub.s32 %v1480, %v1482
    %v1484 = vrot.slane %v1476, %v1483
    %v1486 = vunpack.c.l.s4 1983009808
    %v1487 = vunpack.c.0.s8 %v1486
    %v1488 = vlaneseq
    %v1489 = vshrl.u32 %v1488, 7
    %v1490 = vsub.s32 %v1487, %v1489
    %v1491 = vrot.slane %v1477, %v1490
    %v1492 = vcombine.low %v500, %v564
    %v1493 = vcombine.high %v500, %v564
    %v1495 = vunpack.c.l.s4 1983009808
    %v1496 = vunpack.c.0.s8 %v1495
    %v1497 = vlaneseq
    %v1498 = vshrl.u32 %v1497, 7
    %v1499 = vsub.s32 %v1496, %v1498
    %v1500 = vrot.slane %v1492, %v1499
    %v1502 = vunpack.c.l.s4 1983009808
    %v1503 = vunpack.c.0.s8 %v1502
    %v1504 = vlaneseq
    %v1505 = vshrl.u32 %v1504, 7
    %v1506 = vsub.s32 %v1503, %v1505
    %v1507 = vrot.slane %v1493, %v1506
    %v1508 = vcombine.low %v596, %v660
    %v1509 = vcombine.high %v596, %v660
    %v1511 = vunpack.c.l.s4 1983009808
    %v1512 = vunpack.c.0.s8 %v1511
    %v1513 = vlaneseq
    %v1514 = vshrl.u32 %v1513, 7
    %v1515 = vsub.s32 %v1512, %v1514
    %v1516 = vrot.slane %v1508, %v1515
    %v1518 = vunpack.c.l.s4 1983009808
    %v1519 = vunpack.c.0.s8 %v1518
    %v1520 = vlaneseq
    %v1521 = vshrl.u32 %v1520, 7
    %v1522 = vsub.s32 %v1519, %v1521
    %v1523 = vrot.slane %v1509, %v1522
    %v1524 = vcombine.low %v628, %v692
    %v1525 = vcombine.high %v628, %v692
    %v1527 = vunpack.c.l.s4 1983009808
    %v1528 = vunpack.c.0.s8 %v1527
    %v1529 = vlaneseq
    %v1530 = vshrl.u32 %v1529, 7
    %v1531 = vsub.s32 %v1528, %v1530
    %v1532 = vrot.slane %v1524, %v1531
    %v1534 = vunpack.c.l.s4 1983009808
    %v1535 = vunpack.c.0.s8 %v1534
    %v1536 = vlaneseq
    %v1537 = vshrl.u32 %v1536, 7
    %v1538 = vsub.s32 %v1535, %v1537
    %v1539 = vrot.slane %v1525, %v1538
    %v1540 = vcombine.low %v1484, %v1500
    %v1541 = vcombine.high %v1484, %v1500
    %v1543 = vunpack.c.l.s4 1934713408
    %v1544 = vunpack.c.0.s8 %v1543
    %v1545 = vlaneseq
    %v1546 = vshrl.u32 %v1545, 7
    %v1547 = vsub.s32 %v1544, %v1546
    %v1548 = vrot.slane %v1540, %v1547
    %v1550 = vunpack.c.l.s4 1934713408
    %v1551 = vunpack.c.0.s8 %v1550
    %v1552 = vlaneseq
    %v1553 = vshrl.u32 %v1552, 7
    %v1554 = vsub.s32 %v1551, %v1553
    %v1555 = vrot.slane %v1541, %v1554
    %v1556 = vcombine.low %v1491, %v1507
    %v1557 = vcombine.high %v1491, %v1507
    %v1559 = vunpack.c.l.s4 1934713408
    %v1560 = vunpack.c.0.s8 %v1559
    %v1561 = vlaneseq
    %v1562 = vshrl.u32 %v1561, 7
    %v1563 = vsub.s32 %v1560, %v1562
    %v1564 = vrot.slane %v1556, %v1563
    %v1566 = vunpack.c.l.s4 1934713408
    %v1567 = vunpack.c.0.s8 %v1566
    %v1568 = vlaneseq
    %v1569 = vshrl.u32 %v1568, 7
    %v1570 = vsub.s32 %v1567, %v1569
    %v1571 = vrot.slane %v1557, %v1570
    %v1572 = vcombine.low %v1516, %v1532
    %v1573 = vcombine.high %v1516, %v1532
    %v1575 = vunpack.c.l.s4 1934713408
    %v1576 = vunpack.c.0.s8 %v1575
    %v1577 = vlaneseq
    %v1578 = vshrl.u32 %v1577, 7
    %v1579 = vsub.s32 %v1576, %v1578
    %v1580 = vrot.slane %v1572, %v1579
    %v1582 = vunpack.c.l.s4 1934713408
    %v1583 = vunpack.c.0.s8 %v1582
    %v1584 = vlaneseq
    %v1585 = vshrl.u32 %v1584, 7
    %v1586 = vsub.s32 %v1583, %v1585
    %v1587 = vrot.slane %v1573, %v1586
    %v1588 = vcombine.low %v1523, %v1539
    %v1589 = vcombine.high %v1523, %v1539
    %v1591 = vunpack.c.l.s4 1934713408
    %v1592 = vunpack.c.0.s8 %v1591
    %v1593 = vlaneseq
    %v1594 = vshrl.u32 %v1593, 7
    %v1595 = vsub.s32 %v1592, %v1594
    %v1596 = vrot.slane %v1588, %v1595
    %v1598 = vunpack.c.l.s4 1934713408
    %v1599 = vunpack.c.0.s8 %v1598
    %v1600 = vlaneseq
    %v1601 = vshrl.u32 %v1600, 7
    %v1602 = vsub.s32 %v1599, %v1601
    %v1603 = vrot.slane %v1589, %v1602
    %v1604 = vcombine.low %v1548, %v1580
    %v1605 = vcombine.high %v1548, %v1580
    %v1606 = vcombine.low %v1555, %v1587
    %v1607 = vcombine.high %v1555, %v1587
    %v1608 = vcombine.low %v1564, %v1596
    %v1609 = vcombine.high %v1564, %v1596
    %v1610 = vcombine.low %v1571, %v1603
    %v1611 = vcombine.high %v1571, %v1603
    %v1612 = vcombine.low %v724, %v788
    %v1613 = vcombine.high %v724, %v788
    %v1615 = vunpack.c.l.s4 1983009808
    %v1616 = vunpack.c.0.s8 %v1615
    %v1617 = vlaneseq
    %v1618 = vshrl.u32 %v1617, 7
    %v1619 = vsub.s32 %v1616, %v1618
    %v1620 = vrot.slane %v1612, %v1619
    %v1622 = vunpack.c.l.s4 1983009808
    %v1623 = vunpack.c.0.s8 %v1622
    %v1624 = vlaneseq
    %v1625 = vshrl.u32 %v1624, 7
    %v1626 = vsub.s32 %v1623, %v1625
    %v1627 = vrot.slane %v1613, %v1626
    %v1628 = vcombine.low %v756, %v820
    %v1629 = vcombine.high %v756, %v820
    %v1631 = vunpack.c.l.s4 1983009808
    %v1632 = vunpack.c.0.s8 %v1631
    %v1633 = vlaneseq
    %v1634 = vshrl.u32 %v1633, 7
    %v1635 = vsub.s32 %v1632, %v1634
    %v1636 = vrot.slane %v1628, %v1635
    %v1638 = vunpack.c.l.s4 1983009808
    %v1639 = vunpack.c.0.s8 %v1638
    %v1640 = vlaneseq
    %v1641 = vshrl.u32 %v1640, 7
    %v1642 = vsub.s32 %v1639, %v1641
    %v1643 = vrot.slane %v1629, %v1642
    %v1644 = vcombine.low %v852, %v916
    %v1645 = vcombine.high %v852, %v916
    %v1647 = vunpack.c.l.s4 1983009808
    %v1648 = vunpack.c.0.s8 %v1647
    %v1649 = vlaneseq
    %v1650 = vshrl.u32 %v1649, 7
    %v1651 = vsub.s32 %v1648, %v1650
    %v1652 = vrot.slane %v1644, %v1651
    %v1654 = vunpack.c.l.s4 1983009808
    %v1655 = vunpack.c.0.s8 %v1654
    %v1656 = vlaneseq
    %v1657 = vshrl.u32 %v1656, 7
    %v1658 = vsub.s32 %v1655, %v1657
    %v1659 = vrot.slane %v1645, %v1658
    %v1660 = vcombine.low %v884, %v948
    %v1661 = vcombine.high %v884, %v948
    %v1663 = vunpack.c.l.s4 1983009808
    %v1664 = vunpack.c.0.s8 %v1663
    %v1665 = vlaneseq
    %v1666 = vshrl.u32 %v1665, 7
    %v1667 = vsub.s32 %v1664, %v1666
    %v1668 = vrot.slane %v1660, %v1667
    %v1670 = vunpack.c.l.s4 1983009808
    %v1671 = vunpack.c.0.s8 %v1670
    %v1672 = vlaneseq
    %v1673 = vshrl.u32 %v1672, 7
    %v1674 = vsub.s32 %v1671, %v1673
    %v1675 = vrot.slane %v1661, %v1674
    %v1676 = vcombine.low %v1620, %v1636
    %v1677 = vcombine.high %v1620, %v1636
    %v1679 = vunpack.c.l.s4 1934713408
    %v1680 = vunpack.c.0.s8 %v1679
    %v1681 = vlaneseq
    %v1682 = vshrl.u32 %v1681, 7
    %v1683 = vsub.s32 %v1680, %v1682
    %v1684 = vrot.slane %v1676, %v1683
    %v1686 = vunpack.c.l.s4 1934713408
    %v1687 = vunpack.c.0.s8 %v1686
    %v1688 = vlaneseq
    %v1689 = vshrl.u32 %v1688, 7
    %v1690 = vsub.s32 %v1687, %v1689
    %v1691 = vrot.slane %v1677, %v1690
    %v1692 = vcombine.low %v1627, %v1643
    %v1693 = vcombine.high %v1627, %v1643
    %v1695 = vunpack.c.l.s4 1934713408
    %v1696 = vunpack.c.0.s8 %v1695
    %v1697 = vlaneseq
    %v1698 = vshrl.u32 %v1697, 7
    %v1699 = vsub.s32 %v1696, %v1698
    %v1700 = vrot.slane %v1692, %v1699
    %v1702 = vunpack.c.l.s4 1934713408
    %v1703 = vunpack.c.0.s8 %v1702
    %v1704 = vlaneseq
    %v1705 = vshrl.u32 %v1704, 7
    %v1706 = vsub.s32 %v1703, %v1705
    %v1707 = vrot.slane %v1693, %v1706
    %v1708 = vcombine.low %v1652, %v1668
    %v1709 = vcombine.high %v1652, %v1668
    %v1711 = vunpack.c.l.s4 1934713408
    %v1712 = vunpack.c.0.s8 %v1711
    %v1713 = vlaneseq
    %v1714 = vshrl.u32 %v1713, 7
    %v1715 = vsub.s32 %v1712, %v1714
    %v1716 = vrot.slane %v1708, %v1715
    %v1718 = vunpack.c.l.s4 1934713408
    %v1719 = vunpack.c.0.s8 %v1718
    %v1720 = vlaneseq
    %v1721 = vshrl.u32 %v1720, 7
    %v1722 = vsub.s32 %v1719, %v1721
    %v1723 = vrot.slane %v1709, %v1722
    %v1724 = vcombine.low %v1659, %v1675
    %v1725 = vcombine.high %v1659, %v1675
    %v1727 = vunpack.c.l.s4 1934713408
    %v1728 = vunpack.c.0.s8 %v1727
    %v1729 = vlaneseq
    %v1730 = vshrl.u32 %v1729, 7
    %v1731 = vsub.s32 %v1728, %v1730
    %v1732 = vrot.slane %v1724, %v1731
    %v1734 = vunpack.c.l.s4 1934713408
    %v1735 = vunpack.c.0.s8 %v1734
    %v1736 = vlaneseq
    %v1737 = vshrl.u32 %v1736, 7
    %v1738 = vsub.s32 %v1735, %v1737
    %v1739 = vrot.slane %v1725, %v1738
    %v1740 = vcombine.low %v1684, %v1716
    %v1741 = vcombine.high %v1684, %v1716
    %v1742 = vcombine.low %v1691, %v1723
    %v1743 = vcombine.high %v1691, %v1723
    %v1744 = vcombine.low %v1700, %v1732
    %v1745 = vcombine.high %v1700, %v1732
    %v1746 = vcombine.low %v1707, %v1739
    %v1747 = vcombine.high %v1707, %v1739
    %v1748 = vcombine.low %v980, %v1044
    %v1749 = vcombine.high %v980, %v1044
    %v1751 = vunpack.c.l.s4 1983009808
    %v1752 = vunpack.c.0.s8 %v1751
    %v1753 = vlaneseq
    %v1754 = vshrl.u32 %v1753, 7
    %v1755 = vsub.s32 %v1752, %v1754
    %v1756 = vrot.slane %v1748, %v1755
    %v1758 = vunpack.c.l.s4 1983009808
    %v1759 = vunpack.c.0.s8 %v1758
    %v1760 = vlaneseq
    %v1761 = vshrl.u32 %v1760, 7
    %v1762 = vsub.s32 %v1759, %v1761
    %v1763 = vrot.slane %v1749, %v1762
    %v1764 = vcombine.low %v1012, %v1076
    %v1765 = vcombine.high %v1012, %v1076
    %v1767 = vunpack.c.l.s4 1983009808
    %v1768 = vunpack.c.0.s8 %v1767
    %v1769 = vlaneseq
    %v1770 = vshrl.u32 %v1769, 7
    %v1771 = vsub.s32 %v1768, %v1770
    %v1772 = vrot.slane %v1764, %v1771
    %v1774 = vunpack.c.l.s4 1983009808
    %v1775 = vunpack.c.0.s8 %v1774
    %v1776 = vlaneseq
    %v1777 = vshrl.u32 %v1776, 7
    %v1778 = vsub.s32 %v1775, %v1777
    %v1779 = vrot.slane %v1765, %v1778
    %v1780 = vcombine.low %v1108, %v1172
    %v1781 = vcombine.high %v1108, %v1172
    %v1783 = vunpack.c.l.s4 1983009808
    %v1784 = vunpack.c.0.s8 %v1783
    %v1785 = vlaneseq
    %v1786 = vshrl.u32 %v1785, 7
    %v1787 = vsub.s32 %v1784, %v1786
    %v1788 = vrot.slane %v1780, %v1787
    %v1790 = vunpack.c.l.s4 1983009808
    %v1791 = vunpack.c.0.s8 %v1790
    %v1792 = vlaneseq
    %v1793 = vshrl.u32 %v1792, 7
    %v1794 = vsub.s32 %v1791, %v1793
    %v1795 = vrot.slane %v1781, %v1794
    %v1796 = vcombine.low %v1140, %v1204
    %v1797 = vcombine.high %v1140, %v1204
    %v1799 = vunpack.c.l.s4 1983009808
    %v1800 = vunpack.c.0.s8 %v1799
    %v1801 = vlaneseq
    %v1802 = vshrl.u32 %v1801, 7
    %v1803 = vsub.s32 %v1800, %v1802
    %v1804 = vrot.slane %v1796, %v1803
    %v1806 = vunpack.c.l.s4 1983009808
    %v1807 = vunpack.c.0.s8 %v1806
    %v1808 = vlaneseq
    %v1809 = vshrl.u32 %v1808, 7
    %v1810 = vsub.s32 %v1807, %v1809
    %v1811 = vrot.slane %v1797, %v1810
    %v1812 = vcombine.low %v1756, %v1772
    %v1813 = vcombine.high %v1756, %v1772
    %v1815 = vunpack.c.l.s4 1934713408
    %v1816 = vunpack.c.0.s8 %v1815
    %v1817 = vlaneseq
    %v1818 = vshrl.u32 %v1817, 7
    %v1819 = vsub.s32 %v1816, %v1818
    %v1820 = vrot.slane %v1812, %v1819
    %v1822 = vunpack.c.l.s4 1934713408
    %v1823 = vunpack.c.0.s8 %v1822
    %v1824 = vlaneseq
    %v1825 = vshrl.u32 %v1824, 7
    %v1826 = vsub.s32 %v1823, %v1825
    %v1827 = vrot.slane %v1813, %v1826
    %v1828 = vcombine.low %v1763, %v1779
    %v1829 = vcombine.high %v1763, %v1779
    %v1831 = vunpack.c.l.s4 1934713408
    %v1832 = vunpack.c.0.s8 %v1831
    %v1833 = vlaneseq
    %v1834 = vshrl.u32 %v1833, 7
    %v1835 = vsub.s32 %v1832, %v1834
    %v1836 = vrot.slane %v1828, %v1835
    %v1838 = vunpack.c.l.s4 1934713408
    %v1839 = vunpack.c.0.s8 %v1838
    %v1840 = vlaneseq
    %v1841 = vshrl.u32 %v1840, 7
    %v1842 = vsub.s32 %v1839, %v1841
    %v1843 = vrot.slane %v1829, %v1842
    %v1844 = vcombine.low %v1788, %v1804
    %v1845 = vcombine.high %v1788, %v1804
    %v1847 = vunpack.c.l.s4 1934713408
    %v1848 = vunpack.c.0.s8 %v1847
    %v1849 = vlaneseq
    %v1850 = vshrl.u32 %v1849, 7
    %v1851 = vsub.s32 %v1848, %v1850
    %v1852 = vrot.slane %v1844, %v1851
    %v1854 = vunpack.c.l.s4 1934713408
    %v1855 = vunpack.c.0.s8 %v1854
    %v1856 = vlaneseq
    %v1857 = vshrl.u32 %v1856, 7
    %v1858 = vsub.s32 %v1855, %v1857
    %v1859 = vrot.slane %v1845, %v1858
    %v1860 = vcombine.low %v1795, %v1811
    %v1861 = vcombine.high %v1795, %v1811
    %v1863 = vunpack.c.l.s4 1934713408
    %v1864 = vunpack.c.0.s8 %v1863
    %v1865 = vlaneseq
    %v1866 = vshrl.u32 %v1865, 7
    %v1867 = vsub.s32 %v1864, %v1866
    %v1868 = vrot.slane %v1860, %v1867
    %v1870 = vunpack.c.l.s4 1934713408
    %v1871 = vunpack.c.0.s8 %v1870
    %v1872 = vlaneseq
    %v1873 = vshrl.u32 %v1872, 7
    %v1874 = vsub.s32 %v1871, %v1873
    %v1875 = vrot.slane %v1861, %v1874
    %v1876 = vcombine.low %v1820, %v1852
    %v1877 = vcombine.high %v1820, %v1852
    %v1878 = vcombine.low %v1827, %v1859
    %v1879 = vcombine.high %v1827, %v1859
    %v1880 = vcombine.low %v1836, %v1868
    %v1881 = vcombine.high %v1836, %v1868
    %v1882 = vcombine.low %v1843, %v1875
    %v1883 = vcombine.high %v1843, %v1875
    %v1884 = vcombine.low %v1236, %v1300
    %v1885 = vcombine.high %v1236, %v1300
    %v1887 = vunpack.c.l.s4 1983009808
    %v1888 = vunpack.c.0.s8 %v1887
    %v1889 = vlaneseq
    %v1890 = vshrl.u32 %v1889, 7
    %v1891 = vsub.s32 %v1888, %v1890
    %v1892 = vrot.slane %v1884, %v1891
    %v1894 = vunpack.c.l.s4 1983009808
    %v1895 = vunpack.c.0.s8 %v1894
    %v1896 = vlaneseq
    %v1897 = vshrl.u32 %v1896, 7
    %v1898 = vsub.s32 %v1895, %v1897
    %v1899 = vrot.slane %v1885, %v1898
    %v1900 = vcombine.low %v1268, %v1332
    %v1901 = vcombine.high %v1268, %v1332
    %v1903 = vunpack.c.l.s4 1983009808
    %v1904 = vunpack.c.0.s8 %v1903
    %v1905 = vlaneseq
    %v1906 = vshrl.u32 %v1905, 7
    %v1907 = vsub.s32 %v1904, %v1906
    %v1908 = vrot.slane %v1900, %v1907
    %v1910 = vunpack.c.l.s4 1983009808
    %v1911 = vunpack.c.0.s8 %v1910
    %v1912 = vlaneseq
    %v1913 = vshrl.u32 %v1912, 7
    %v1914 = vsub.s32 %v1911, %v1913
    %v1915 = vrot.slane %v1901, %v1914
    %v1916 = vcombine.low %v1364, %v1428
    %v1917 = vcombine.high %v1364, %v1428
    %v1919 = vunpack.c.l.s4 1983009808
    %v1920 = vunpack.c.0.s8 %v1919
    %v1921 = vlaneseq
    %v1922 = vshrl.u32 %v1921, 7
    %v1923 = vsub.s32 %v1920, %v1922
    %v1924 = vrot.slane %v1916, %v1923
    %v1926 = vunpack.c.l.s4 1983009808
    %v1927 = vunpack.c.0.s8 %v1926
    %v1928 = vlaneseq
    %v1929 = vshrl.u32 %v1928, 7
    %v1930 = vsub.s32 %v1927, %v1929
    %v1931 = vrot.slane %v1917, %v1930
    %v1932 = vcombine.low %v1396, %v1460
    %v1933 = vcombine.high %v1396, %v1460
    %v1935 = vunpack.c.l.s4 1983009808
    %v1936 = vunpack.c.0.s8 %v1935
    %v1937 = vlaneseq
    %v1938 = vshrl.u32 %v1937, 7
    %v1939 = vsub.s32 %v1936, %v1938
    %v1940 = vrot.slane %v1932, %v1939
    %v1942 = vunpack.c.l.s4 1983009808
    %v1943 = vunpack.c.0.s8 %v1942
    %v1944 = vlaneseq
    %v1945 = vshrl.u32 %v1944, 7
    %v1946 = vsub.s32 %v1943, %v1945
    %v1947 = vrot.slane %v1933, %v1946
    %v1948 = vcombine.low %v1892, %v1908
    %v1949 = vcombine.high %v1892, %v1908
    %v1951 = vunpack.c.l.s4 1934713408
    %v1952 = vunpack.c.0.s8 %v1951
    %v1953 = vlaneseq
    %v1954 = vshrl.u32 %v1953, 7
    %v1955 = vsub.s32 %v1952, %v1954
    %v1956 = vrot.slane %v1948, %v1955
    %v1958 = vunpack.c.l.s4 1934713408
    %v1959 = vunpack.c.0.s8 %v1958
    %v1960 = vlaneseq
    %v1961 = vshrl.u32 %v1960, 7
    %v1962 = vsub.s32 %v1959, %v1961
    %v1963 = vrot.slane %v1949, %v1962
    %v1964 = vcombine.low %v1899, %v1915
    %v1965 = vcombine.high %v1899, %v1915
    %v1967 = vunpack.c.l.s4 1934713408
    %v1968 = vunpack.c.0.s8 %v1967
    %v1969 = vlaneseq
    %v1970 = vshrl.u32 %v1969, 7
    %v1971 = vsub.s32 %v1968, %v1970
    %v1972 = vrot.slane %v1964, %v1971
    %v1974 = vunpack.c.l.s4 1934713408
    %v1975 = vunpack.c.0.s8 %v1974
    %v1976 = vlaneseq
    %v1977 = vshrl.u32 %v1976, 7
    %v1978 = vsub.s32 %v1975, %v1977
    %v1979 = vrot.slane %v1965, %v1978
    %v1980 = vcombine.low %v1924, %v1940
    %v1981 = vcombine.high %v1924, %v1940
    %v1983 = vunpack.c.l.s4 1934713408
    %v1984 = vunpack.c.0.s8 %v1983
    %v1985 = vlaneseq
    %v1986 = vshrl.u32 %v1985, 7
    %v1987 = vsub.s32 %v1984, %v1986
    %v1988 = vrot.slane %v1980, %v1987
    %v1990 = vunpack.c.l.s4 1934713408
    %v1991 = vunpack.c.0.s8 %v1990
    %v1992 = vlaneseq
    %v1993 = vshrl.u32 %v1992, 7
    %v1994 = vsub.s32 %v1991, %v1993
    %v1995 = vrot.slane %v1981, %v1994
    %v1996 = vcombine.low %v1931, %v1947
    %v1997 = vcombine.high %v1931, %v1947
    %v1999 = vunpack.c.l.s4 1934713408
    %v2000 = vunpack.c.0.s8 %v1999
    %v2001 = vlaneseq
    %v2002 = vshrl.u32 %v2001, 7
    %v2003 = vsub.s32 %v2000, %v2002
    %v2004 = vrot.slane %v1996, %v2003
    %v2006 = vunpack.c.l.s4 1934713408
    %v2007 = vunpack.c.0.s8 %v2006
    %v2008 = vlaneseq
    %v2009 = vshrl.u32 %v2008, 7
    %v2010 = vsub.s32 %v2007, %v2009
    %v2011 = vrot.slane %v1997, %v2010
    %v2012 = vcombine.low %v1956, %v1988
    %v2013 = vcombine.high %v1956, %v1988
    %v2014 = vcombine.low %v1963, %v1995
    %v2015 = vcombine.high %v1963, %v1995
    %v2016 = vcombine.low %v1972, %v2004
    %v2017 = vcombine.high %v1972, %v2004
    %v2018 = vcombine.low %v1979, %v2011
    %v2019 = vcombine.high %v1979, %v2011
    %v2020 = vcombine.low %v469, %v533
    %v2021 = vcombine.high %v469, %v533
    %v2023 = vunpack.c.l.s4 1983009808
    %v2024 = vunpack.c.0.s8 %v2023
    %v2025 = vlaneseq
    %v2026 = vshrl.u32 %v2025, 7
    %v2027 = vsub.s32 %v2024, %v2026
    %v2028 = vrot.slane %v2020, %v2027
    %v2030 = vunpack.c.l.s4 1983009808
    %v2031 = vunpack.c.0.s8 %v2030
    %v2032 = vlaneseq
    %v2033 = vshrl.u32 %v2032, 7
    %v2034 = vsub.s32 %v2031, %v2033
    %v2035 = vrot.slane %v2021, %v2034
    %v2036 = vcombine.low %v501, %v565
    %v2037 = vcombine.high %v501, %v565
    %v2039 = vunpack.c.l.s4 1983009808
    %v2040 = vunpack.c.0.s8 %v2039
    %v2041 = vlaneseq
    %v2042 = vshrl.u32 %v2041, 7
    %v2043 = vsub.s32 %v2040, %v2042
    %v2044 = vrot.slane %v2036, %v2043
    %v2046 = vunpack.c.l.s4 1983009808
    %v2047 = vunpack.c.0.s8 %v2046
    %v2048 = vlaneseq
    %v2049 = vshrl.u32 %v2048, 7
    %v2050 = vsub.s32 %v2047, %v2049
    %v2051 = vrot.slane %v2037, %v2050
    %v2052 = vcombine.low %v597, %v661
    %v2053 = vcombine.high %v597, %v661
    %v2055 = vunpack.c.l.s4 1983009808
    %v2056 = vunpack.c.0.s8 %v2055
    %v2057 = vlaneseq
    %v2058 = vshrl.u32 %v2057, 7
    %v2059 = vsub.s32 %v2056, %v2058
    %v2060 = vrot.slane %v2052, %v2059
    %v2062 = vunpack.c.l.s4 1983009808
    %v2063 = vunpack.c.0.s8 %v2062
    %v2064 = vlaneseq
    %v2065 = vshrl.u32 %v2064, 7
    %v2066 = vsub.s32 %v2063, %v2065
    %v2067 = vrot.slane %v2053, %v2066
    %v2068 = vcombine.low %v629, %v693
    %v2069 = vcombine.high %v629, %v693
    %v2071 = vunpack.c.l.s4 1983009808
    %v2072 = vunpack.c.0.s8 %v2071
    %v2073 = vlaneseq
    %v2074 = vshrl.u32 %v2073, 7
    %v2075 = vsub.s32 %v2072, %v2074
    %v2076 = vrot.slane %v2068, %v2075
    %v2078 = vunpack.c.l.s4 1983009808
    %v2079 = vunpack.c.0.s8 %v2078
    %v2080 = vlaneseq
    %v2081 = vshrl.u32 %v2080, 7
    %v2082 = vsub.s32 %v2079, %v2081
    %v2083 = vrot.slane %v2069, %v2082
    %v2084 = vcombine.low %v2028, %v2044
    %v2085 = vcombine.high %v2028, %v2044
    %v2087 = vunpack.c.l.s4 1934713408
    %v2088 = vunpack.c.0.s8 %v2087
    %v2089 = vlaneseq
    %v2090 = vshrl.u32 %v2089, 7
    %v2091 = vsub.s32 %v2088, %v2090
    %v2092 = vrot.slane %v2084, %v2091
    %v2094 = vunpack.c.l.s4 1934713408
    %v2095 = vunpack.c.0.s8 %v2094
    %v2096 = vlaneseq
    %v2097 = vshrl.u32 %v2096, 7
    %v2098 = vsub.s32 %v2095, %v2097
    %v2099 = vrot.slane %v2085, %v2098
    %v2100 = vcombine.low %v2035, %v2051
    %v2101 = vcombine.high %v2035, %v2051
    %v2103 = vunpack.c.l.s4 1934713408
    %v2104 = vunpack.c.0.s8 %v2103
    %v2105 = vlaneseq
    %v2106 = vshrl.u32 %v2105, 7
    %v2107 = vsub.s32 %v2104, %v2106
    %v2108 = vrot.slane %v2100, %v2107
    %v2110 = vunpack.c.l.s4 1934713408
    %v2111 = vunpack.c.0.s8 %v2110
    %v2112 = vlaneseq
    %v2113 = vshrl.u32 %v2112, 7
    %v2114 = vsub.s32 %v2111, %v2113
    %v2115 = vrot.slane %v2101, %v2114
    %v2116 = vcombine.low %v2060, %v2076
    %v2117 = vcombine.high %v2060, %v2076
    %v2119 = vunpack.c.l.s4 1934713408
    %v2120 = vunpack.c.0.s8 %v2119
    %v2121 = vlaneseq
    %v2122 = vshrl.u32 %v2121, 7
    %v2123 = vsub.s32 %v2120, %v2122
    %v2124 = vrot.slane %v2116, %v2123
    %v2126 = vunpack.c.l.s4 1934713408
    %v2127 = vunpack.c.0.s8 %v2126
    %v2128 = vlaneseq
    %v2129 = vshrl.u32 %v2128, 7
    %v2130 = vsub.s32 %v2127, %v2129
    %v2131 = vrot.slane %v2117, %v2130
    %v2132 = vcombine.low %v2067, %v2083
    %v2133 = vcombine.high %v2067, %v2083
    %v2135 = vunpack.c.l.s4 1934713408
    %v2136 = vunpack.c.0.s8 %v2135
    %v2137 = vlaneseq
    %v2138 = vshrl.u32 %v2137, 7
    %v2139 = vsub.s32 %v2136, %v2138
    %v2140 = vrot.slane %v2132, %v2139
    %v2142 = vunpack.c.l.s4 1934713408
    %v2143 = vunpack.c.0.s8 %v2142
    %v2144 = vlaneseq
    %v2145 = vshrl.u32 %v2144, 7
    %v2146 = vsub.s32 %v2143, %v2145
    %v2147 = vrot.slane %v2133, %v2146
    %v2148 = vcombine.low %v2092, %v2124
    %v2149 = vcombine.high %v2092, %v2124
    %v2150 = vcombine.low %v2099, %v2131
    %v2151 = vcombine.high %v2099, %v2131
    %v2152 = vcombine.low %v2108, %v2140
    %v2153 = vcombine.high %v2108, %v2140
    %v2154 = vcombine.low %v2115, %v2147
    %v2155 = vcombine.high %v2115, %v2147
    %v2156 = vcombine.low %v725, %v789
    %v2157 = vcombine.high %v725, %v789
    %v2159 = vunpack.c.l.s4 1983009808
    %v2160 = vunpack.c.0.s8 %v2159
    %v2161 = vlaneseq
    %v2162 = vshrl.u32 %v2161, 7
    %v2163 = vsub.s32 %v2160, %v2162
    %v2164 = vrot.slane %v2156, %v2163
    %v2166 = vunpack.c.l.s4 1983009808
    %v2167 = vunpack.c.0.s8 %v2166
    %v2168 = vlaneseq
    %v2169 = vshrl.u32 %v2168, 7
    %v2170 = vsub.s32 %v2167, %v2169
    %v2171 = vrot.slane %v2157, %v2170
    %v2172 = vcombine.low %v757, %v821
    %v2173 = vcombine.high %v757, %v821
    %v2175 = vunpack.c.l.s4 1983009808
    %v2176 = vunpack.c.0.s8 %v2175
    %v2177 = vlaneseq
    %v2178 = vshrl.u32 %v2177, 7
    %v2179 = vsub.s32 %v2176, %v2178
    %v2180 = vrot.slane %v2172, %v2179
    %v2182 = vunpack.c.l.s4 1983009808
    %v2183 = vunpack.c.0.s8 %v2182
    %v2184 = vlaneseq
    %v2185 = vshrl.u32 %v2184, 7
    %v2186 = vsub.s32 %v2183, %v2185
    %v2187 = vrot.slane %v2173, %v2186
    %v2188 = vcombine.low %v853, %v917
    %v2189 = vcombine.high %v853, %v917
    %v2191 = vunpack.c.l.s4 1983009808
    %v2192 = vunpack.c.0.s8 %v2191
    %v2193 = vlaneseq
    %v2194 = vshrl.u32 %v2193, 7
    %v2195 = vsub.s32 %v2192, %v2194
    %v2196 = vrot.slane %v2188, %v2195
    %v2198 = vunpack.c.l.s4 1983009808
    %v2199 = vunpack.c.0.s8 %v2198
    %v2200 = vlaneseq
    %v2201 = vshrl.u32 %v2200, 7
    %v2202 = vsub.s32 %v2199, %v2201
    %v2203 = vrot.slane %v2189, %v2202
    %v2204 = vcombine.low %v885, %v949
    %v2205 = vcombine.high %v885, %v949
    %v2207 = vunpack.c.l.s4 1983009808
    %v2208 = vunpack.c.0.s8 %v2207
    %v2209 = vlaneseq
    %v2210 = vshrl.u32 %v2209, 7
    %v2211 = vsub.s32 %v2208, %v2210
    %v2212 = vrot.slane %v2204, %v2211
    %v2214 = vunpack.c.l.s4 1983009808
    %v2215 = vunpack.c.0.s8 %v2214
    %v2216 = vlaneseq
    %v2217 = vshrl.u32 %v2216, 7
    %v2218 = vsub.s32 %v2215, %v2217
    %v2219 = vrot.slane %v2205, %v2218
    %v2220 = vcombine.low %v2164, %v2180
    %v2221 = vcombine.high %v2164, %v2180
    %v2223 = vunpack.c.l.s4 1934713408
    %v2224 = vunpack.c.0.s8 %v2223
    %v2225 = vlaneseq
    %v2226 = vshrl.u32 %v2225, 7
    %v2227 = vsub.s32 %v2224, %v2226
    %v2228 = vrot.slane %v2220, %v2227
    %v2230 = vunpack.c.l.s4 1934713408
    %v2231 = vunpack.c.0.s8 %v2230
    %v2232 = vlaneseq
    %v2233 = vshrl.u32 %v2232, 7
    %v2234 = vsub.s32 %v2231, %v2233
    %v2235 = vrot.slane %v2221, %v2234
    %v2236 = vcombine.low %v2171, %v2187
    %v2237 = vcombine.high %v2171, %v2187
    %v2239 = vunpack.c.l.s4 1934713408
    %v2240 = vunpack.c.0.s8 %v2239
    %v2241 = vlaneseq
    %v2242 = vshrl.u32 %v2241, 7
    %v2243 = vsub.s32 %v2240, %v2242
    %v2244 = vrot.slane %v2236, %v2243
    %v2246 = vunpack.c.l.s4 1934713408
    %v2247 = vunpack.c.0.s8 %v2246
    %v2248 = vlaneseq
    %v2249 = vshrl.u32 %v2248, 7
    %v2250 = vsub.s32 %v2247, %v2249
    %v2251 = vrot.slane %v2237, %v2250
    %v2252 = vcombine.low %v2196, %v2212
    %v2253 = vcombine.high %v2196, %v2212
    %v2255 = vunpack.c.l.s4 1934713408
    %v2256 = vunpack.c.0.s8 %v2255
    %v2257 = vlaneseq
    %v2258 = vshrl.u32 %v2257, 7
    %v2259 = vsub.s32 %v2256, %v2258
    %v2260 = vrot.slane %v2252, %v2259
    %v2262 = vunpack.c.l.s4 1934713408
    %v2263 = vunpack.c.0.s8 %v2262
    %v2264 = vlaneseq
    %v2265 = vshrl.u32 %v2264, 7
    %v2266 = vsub.s32 %v2263, %v2265
    %v2267 = vrot.slane %v2253, %v2266
    %v2268 = vcombine.low %v2203, %v2219
    %v2269 = vcombine.high %v2203, %v2219
    %v2271 = vunpack.c.l.s4 1934713408
    %v2272 = vunpack.c.0.s8 %v2271
    %v2273 = vlaneseq
    %v2274 = vshrl.u32 %v2273, 7
    %v2275 = vsub.s32 %v2272, %v2274
    %v2276 = vrot.slane %v2268, %v2275
    %v2278 = vunpack.c.l.s4 1934713408
    %v2279 = vunpack.c.0.s8 %v2278
    %v2280 = vlaneseq
    %v2281 = vshrl.u32 %v2280, 7
    %v2282 = vsub.s32 %v2279, %v2281
    %v2283 = vrot.slane %v2269, %v2282
    %v2284 = vcombine.low %v2228, %v2260
    %v2285 = vcombine.high %v2228, %v2260
    %v2286 = vcombine.low %v2235, %v2267
    %v2287 = vcombine.high %v2235, %v2267
    %v2288 = vcombine.low %v2244, %v2276
    %v2289 = vcombine.high %v2244, %v2276
    %v2290 = vcombine.low %v2251, %v2283
    %v2291 = vcombine.high %v2251, %v2283
    %v2292 = vcombine.low %v981, %v1045
    %v2293 = vcombine.high %v981, %v1045
    %v2295 = vunpack.c.l.s4 1983009808
    %v2296 = vunpack.c.0.s8 %v2295
    %v2297 = vlaneseq
    %v2298 = vshrl.u32 %v2297, 7
    %v2299 = vsub.s32 %v2296, %v2298
    %v2300 = vrot.slane %v2292, %v2299
    %v2302 = vunpack.c.l.s4 1983009808
    %v2303 = vunpack.c.0.s8 %v2302
    %v2304 = vlaneseq
    %v2305 = vshrl.u32 %v2304, 7
    %v2306 = vsub.s32 %v2303, %v2305
    %v2307 = vrot.slane %v2293, %v2306
    %v2308 = vcombine.low %v1013, %v1077
    %v2309 = vcombine.high %v1013, %v1077
    %v2311 = vunpack.c.l.s4 1983009808
    %v2312 = vunpack.c.0.s8 %v2311
    %v2313 = vlaneseq
    %v2314 = vshrl.u32 %v2313, 7
    %v2315 = vsub.s32 %v2312, %v2314
    %v2316 = vrot.slane %v2308, %v2315
    %v2318 = vunpack.c.l.s4 1983009808
    %v2319 = vunpack.c.0.s8 %v2318
    %v2320 = vlaneseq
    %v2321 = vshrl.u32 %v2320, 7
    %v2322 = vsub.s32 %v2319, %v2321
    %v2323 = vrot.slane %v2309, %v2322
    %v2324 = vcombine.low %v1109, %v1173
    %v2325 = vcombine.high %v1109, %v1173
    %v2327 = vunpack.c.l.s4 1983009808
    %v2328 = vunpack.c.0.s8 %v2327
    %v2329 = vlaneseq
    %v2330 = vshrl.u32 %v2329, 7
    %v2331 = vsub.s32 %v2328, %v2330
    %v2332 = vrot.slane %v2324, %v2331
    %v2334 = vunpack.c.l.s4 1983009808
    %v2335 = vunpack.c.0.s8 %v2334
    %v2336 = vlaneseq
    %v2337 = vshrl.u32 %v2336, 7
    %v2338 = vsub.s32 %v2335, %v2337
    %v2339 = vrot.slane %v2325, %v2338
    %v2340 = vcombine.low %v1141, %v1205
    %v2341 = vcombine.high %v1141, %v1205
    %v2343 = vunpack.c.l.s4 1983009808
    %v2344 = vunpack.c.0.s8 %v2343
    %v2345 = vlaneseq
    %v2346 = vshrl.u32 %v2345, 7
    %v2347 = vsub.s32 %v2344, %v2346
    %v2348 = vrot.slane %v2340, %v2347
    %v2350 = vunpack.c.l.s4 1983009808
    %v2351 = vunpack.c.0.s8 %v2350
    %v2352 = vlaneseq
    %v2353 = vshrl.u32 %v2352, 7
    %v2354 = vsub.s32 %v2351, %v2353
    %v2355 = vrot.slane %v2341, %v2354
    %v2356 = vcombine.low %v2300, %v2316
    %v2357 = vcombine.high %v2300, %v2316
    %v2359 = vunpack.c.l.s4 1934713408
    %v2360 = vunpack.c.0.s8 %v2359
    %v2361 = vlaneseq
    %v2362 = vshrl.u32 %v2361, 7
    %v2363 = vsub.s32 %v2360, %v2362
    %v2364 = vrot.slane %v2356, %v2363
    %v2366 = vunpack.c.l.s4 1934713408
    %v2367 = vunpack.c.0.s8 %v2366
    %v2368 = vlaneseq
    %v2369 = vshrl.u32 %v2368, 7
    %v2370 = vsub.s32 %v2367, %v2369
    %v2371 = vrot.slane %v2357, %v2370
    %v2372 = vcombine.low %v2307, %v2323
    %v2373 = vcombine.high %v2307, %v2323
    %v2375 = vunpack.c.l.s4 1934713408
    %v2376 = vunpack.c.0.s8 %v2375
    %v2377 = vlaneseq
    %v2378 = vshrl.u32 %v2377, 7
    %v2379 = vsub.s32 %v2376, %v2378
    %v2380 = vrot.slane %v2372, %v2379
    %v2382 = vunpack.c.l.s4 1934713408
    %v2383 = vunpack.c.0.s8 %v2382
    %v2384 = vlaneseq
    %v2385 = vshrl.u32 %v2384, 7
    %v2386 = vsub.s32 %v2383, %v2385
    %v2387 = vrot.slane %v2373, %v2386
    %v2388 = vcombine.low %v2332, %v2348
    %v2389 = vcombine.high %v2332, %v2348
    %v2391 = vunpack.c.l.s4 1934713408
    %v2392 = vunpack.c.0.s8 %v2391
    %v2393 = vlaneseq
    %v2394 = vshrl.u32 %v2393, 7
    %v2395 = vsub.s32 %v2392, %v2394
    %v2396 = vrot.slane %v2388, %v2395
    %v2398 = vunpack.c.l.s4 1934713408
    %v2399 = vunpack.c.0.s8 %v2398
    %v2400 = vlaneseq
    %v2401 = vshrl.u32 %v2400, 7
    %v2402 = vsub.s32 %v2399, %v2401
    %v2403 = vrot.slane %v2389, %v2402
    %v2404 = vcombine.low %v2339, %v2355
    %v2405 = vcombine.high %v2339, %v2355
    %v2407 = vunpack.c.l.s4 1934713408
    %v2408 = vunpack.c.0.s8 %v2407
    %v2409 = vlaneseq
    %v2410 = vshrl.u32 %v2409, 7
    %v2411 = vsub.s32 %v2408, %v2410
    %v2412 = vrot.slane %v2404, %v2411
    %v2414 = vunpack.c.l.s4 1934713408
    %v2415 = vunpack.c.0.s8 %v2414
    %v2416 = vlaneseq
    %v2417 = vshrl.u32 %v2416, 7
    %v2418 = vsub.s32 %v2415, %v2417
    %v2419 = vrot.slane %v2405, %v2418
    %v2420 = vcombine.low %v2364, %v2396
    %v2421 = vcombine.high %v2364, %v2396
    %v2422 = vcombine.low %v2371, %v2403
    %v2423 = vcombine.high %v2371, %v2403
    %v2424 = vcombine.low %v2380, %v2412
    %v2425 = vcombine.high %v2380, %v2412
    %v2426 = vcombine.low %v2387, %v2419
    %v2427 = vcombine.high %v2387, %v2419
    %v2428 = vcombine.low %v1237, %v1301
    %v2429 = vcombine.high %v1237, %v1301
    %v2431 = vunpack.c.l.s4 1983009808
    %v2432 = vunpack.c.0.s8 %v2431
    %v2433 = vlaneseq
    %v2434 = vshrl.u32 %v2433, 7
    %v2435 = vsub.s32 %v2432, %v2434
    %v2436 = vrot.slane %v2428, %v2435
    %v2438 = vunpack.c.l.s4 1983009808
    %v2439 = vunpack.c.0.s8 %v2438
    %v2440 = vlaneseq
    %v2441 = vshrl.u32 %v2440, 7
    %v2442 = vsub.s32 %v2439, %v2441
    %v2443 = vrot.slane %v2429, %v2442
    %v2444 = vcombine.low %v1269, %v1333
    %v2445 = vcombine.high %v1269, %v1333
    %v2447 = vunpack.c.l.s4 1983009808
    %v2448 = vunpack.c.0.s8 %v2447
    %v2449 = vlaneseq
    %v2450 = vshrl.u32 %v2449, 7
    %v2451 = vsub.s32 %v2448, %v2450
    %v2452 = vrot.slane %v2444, %v2451
    %v2454 = vunpack.c.l.s4 1983009808
    %v2455 = vunpack.c.0.s8 %v2454
    %v2456 = vlaneseq
    %v2457 = vshrl.u32 %v2456, 7
    %v2458 = vsub.s32 %v2455, %v2457
    %v2459 = vrot.slane %v2445, %v2458
    %v2460 = vcombine.low %v1365, %v1429
    %v2461 = vcombine.high %v1365, %v1429
    %v2463 = vunpack.c.l.s4 1983009808
    %v2464 = vunpack.c.0.s8 %v2463
    %v2465 = vlaneseq
    %v2466 = vshrl.u32 %v2465, 7
    %v2467 = vsub.s32 %v2464, %v2466
    %v2468 = vrot.slane %v2460, %v2467
    %v2470 = vunpack.c.l.s4 1983009808
    %v2471 = vunpack.c.0.s8 %v2470
    %v2472 = vlaneseq
    %v2473 = vshrl.u32 %v2472, 7
    %v2474 = vsub.s32 %v2471, %v2473
    %v2475 = vrot.slane %v2461, %v2474
    %v2476 = vcombine.low %v1397, %v1461
    %v2477 = vcombine.high %v1397, %v1461
    %v2479 = vunpack.c.l.s4 1983009808
    %v2480 = vunpack.c.0.s8 %v2479
    %v2481 = vlaneseq
    %v2482 = vshrl.u32 %v2481, 7
    %v2483 = vsub.s32 %v2480, %v2482
    %v2484 = vrot.slane %v2476, %v2483
    %v2486 = vunpack.c.l.s4 1983009808
    %v2487 = vunpack.c.0.s8 %v2486
    %v2488 = vlaneseq
    %v2489 = vshrl.u32 %v2488, 7
    %v2490 = vsub.s32 %v2487, %v2489
    %v2491 = vrot.slane %v2477, %v2490
    %v2492 = vcombine.low %v2436, %v2452
    %v2493 = vcombine.high %v2436, %v2452
    %v2495 = vunpack.c.l.s4 1934713408
    %v2496 = vunpack.c.0.s8 %v2495
    %v2497 = vlaneseq
    %v2498 = vshrl.u32 %v2497, 7
    %v2499 = vsub.s32 %v2496, %v2498
    %v2500 = vrot.slane %v2492, %v2499
    %v2502 = vunpack.c.l.s4 1934713408
    %v2503 = vunpack.c.0.s8 %v2502
    %v2504 = vlaneseq
    %v2505 = vshrl.u32 %v2504, 7
    %v2506 = vsub.s32 %v2503, %v2505
    %v2507 = vrot.slane %v2493, %v2506
    %v2508 = vcombine.low %v2443, %v2459
    %v2509 = vcombine.high %v2443, %v2459
    %v2511 = vunpack.c.l.s4 1934713408
    %v2512 = vunpack.c.0.s8 %v2511
    %v2513 = vlaneseq
    %v2514 = vshrl.u32 %v2513, 7
    %v2515 = vsub.s32 %v2512, %v2514
    %v2516 = vrot.slane %v2508, %v2515
    %v2518 = vunpack.c.l.s4 1934713408
    %v2519 = vunpack.c.0.s8 %v2518
    %v2520 = vlaneseq
    %v2521 = vshrl.u32 %v2520, 7
    %v2522 = vsub.s32 %v2519, %v2521
    %v2523 = vrot.slane %v2509, %v2522
    %v2524 = vcombine.low %v2468, %v2484
    %v2525 = vcombine.high %v2468, %v2484
    %v2527 = vunpack.c.l.s4 1934713408
    %v2528 = vunpack.c.0.s8 %v2527
    %v2529 = vlaneseq
    %v2530 = vshrl.u32 %v2529, 7
    %v2531 = vsub.s32 %v2528, %v2530
    %v2532 = vrot.slane %v2524, %v2531
    %v2534 = vunpack.c.l.s4 1934713408
    %v2535 = vunpack.c.0.s8 %v2534
    %v2536 = vlaneseq
    %v2537 = vshrl.u32 %v2536, 7
    %v2538 = vsub.s32 %v2535, %v2537
    %v2539 = vrot.slane %v2525, %v2538
    %v2540 = vcombine.low %v2475, %v2491
    %v2541 = vcombine.high %v2475, %v2491
    %v2543 = vunpack.c.l.s4 1934713408
    %v2544 = vunpack.c.0.s8 %v2543
    %v2545 = vlaneseq
    %v2546 = vshrl.u32 %v2545, 7
    %v2547 = vsub.s32 %v2544, %v2546
    %v2548 = vrot.slane %v2540, %v2547
    %v2550 = vunpack.c.l.s4 1934713408
    %v2551 = vunpack.c.0.s8 %v2550
    %v2552 = vlaneseq
    %v2553 = vshrl.u32 %v2552, 7
    %v2554 = vsub.s32 %v2551, %v2553
    %v2555 = vrot.slane %v2541, %v2554
    %v2556 = vcombine.low %v2500, %v2532
    %v2557 = vcombine.high %v2500, %v2532
    %v2558 = vcombine.low %v2507, %v2539
    %v2559 = vcombine.high %v2507, %v2539
    %v2560 = vcombine.low %v2516, %v2548
    %v2561 = vcombine.high %v2516, %v2548
    %v2562 = vcombine.low %v2523, %v2555
    %v2563 = vcombine.high %v2523, %v2555
    %2564 = vxpose.xlu0.b32.start [1/16] %v60, 128
    %2565 = vxpose.xlu0.b32.cont [2/16] %v61, 128
    %2566 = vxpose.xlu0.b32.cont [3/16] %v62, 128
    %2567 = vxpose.xlu0.b32.cont [4/16] %v63, 128
    %2568 = vxpose.xlu0.b32.cont [5/16] 0.0, 128
    %2569 = vxpose.xlu0.b32.cont [6/16] 0.0, 128
    %2570 = vxpose.xlu0.b32.cont [7/16] 0.0, 128
    %2571 = vxpose.xlu0.b32.cont [8/16] 0.0, 128
    %2572 = vxpose.xlu0.b32.cont [9/16] 0.0, 128
    %2573 = vxpose.xlu0.b32.cont [10/16] 0.0, 128
    %2574 = vxpose.xlu0.b32.cont [11/16] 0.0, 128
    %2575 = vxpose.xlu0.b32.cont [12/16] 0.0, 128
    %2576 = vxpose.xlu0.b32.cont [13/16] 0.0, 128
    %2577 = vxpose.xlu0.b32.cont [14/16] 0.0, 128
    %2578 = vxpose.xlu0.b32.cont [15/16] 0.0, 128
    %2579 = vxpose.xlu0.b32.end [16/16] 0.0, 128
    %v2580 = vpop.trf.xlu0
    %v2581 = vpop.trf.xlu0
    %v2582 = vpop.trf.xlu0
    %v2583 = vpop.trf.xlu0
    %v2584 = vpop.trf.xlu0
    %v2585 = vpop.trf.xlu0
    %v2586 = vpop.trf.xlu0
    %v2587 = vpop.trf.xlu0
    %v2588 = vpop.trf.xlu0
    %v2589 = vpop.trf.xlu0
    %v2590 = vpop.trf.xlu0
    %v2591 = vpop.trf.xlu0
    %v2592 = vpop.trf.xlu0
    %v2593 = vpop.trf.xlu0
    %v2594 = vpop.trf.xlu0
    %v2595 = vpop.trf.xlu0
    %vm2596 = vcmask 261120
    %v2598 = vsel %vm2596, %v2580, 0
    %v2601 = vsel %vm2596, %v2581, 0
    %v2604 = vsel %vm2596, %v2582, 0
    %v2607 = vsel %vm2596, %v2583, 0
    %2609 = vmatprep.subr.mxu0 0.0
    %2610 = vmatpush1.msra.mxu0 %v1604
    %2611 = vmatprep.subr.mxu0 0.0
    %2612 = vmatpush1.msra.mxu0 %v1740
    %2613 = vmatprep.subr.mxu0 0.0
    %2614 = vmatpush1.msra.mxu0 %v1876
    %2615 = vmatprep.subr.mxu0 0.0
    %2616 = vmatpush1.msra.mxu0 %v2012
    %2617 = vmatprep.subr.mxu0 0.0
    %2618 = vmatpush1.msra.mxu0 0.0
    %2619 = vmatprep.subr.mxu0 0.0
    %2620 = vmatpush1.msra.mxu0 0.0
    %2621 = vmatprep.subr.mxu0 0.0
    %2622 = vmatpush1.msra.mxu0 0.0
    %2623 = vmatprep.subr.mxu0 0.0
    %2624 = vmatpush1.msra.mxu0 0.0
    %2625 = vmatprep.subr.mxu0 0.0
    %2626 = vmatpush1.msra.mxu0 0.0
    %2627 = vmatprep.subr.mxu0 0.0
    %2628 = vmatpush1.msra.mxu0 0.0
    %2629 = vmatprep.subr.mxu0 0.0
    %2630 = vmatpush1.msra.mxu0 0.0
    %2631 = vmatprep.subr.mxu0 0.0
    %2632 = vmatpush1.msra.mxu0 0.0
    %2633 = vmatprep.subr.mxu0 0.0
    %2634 = vmatpush1.msra.mxu0 0.0
    %2635 = vmatprep.subr.mxu0 0.0
    %2636 = vmatpush1.msra.mxu0 0.0
    %2637 = vmatprep.subr.mxu0 0.0
    %2638 = vmatpush1.msra.mxu0 0.0
    %2639 = vmatprep.subr.mxu0 0.0
    %2640 = vmatpush1.msra.mxu0 0.0
    %2641 = vmatprep.subr.mxu0 0.0
    %2642 = vmatpush1.msra.mxu0 0.0
    %2643 = vmatprep.subr.mxu0 0.0
    %2644 = vmatpush1.msra.mxu0 0.0
    %2645 = vmatprep.subr.mxu0 0.0
    %2646 = vmatpush1.msra.mxu0 0.0
    %2647 = vmatprep.subr.mxu0 0.0
    %2648 = vmatpush1.msra.mxu0 0.0
    %2649 = vmatprep.subr.mxu0 0.0
    %2650 = vmatpush1.msra.mxu0 0.0
    %2651 = vmatprep.subr.mxu0 0.0
    %2652 = vmatpush1.msra.mxu0 0.0
    %2653 = vmatprep.subr.mxu0 0.0
    %2654 = vmatpush1.msra.mxu0 0.0
    %2655 = vmatprep.subr.mxu0 0.0
    %2656 = vmatpush1.msra.mxu0 0.0
    %2657 = vmatprep.subr.mxu0 0.0
    %2658 = vmatpush1.msra.mxu0 0.0
    %2659 = vmatprep.subr.mxu0 0.0
    %2660 = vmatpush1.msra.mxu0 0.0
    %2661 = vmatprep.subr.mxu0 0.0
    %2662 = vmatpush1.msra.mxu0 0.0
    %2663 = vmatprep.subr.mxu0 0.0
    %2664 = vmatpush1.msra.mxu0 0.0
    %2665 = vmatprep.subr.mxu0 0.0
    %2666 = vmatpush1.msra.mxu0 0.0
    %2667 = vmatprep.subr.mxu0 0.0
    %2668 = vmatpush1.msra.mxu0 0.0
    %2669 = vmatprep.subr.mxu0 0.0
    %2670 = vmatpush1.msra.mxu0 0.0
    %2671 = vmatprep.subr.mxu0 0.0
    %2672 = vmatpush1.msra.mxu0 0.0
    %2673 = vmatprep.mubr.f32.mxu0 0.0
    %2674 = vmatmul.mubr.f32.gmra.mrb[0].mxu0 %v2598
    %v2675 = vpop.f32.mrb[0].mxu0
    %v2676 = vadd.f32 0.0, %v2675
    %v2677 = vpop.f32.mrb[0].mxu0
    %2678 = vmatprep.mubr.f32.mxu0 0.0
    %2679 = vmatmul.mubr.f32.gmra.mrb[0].mxu0 %v2601
    %v2680 = vpop.f32.mrb[0].mxu0
    %v2681 = vadd.f32 0.0, %v2680
    %v2682 = vpop.f32.mrb[0].mxu0
    %2683 = vmatprep.mubr.f32.mxu0 0.0
    %2684 = vmatmul.mubr.f32.gmra.mrb[0].mxu0 %v2604
    %v2685 = vpop.f32.mrb[0].mxu0
    %v2686 = vadd.f32 0.0, %v2685
    %v2687 = vpop.f32.mrb[0].mxu0
    %2688 = vmatprep.mubr.f32.mxu0 0.0
    %2689 = vmatmul.mubr.f32.gmra.mrb[0].mxu0 %v2607
    %v2690 = vpop.f32.mrb[0].mxu0
    %v2691 = vadd.f32 0.0, %v2690
    %v2692 = vpop.f32.mrb[0].mxu0
    %2693 = vdwg.mxu0
    %2694 = vxpose.xlu0.b32.start [1/16] %v64, 128
    %2695 = vxpose.xlu0.b32.cont [2/16] %v65, 128
    %2696 = vxpose.xlu0.b32.cont [3/16] %v66, 128
    %2697 = vxpose.xlu0.b32.cont [4/16] %v67, 128
    %2698 = vxpose.xlu0.b32.cont [5/16] 0.0, 128
    %2699 = vxpose.xlu0.b32.cont [6/16] 0.0, 128
    %2700 = vxpose.xlu0.b32.cont [7/16] 0.0, 128
    %2701 = vxpose.xlu0.b32.cont [8/16] 0.0, 128
    %2702 = vxpose.xlu0.b32.cont [9/16] 0.0, 128
    %2703 = vxpose.xlu0.b32.cont [10/16] 0.0, 128
    %2704 = vxpose.xlu0.b32.cont [11/16] 0.0, 128
    %2705 = vxpose.xlu0.b32.cont [12/16] 0.0, 128
    %2706 = vxpose.xlu0.b32.cont [13/16] 0.0, 128
    %2707 = vxpose.xlu0.b32.cont [14/16] 0.0, 128
    %2708 = vxpose.xlu0.b32.cont [15/16] 0.0, 128
    %2709 = vxpose.xlu0.b32.end [16/16] 0.0, 128
    %v2710 = vpop.trf.xlu0
    %v2711 = vpop.trf.xlu0
    %v2712 = vpop.trf.xlu0
    %v2713 = vpop.trf.xlu0
    %v2714 = vpop.trf.xlu0
    %v2715 = vpop.trf.xlu0
    %v2716 = vpop.trf.xlu0
    %v2717 = vpop.trf.xlu0
    %v2718 = vpop.trf.xlu0
    %v2719 = vpop.trf.xlu0
    %v2720 = vpop.trf.xlu0
    %v2721 = vpop.trf.xlu0
    %v2722 = vpop.trf.xlu0
    %v2723 = vpop.trf.xlu0
    %v2724 = vpop.trf.xlu0
    %v2725 = vpop.trf.xlu0
    %v2727 = vsel %vm2596, %v2710, 0
    %v2730 = vsel %vm2596, %v2711, 0
    %v2733 = vsel %vm2596, %v2712, 0
    %v2736 = vsel %vm2596, %v2713, 0
    %2738 = vmatprep.subr.mxu0 0.0
    %2739 = vmatpush1.msra.mxu0 %v1605
    %2740 = vmatprep.subr.mxu0 0.0
    %2741 = vmatpush1.msra.mxu0 %v1741
    %2742 = vmatprep.subr.mxu0 0.0
    %2743 = vmatpush1.msra.mxu0 %v1877
    %2744 = vmatprep.subr.mxu0 0.0
    %2745 = vmatpush1.msra.mxu0 %v2013
    %2746 = vmatprep.subr.mxu0 0.0
    %2747 = vmatpush1.msra.mxu0 0.0
    %2748 = vmatprep.subr.mxu0 0.0
    %2749 = vmatpush1.msra.mxu0 0.0
    %2750 = vmatprep.subr.mxu0 0.0
    %2751 = vmatpush1.msra.mxu0 0.0
    %2752 = vmatprep.subr.mxu0 0.0
    %2753 = vmatpush1.msra.mxu0 0.0
    %2754 = vmatprep.subr.mxu0 0.0
    %2755 = vmatpush1.msra.mxu0 0.0
    %2756 = vmatprep.subr.mxu0 0.0
    %2757 = vmatpush1.msra.mxu0 0.0
    %2758 = vmatprep.subr.mxu0 0.0
    %2759 = vmatpush1.msra.mxu0 0.0
    %2760 = vmatprep.subr.mxu0 0.0
    %2761 = vmatpush1.msra.mxu0 0.0
    %2762 = vmatprep.subr.mxu0 0.0
    %2763 = vmatpush1.msra.mxu0 0.0
    %2764 = vmatprep.subr.mxu0 0.0
    %2765 = vmatpush1.msra.mxu0 0.0
    %2766 = vmatprep.subr.mxu0 0.0
    %2767 = vmatpush1.msra.mxu0 0.0
    %2768 = vmatprep.subr.mxu0 0.0
    %2769 = vmatpush1.msra.mxu0 0.0
    %2770 = vmatprep.subr.mxu0 0.0
    %2771 = vmatpush1.msra.mxu0 0.0
    %2772 = vmatprep.subr.mxu0 0.0
    %2773 = vmatpush1.msra.mxu0 0.0
    %2774 = vmatprep.subr.mxu0 0.0
    %2775 = vmatpush1.msra.mxu0 0.0
    %2776 = vmatprep.subr.mxu0 0.0
    %2777 = vmatpush1.msra.mxu0 0.0
    %2778 = vmatprep.subr.mxu0 0.0
    %2779 = vmatpush1.msra.mxu0 0.0
    %2780 = vmatprep.subr.mxu0 0.0
    %2781 = vmatpush1.msra.mxu0 0.0
    %2782 = vmatprep.subr.mxu0 0.0
    %2783 = vmatpush1.msra.mxu0 0.0
    %2784 = vmatprep.subr.mxu0 0.0
    %2785 = vmatpush1.msra.mxu0 0.0
    %2786 = vmatprep.subr.mxu0 0.0
    %2787 = vmatpush1.msra.mxu0 0.0
    %2788 = vmatprep.subr.mxu0 0.0
    %2789 = vmatpush1.msra.mxu0 0.0
    %2790 = vmatprep.subr.mxu0 0.0
    %2791 = vmatpush1.msra.mxu0 0.0
    %2792 = vmatprep.subr.mxu0 0.0
    %2793 = vmatpush1.msra.mxu0 0.0
    %2794 = vmatprep.subr.mxu0 0.0
    %2795 = vmatpush1.msra.mxu0 0.0
    %2796 = vmatprep.subr.mxu0 0.0
    %2797 = vmatpush1.msra.mxu0 0.0
    %2798 = vmatprep.subr.mxu0 0.0
    %2799 = vmatpush1.msra.mxu0 0.0
    %2800 = vmatprep.subr.mxu0 0.0
    %2801 = vmatpush1.msra.mxu0 0.0
    %2802 = vmatprep.mubr.f32.mxu0 0.0
    %2803 = vmatmul.mubr.f32.gmra.mrb[0].mxu0 %v2727
    %v2804 = vpop.f32.mrb[0].mxu0
    %v2805 = vadd.f32 0.0, %v2804
    %v2806 = vpop.f32.mrb[0].mxu0
    %2807 = vmatprep.mubr.f32.mxu0 0.0
    %2808 = vmatmul.mubr.f32.gmra.mrb[0].mxu0 %v2730
    %v2809 = vpop.f32.mrb[0].mxu0
    %v2810 = vadd.f32 0.0, %v2809
    %v2811 = vpop.f32.mrb[0].mxu0
    %2812 = vmatprep.mubr.f32.mxu0 0.0
    %2813 = vmatmul.mubr.f32.gmra.mrb[0].mxu0 %v2733
    %v2814 = vpop.f32.mrb[0].mxu0
    %v2815 = vadd.f32 0.0, %v2814
    %v2816 = vpop.f32.mrb[0].mxu0
    %2817 = vmatprep.mubr.f32.mxu0 0.0
    %2818 = vmatmul.mubr.f32.gmra.mrb[0].mxu0 %v2736
    %v2819 = vpop.f32.mrb[0].mxu0
    %v2820 = vadd.f32 0.0, %v2819
    %v2821 = vpop.f32.mrb[0].mxu0
    %2822 = vdwg.mxu0
    %2823 = vxpose.xlu0.b32.start [1/16] %v68, 128
    %2824 = vxpose.xlu0.b32.cont [2/16] %v69, 128
    %2825 = vxpose.xlu0.b32.cont [3/16] %v70, 128
    %2826 = vxpose.xlu0.b32.cont [4/16] %v71, 128
    %2827 = vxpose.xlu0.b32.cont [5/16] 0.0, 128
    %2828 = vxpose.xlu0.b32.cont [6/16] 0.0, 128
    %2829 = vxpose.xlu0.b32.cont [7/16] 0.0, 128
    %2830 = vxpose.xlu0.b32.cont [8/16] 0.0, 128
    %2831 = vxpose.xlu0.b32.cont [9/16] 0.0, 128
    %2832 = vxpose.xlu0.b32.cont [10/16] 0.0, 128
    %2833 = vxpose.xlu0.b32.cont [11/16] 0.0, 128
    %2834 = vxpose.xlu0.b32.cont [12/16] 0.0, 128
    %2835 = vxpose.xlu0.b32.cont [13/16] 0.0, 128
    %2836 = vxpose.xlu0.b32.cont [14/16] 0.0, 128
    %2837 = vxpose.xlu0.b32.cont [15/16] 0.0, 128
    %2838 = vxpose.xlu0.b32.end [16/16] 0.0, 128
    %v2839 = vpop.trf.xlu0
    %v2840 = vpop.trf.xlu0
    %v2841 = vpop.trf.xlu0
    %v2842 = vpop.trf.xlu0
    %v2843 = vpop.trf.xlu0
    %v2844 = vpop.trf.xlu0
    %v2845 = vpop.trf.xlu0
    %v2846 = vpop.trf.xlu0
    %v2847 = vpop.trf.xlu0
    %v2848 = vpop.trf.xlu0
    %v2849 = vpop.trf.xlu0
    %v2850 = vpop.trf.xlu0
    %v2851 = vpop.trf.xlu0
    %v2852 = vpop.trf.xlu0
    %v2853 = vpop.trf.xlu0
    %v2854 = vpop.trf.xlu0
    %v2856 = vsel %vm2596, %v2839, 0
    %v2859 = vsel %vm2596, %v2840, 0
    %v2862 = vsel %vm2596, %v2841, 0
    %v2865 = vsel %vm2596, %v2842, 0
    %2867 = vmatprep.subr.mxu0 0.0
    %2868 = vmatpush1.msra.mxu0 %v1606
    %2869 = vmatprep.subr.mxu0 0.0
    %2870 = vmatpush1.msra.mxu0 %v1742
    %2871 = vmatprep.subr.mxu0 0.0
    %2872 = vmatpush1.msra.mxu0 %v1878
    %2873 = vmatprep.subr.mxu0 0.0
    %2874 = vmatpush1.msra.mxu0 %v2014
    %2875 = vmatprep.subr.mxu0 0.0
    %2876 = vmatpush1.msra.mxu0 0.0
    %2877 = vmatprep.subr.mxu0 0.0
    %2878 = vmatpush1.msra.mxu0 0.0
    %2879 = vmatprep.subr.mxu0 0.0
    %2880 = vmatpush1.msra.mxu0 0.0
    %2881 = vmatprep.subr.mxu0 0.0
    %2882 = vmatpush1.msra.mxu0 0.0
    %2883 = vmatprep.subr.mxu0 0.0
    %2884 = vmatpush1.msra.mxu0 0.0
    %2885 = vmatprep.subr.mxu0 0.0
    %2886 = vmatpush1.msra.mxu0 0.0
    %2887 = vmatprep.subr.mxu0 0.0
    %2888 = vmatpush1.msra.mxu0 0.0
    %2889 = vmatprep.subr.mxu0 0.0
    %2890 = vmatpush1.msra.mxu0 0.0
    %2891 = vmatprep.subr.mxu0 0.0
    %2892 = vmatpush1.msra.mxu0 0.0
    %2893 = vmatprep.subr.mxu0 0.0
    %2894 = vmatpush1.msra.mxu0 0.0
    %2895 = vmatprep.subr.mxu0 0.0
    %2896 = vmatpush1.msra.mxu0 0.0
    %2897 = vmatprep.subr.mxu0 0.0
    %2898 = vmatpush1.msra.mxu0 0.0
    %2899 = vmatprep.subr.mxu0 0.0
    %2900 = vmatpush1.msra.mxu0 0.0
    %2901 = vmatprep.subr.mxu0 0.0
    %2902 = vmatpush1.msra.mxu0 0.0
    %2903 = vmatprep.subr.mxu0 0.0
    %2904 = vmatpush1.msra.mxu0 0.0
    %2905 = vmatprep.subr.mxu0 0.0
    %2906 = vmatpush1.msra.mxu0 0.0
    %2907 = vmatprep.subr.mxu0 0.0
    %2908 = vmatpush1.msra.mxu0 0.0
    %2909 = vmatprep.subr.mxu0 0.0
    %2910 = vmatpush1.msra.mxu0 0.0
    %2911 = vmatprep.subr.mxu0 0.0
    %2912 = vmatpush1.msra.mxu0 0.0
    %2913 = vmatprep.subr.mxu0 0.0
    %2914 = vmatpush1.msra.mxu0 0.0
    %2915 = vmatprep.subr.mxu0 0.0
    %2916 = vmatpush1.msra.mxu0 0.0
    %2917 = vmatprep.subr.mxu0 0.0
    %2918 = vmatpush1.msra.mxu0 0.0
    %2919 = vmatprep.subr.mxu0 0.0
    %2920 = vmatpush1.msra.mxu0 0.0
    %2921 = vmatprep.subr.mxu0 0.0
    %2922 = vmatpush1.msra.mxu0 0.0
    %2923 = vmatprep.subr.mxu0 0.0
    %2924 = vmatpush1.msra.mxu0 0.0
    %2925 = vmatprep.subr.mxu0 0.0
    %2926 = vmatpush1.msra.mxu0 0.0
    %2927 = vmatprep.subr.mxu0 0.0
    %2928 = vmatpush1.msra.mxu0 0.0
    %2929 = vmatprep.subr.mxu0 0.0
    %2930 = vmatpush1.msra.mxu0 0.0
    %2931 = vmatprep.mubr.f32.mxu0 0.0
    %2932 = vmatmul.mubr.f32.gmra.mrb[0].mxu0 %v2856
    %v2933 = vpop.f32.mrb[0].mxu0
    %v2934 = vadd.f32 0.0, %v2933
    %v2935 = vpop.f32.mrb[0].mxu0
    %2936 = vmatprep.mubr.f32.mxu0 0.0
    %2937 = vmatmul.mubr.f32.gmra.mrb[0].mxu0 %v2859
    %v2938 = vpop.f32.mrb[0].mxu0
    %v2939 = vadd.f32 0.0, %v2938
    %v2940 = vpop.f32.mrb[0].mxu0
    %2941 = vmatprep.mubr.f32.mxu0 0.0
    %2942 = vmatmul.mubr.f32.gmra.mrb[0].mxu0 %v2862
    %v2943 = vpop.f32.mrb[0].mxu0
    %v2944 = vadd.f32 0.0, %v2943
    %v2945 = vpop.f32.mrb[0].mxu0
    %2946 = vmatprep.mubr.f32.mxu0 0.0
    %2947 = vmatmul.mubr.f32.gmra.mrb[0].mxu0 %v2865
    %v2948 = vpop.f32.mrb[0].mxu0
    %v2949 = vadd.f32 0.0, %v2948
    %v2950 = vpop.f32.mrb[0].mxu0
    %2951 = vdwg.mxu0
    %2952 = vxpose.xlu0.b32.start [1/16] %v72, 128
    %2953 = vxpose.xlu0.b32.cont [2/16] %v73, 128
    %2954 = vxpose.xlu0.b32.cont [3/16] %v74, 128
    %2955 = vxpose.xlu0.b32.cont [4/16] %v75, 128
    %2956 = vxpose.xlu0.b32.cont [5/16] 0.0, 128
    %2957 = vxpose.xlu0.b32.cont [6/16] 0.0, 128
    %2958 = vxpose.xlu0.b32.cont [7/16] 0.0, 128
    %2959 = vxpose.xlu0.b32.cont [8/16] 0.0, 128
    %2960 = vxpose.xlu0.b32.cont [9/16] 0.0, 128
    %2961 = vxpose.xlu0.b32.cont [10/16] 0.0, 128
    %2962 = vxpose.xlu0.b32.cont [11/16] 0.0, 128
    %2963 = vxpose.xlu0.b32.cont [12/16] 0.0, 128
    %2964 = vxpose.xlu0.b32.cont [13/16] 0.0, 128
    %2965 = vxpose.xlu0.b32.cont [14/16] 0.0, 128
    %2966 = vxpose.xlu0.b32.cont [15/16] 0.0, 128
    %2967 = vxpose.xlu0.b32.end [16/16] 0.0, 128
    %v2968 = vpop.trf.xlu0
    %v2969 = vpop.trf.xlu0
    %v2970 = vpop.trf.xlu0
    %v2971 = vpop.trf.xlu0
    %v2972 = vpop.trf.xlu0
    %v2973 = vpop.trf.xlu0
    %v2974 = vpop.trf.xlu0
    %v2975 = vpop.trf.xlu0
    %v2976 = vpop.trf.xlu0
    %v2977 = vpop.trf.xlu0
    %v2978 = vpop.trf.xlu0
    %v2979 = vpop.trf.xlu0
    %v2980 = vpop.trf.xlu0
    %v2981 = vpop.trf.xlu0
    %v2982 = vpop.trf.xlu0
    %v2983 = vpop.trf.xlu0
    %v2985 = vsel %vm2596, %v2968, 0
    %v2988 = vsel %vm2596, %v2969, 0
    %v2991 = vsel %vm2596, %v2970, 0
    %v2994 = vsel %vm2596, %v2971, 0
    %2996 = vmatprep.subr.mxu0 0.0
    %2997 = vmatpush1.msra.mxu0 %v1607
    %2998 = vmatprep.subr.mxu0 0.0
    %2999 = vmatpush1.msra.mxu0 %v1743
    %3000 = vmatprep.subr.mxu0 0.0
    %3001 = vmatpush1.msra.mxu0 %v1879
    %3002 = vmatprep.subr.mxu0 0.0
    %3003 = vmatpush1.msra.mxu0 %v2015
    %3004 = vmatprep.subr.mxu0 0.0
    %3005 = vmatpush1.msra.mxu0 0.0
    %3006 = vmatprep.subr.mxu0 0.0
    %3007 = vmatpush1.msra.mxu0 0.0
    %3008 = vmatprep.subr.mxu0 0.0
    %3009 = vmatpush1.msra.mxu0 0.0
    %3010 = vmatprep.subr.mxu0 0.0
    %3011 = vmatpush1.msra.mxu0 0.0
    %3012 = vmatprep.subr.mxu0 0.0
    %3013 = vmatpush1.msra.mxu0 0.0
    %3014 = vmatprep.subr.mxu0 0.0
    %3015 = vmatpush1.msra.mxu0 0.0
    %3016 = vmatprep.subr.mxu0 0.0
    %3017 = vmatpush1.msra.mxu0 0.0
    %3018 = vmatprep.subr.mxu0 0.0
    %3019 = vmatpush1.msra.mxu0 0.0
    %3020 = vmatprep.subr.mxu0 0.0
    %3021 = vmatpush1.msra.mxu0 0.0
    %3022 = vmatprep.subr.mxu0 0.0
    %3023 = vmatpush1.msra.mxu0 0.0
    %3024 = vmatprep.subr.mxu0 0.0
    %3025 = vmatpush1.msra.mxu0 0.0
    %3026 = vmatprep.subr.mxu0 0.0
    %3027 = vmatpush1.msra.mxu0 0.0
    %3028 = vmatprep.subr.mxu0 0.0
    %3029 = vmatpush1.msra.mxu0 0.0
    %3030 = vmatprep.subr.mxu0 0.0
    %3031 = vmatpush1.msra.mxu0 0.0
    %3032 = vmatprep.subr.mxu0 0.0
    %3033 = vmatpush1.msra.mxu0 0.0
    %3034 = vmatprep.subr.mxu0 0.0
    %3035 = vmatpush1.msra.mxu0 0.0
    %3036 = vmatprep.subr.mxu0 0.0
    %3037 = vmatpush1.msra.mxu0 0.0
    %3038 = vmatprep.subr.mxu0 0.0
    %3039 = vmatpush1.msra.mxu0 0.0
    %3040 = vmatprep.subr.mxu0 0.0
    %3041 = vmatpush1.msra.mxu0 0.0
    %3042 = vmatprep.subr.mxu0 0.0
    %3043 = vmatpush1.msra.mxu0 0.0
    %3044 = vmatprep.subr.mxu0 0.0
    %3045 = vmatpush1.msra.mxu0 0.0
    %3046 = vmatprep.subr.mxu0 0.0
    %3047 = vmatpush1.msra.mxu0 0.0
    %3048 = vmatprep.subr.mxu0 0.0
    %3049 = vmatpush1.msra.mxu0 0.0
    %3050 = vmatprep.subr.mxu0 0.0
    %3051 = vmatpush1.msra.mxu0 0.0
    %3052 = vmatprep.subr.mxu0 0.0
    %3053 = vmatpush1.msra.mxu0 0.0
    %3054 = vmatprep.subr.mxu0 0.0
    %3055 = vmatpush1.msra.mxu0 0.0
    %3056 = vmatprep.subr.mxu0 0.0
    %3057 = vmatpush1.msra.mxu0 0.0
    %3058 = vmatprep.subr.mxu0 0.0
    %3059 = vmatpush1.msra.mxu0 0.0
    %3060 = vmatprep.mubr.f32.mxu0 0.0
    %3061 = vmatmul.mubr.f32.gmra.mrb[0].mxu0 %v2985
    %v3062 = vpop.f32.mrb[0].mxu0
    %v3063 = vadd.f32 0.0, %v3062
    %v3064 = vpop.f32.mrb[0].mxu0
    %3065 = vmatprep.mubr.f32.mxu0 0.0
    %3066 = vmatmul.mubr.f32.gmra.mrb[0].mxu0 %v2988
    %v3067 = vpop.f32.mrb[0].mxu0
    %v3068 = vadd.f32 0.0, %v3067
    %v3069 = vpop.f32.mrb[0].mxu0
    %3070 = vmatprep.mubr.f32.mxu0 0.0
    %3071 = vmatmul.mubr.f32.gmra.mrb[0].mxu0 %v2991
    %v3072 = vpop.f32.mrb[0].mxu0
    %v3073 = vadd.f32 0.0, %v3072
    %v3074 = vpop.f32.mrb[0].mxu0
    %3075 = vmatprep.mubr.f32.mxu0 0.0
    %3076 = vmatmul.mubr.f32.gmra.mrb[0].mxu0 %v2994
    %v3077 = vpop.f32.mrb[0].mxu0
    %v3078 = vadd.f32 0.0, %v3077
    %v3079 = vpop.f32.mrb[0].mxu0
    %3080 = vdwg.mxu0
    %3081 = vxpose.xlu0.b32.start [1/16] %v76, 128
    %3082 = vxpose.xlu0.b32.cont [2/16] %v77, 128
    %3083 = vxpose.xlu0.b32.cont [3/16] %v78, 128
    %3084 = vxpose.xlu0.b32.cont [4/16] %v79, 128
    %3085 = vxpose.xlu0.b32.cont [5/16] 0.0, 128
    %3086 = vxpose.xlu0.b32.cont [6/16] 0.0, 128
    %3087 = vxpose.xlu0.b32.cont [7/16] 0.0, 128
    %3088 = vxpose.xlu0.b32.cont [8/16] 0.0, 128
    %3089 = vxpose.xlu0.b32.cont [9/16] 0.0, 128
    %3090 = vxpose.xlu0.b32.cont [10/16] 0.0, 128
    %3091 = vxpose.xlu0.b32.cont [11/16] 0.0, 128
    %3092 = vxpose.xlu0.b32.cont [12/16] 0.0, 128
    %3093 = vxpose.xlu0.b32.cont [13/16] 0.0, 128
    %3094 = vxpose.xlu0.b32.cont [14/16] 0.0, 128
    %3095 = vxpose.xlu0.b32.cont [15/16] 0.0, 128
    %3096 = vxpose.xlu0.b32.end [16/16] 0.0, 128
    %v3097 = vpop.trf.xlu0
    %v3098 = vpop.trf.xlu0
    %v3099 = vpop.trf.xlu0
    %v3100 = vpop.trf.xlu0
    %v3101 = vpop.trf.xlu0
    %v3102 = vpop.trf.xlu0
    %v3103 = vpop.trf.xlu0
    %v3104 = vpop.trf.xlu0
    %v3105 = vpop.trf.xlu0
    %v3106 = vpop.trf.xlu0
    %v3107 = vpop.trf.xlu0
    %v3108 = vpop.trf.xlu0
    %v3109 = vpop.trf.xlu0
    %v3110 = vpop.trf.xlu0
    %v3111 = vpop.trf.xlu0
    %v3112 = vpop.trf.xlu0
    %v3114 = vsel %vm2596, %v3097, 0
    %v3117 = vsel %vm2596, %v3098, 0
    %v3120 = vsel %vm2596, %v3099, 0
    %v3123 = vsel %vm2596, %v3100, 0
    %3125 = vmatprep.subr.mxu0 0.0
    %3126 = vmatpush1.msra.mxu0 %v1608
    %3127 = vmatprep.subr.mxu0 0.0
    %3128 = vmatpush1.msra.mxu0 %v1744
    %3129 = vmatprep.subr.mxu0 0.0
    %3130 = vmatpush1.msra.mxu0 %v1880
    %3131 = vmatprep.subr.mxu0 0.0
    %3132 = vmatpush1.msra.mxu0 %v2016
    %3133 = vmatprep.subr.mxu0 0.0
    %3134 = vmatpush1.msra.mxu0 0.0
    %3135 = vmatprep.subr.mxu0 0.0
    %3136 = vmatpush1.msra.mxu0 0.0
    %3137 = vmatprep.subr.mxu0 0.0
    %3138 = vmatpush1.msra.mxu0 0.0
    %3139 = vmatprep.subr.mxu0 0.0
    %3140 = vmatpush1.msra.mxu0 0.0
    %3141 = vmatprep.subr.mxu0 0.0
    %3142 = vmatpush1.msra.mxu0 0.0
    %3143 = vmatprep.subr.mxu0 0.0
    %3144 = vmatpush1.msra.mxu0 0.0
    %3145 = vmatprep.subr.mxu0 0.0
    %3146 = vmatpush1.msra.mxu0 0.0
    %3147 = vmatprep.subr.mxu0 0.0
    %3148 = vmatpush1.msra.mxu0 0.0
    %3149 = vmatprep.subr.mxu0 0.0
    %3150 = vmatpush1.msra.mxu0 0.0
    %3151 = vmatprep.subr.mxu0 0.0
    %3152 = vmatpush1.msra.mxu0 0.0
    %3153 = vmatprep.subr.mxu0 0.0
    %3154 = vmatpush1.msra.mxu0 0.0
    %3155 = vmatprep.subr.mxu0 0.0
    %3156 = vmatpush1.msra.mxu0 0.0
    %3157 = vmatprep.subr.mxu0 0.0
    %3158 = vmatpush1.msra.mxu0 0.0
    %3159 = vmatprep.subr.mxu0 0.0
    %3160 = vmatpush1.msra.mxu0 0.0
    %3161 = vmatprep.subr.mxu0 0.0
    %3162 = vmatpush1.msra.mxu0 0.0
    %3163 = vmatprep.subr.mxu0 0.0
    %3164 = vmatpush1.msra.mxu0 0.0
    %3165 = vmatprep.subr.mxu0 0.0
    %3166 = vmatpush1.msra.mxu0 0.0
    %3167 = vmatprep.subr.mxu0 0.0
    %3168 = vmatpush1.msra.mxu0 0.0
    %3169 = vmatprep.subr.mxu0 0.0
    %3170 = vmatpush1.msra.mxu0 0.0
    %3171 = vmatprep.subr.mxu0 0.0
    %3172 = vmatpush1.msra.mxu0 0.0
    %3173 = vmatprep.subr.mxu0 0.0
    %3174 = vmatpush1.msra.mxu0 0.0
    %3175 = vmatprep.subr.mxu0 0.0
    %3176 = vmatpush1.msra.mxu0 0.0
    %3177 = vmatprep.subr.mxu0 0.0
    %3178 = vmatpush1.msra.mxu0 0.0
    %3179 = vmatprep.subr.mxu0 0.0
    %3180 = vmatpush1.msra.mxu0 0.0
    %3181 = vmatprep.subr.mxu0 0.0
    %3182 = vmatpush1.msra.mxu0 0.0
    %3183 = vmatprep.subr.mxu0 0.0
    %3184 = vmatpush1.msra.mxu0 0.0
    %3185 = vmatprep.subr.mxu0 0.0
    %3186 = vmatpush1.msra.mxu0 0.0
    %3187 = vmatprep.subr.mxu0 0.0
    %3188 = vmatpush1.msra.mxu0 0.0
    %3189 = vmatprep.mubr.f32.mxu0 0.0
    %3190 = vmatmul.mubr.f32.gmra.mrb[0].mxu0 %v3114
    %v3191 = vpop.f32.mrb[0].mxu0
    %v3192 = vadd.f32 0.0, %v3191
    %v3193 = vpop.f32.mrb[0].mxu0
    %3194 = vmatprep.mubr.f32.mxu0 0.0
    %3195 = vmatmul.mubr.f32.gmra.mrb[0].mxu0 %v3117
    %v3196 = vpop.f32.mrb[0].mxu0
    %v3197 = vadd.f32 0.0, %v3196
    %v3198 = vpop.f32.mrb[0].mxu0
    %3199 = vmatprep.mubr.f32.mxu0 0.0
    %3200 = vmatmul.mubr.f32.gmra.mrb[0].mxu0 %v3120
    %v3201 = vpop.f32.mrb[0].mxu0
    %v3202 = vadd.f32 0.0, %v3201
    %v3203 = vpop.f32.mrb[0].mxu0
    %3204 = vmatprep.mubr.f32.mxu0 0.0
    %3205 = vmatmul.mubr.f32.gmra.mrb[0].mxu0 %v3123
    %v3206 = vpop.f32.mrb[0].mxu0
    %v3207 = vadd.f32 0.0, %v3206
    %v3208 = vpop.f32.mrb[0].mxu0
    %3209 = vdwg.mxu0
    %3210 = vxpose.xlu0.b32.start [1/16] %v80, 128
    %3211 = vxpose.xlu0.b32.cont [2/16] %v81, 128
    %3212 = vxpose.xlu0.b32.cont [3/16] %v82, 128
    %3213 = vxpose.xlu0.b32.cont [4/16] %v83, 128
    %3214 = vxpose.xlu0.b32.cont [5/16] 0.0, 128
    %3215 = vxpose.xlu0.b32.cont [6/16] 0.0, 128
    %3216 = vxpose.xlu0.b32.cont [7/16] 0.0, 128
    %3217 = vxpose.xlu0.b32.cont [8/16] 0.0, 128
    %3218 = vxpose.xlu0.b32.cont [9/16] 0.0, 128
    %3219 = vxpose.xlu0.b32.cont [10/16] 0.0, 128
    %3220 = vxpose.xlu0.b32.cont [11/16] 0.0, 128
    %3221 = vxpose.xlu0.b32.cont [12/16] 0.0, 128
    %3222 = vxpose.xlu0.b32.cont [13/16] 0.0, 128
    %3223 = vxpose.xlu0.b32.cont [14/16] 0.0, 128
    %3224 = vxpose.xlu0.b32.cont [15/16] 0.0, 128
    %3225 = vxpose.xlu0.b32.end [16/16] 0.0, 128
    %v3226 = vpop.trf.xlu0
    %v3227 = vpop.trf.xlu0
    %v3228 = vpop.trf.xlu0
    %v3229 = vpop.trf.xlu0
    %v3230 = vpop.trf.xlu0
    %v3231 = vpop.trf.xlu0
    %v3232 = vpop.trf.xlu0
    %v3233 = vpop.trf.xlu0
    %v3234 = vpop.trf.xlu0
    %v3235 = vpop.trf.xlu0
    %v3236 = vpop.trf.xlu0
    %v3237 = vpop.trf.xlu0
    %v3238 = vpop.trf.xlu0
    %v3239 = vpop.trf.xlu0
    %v3240 = vpop.trf.xlu0
    %v3241 = vpop.trf.xlu0
    %v3243 = vsel %vm2596, %v3226, 0
    %v3246 = vsel %vm2596, %v3227, 0
    %v3249 = vsel %vm2596, %v3228, 0
    %v3252 = vsel %vm2596, %v3229, 0
    %3254 = vmatprep.subr.mxu0 0.0
    %3255 = vmatpush1.msra.mxu0 %v1609
    %3256 = vmatprep.subr.mxu0 0.0
    %3257 = vmatpush1.msra.mxu0 %v1745
    %3258 = vmatprep.subr.mxu0 0.0
    %3259 = vmatpush1.msra.mxu0 %v1881
    %3260 = vmatprep.subr.mxu0 0.0
    %3261 = vmatpush1.msra.mxu0 %v2017
    %3262 = vmatprep.subr.mxu0 0.0
    %3263 = vmatpush1.msra.mxu0 0.0
    %3264 = vmatprep.subr.mxu0 0.0
    %3265 = vmatpush1.msra.mxu0 0.0
    %3266 = vmatprep.subr.mxu0 0.0
    %3267 = vmatpush1.msra.mxu0 0.0
    %3268 = vmatprep.subr.mxu0 0.0
    %3269 = vmatpush1.msra.mxu0 0.0
    %3270 = vmatprep.subr.mxu0 0.0
    %3271 = vmatpush1.msra.mxu0 0.0
    %3272 = vmatprep.subr.mxu0 0.0
    %3273 = vmatpush1.msra.mxu0 0.0
    %3274 = vmatprep.subr.mxu0 0.0
    %3275 = vmatpush1.msra.mxu0 0.0
    %3276 = vmatprep.subr.mxu0 0.0
    %3277 = vmatpush1.msra.mxu0 0.0
    %3278 = vmatprep.subr.mxu0 0.0
    %3279 = vmatpush1.msra.mxu0 0.0
    %3280 = vmatprep.subr.mxu0 0.0
    %3281 = vmatpush1.msra.mxu0 0.0
    %3282 = vmatprep.subr.mxu0 0.0
    %3283 = vmatpush1.msra.mxu0 0.0
    %3284 = vmatprep.subr.mxu0 0.0
    %3285 = vmatpush1.msra.mxu0 0.0
    %3286 = vmatprep.subr.mxu0 0.0
    %3287 = vmatpush1.msra.mxu0 0.0
    %3288 = vmatprep.subr.mxu0 0.0
    %3289 = vmatpush1.msra.mxu0 0.0
    %3290 = vmatprep.subr.mxu0 0.0
    %3291 = vmatpush1.msra.mxu0 0.0
    %3292 = vmatprep.subr.mxu0 0.0
    %3293 = vmatpush1.msra.mxu0 0.0
    %3294 = vmatprep.subr.mxu0 0.0
    %3295 = vmatpush1.msra.mxu0 0.0
    %3296 = vmatprep.subr.mxu0 0.0
    %3297 = vmatpush1.msra.mxu0 0.0
    %3298 = vmatprep.subr.mxu0 0.0
    %3299 = vmatpush1.msra.mxu0 0.0
    %3300 = vmatprep.subr.mxu0 0.0
    %3301 = vmatpush1.msra.mxu0 0.0
    %3302 = vmatprep.subr.mxu0 0.0
    %3303 = vmatpush1.msra.mxu0 0.0
    %3304 = vmatprep.subr.mxu0 0.0
    %3305 = vmatpush1.msra.mxu0 0.0
    %3306 = vmatprep.subr.mxu0 0.0
    %3307 = vmatpush1.msra.mxu0 0.0
    %3308 = vmatprep.subr.mxu0 0.0
    %3309 = vmatpush1.msra.mxu0 0.0
    %3310 = vmatprep.subr.mxu0 0.0
    %3311 = vmatpush1.msra.mxu0 0.0
    %3312 = vmatprep.subr.mxu0 0.0
    %3313 = vmatpush1.msra.mxu0 0.0
    %3314 = vmatprep.subr.mxu0 0.0
    %3315 = vmatpush1.msra.mxu0 0.0
    %3316 = vmatprep.subr.mxu0 0.0
    %3317 = vmatpush1.msra.mxu0 0.0
    %3318 = vmatprep.mubr.f32.mxu0 0.0
    %3319 = vmatmul.mubr.f32.gmra.mrb[0].mxu0 %v3243
    %v3320 = vpop.f32.mrb[0].mxu0
    %v3321 = vadd.f32 0.0, %v3320
    %v3322 = vpop.f32.mrb[0].mxu0
    %3323 = vmatprep.mubr.f32.mxu0 0.0
    %3324 = vmatmul.mubr.f32.gmra.mrb[0].mxu0 %v3246
    %v3325 = vpop.f32.mrb[0].mxu0
    %v3326 = vadd.f32 0.0, %v3325
    %v3327 = vpop.f32.mrb[0].mxu0
    %3328 = vmatprep.mubr.f32.mxu0 0.0
    %3329 = vmatmul.mubr.f32.gmra.mrb[0].mxu0 %v3249
    %v3330 = vpop.f32.mrb[0].mxu0
    %v3331 = vadd.f32 0.0, %v3330
    %v3332 = vpop.f32.mrb[0].mxu0
    %3333 = vmatprep.mubr.f32.mxu0 0.0
    %3334 = vmatmul.mubr.f32.gmra.mrb[0].mxu0 %v3252
    %v3335 = vpop.f32.mrb[0].mxu0
    %v3336 = vadd.f32 0.0, %v3335
    %v3337 = vpop.f32.mrb[0].mxu0
    %3338 = vdwg.mxu0
    %3339 = vxpose.xlu0.b32.start [1/16] %v84, 128
    %3340 = vxpose.xlu0.b32.cont [2/16] %v85, 128
    %3341 = vxpose.xlu0.b32.cont [3/16] %v86, 128
    %3342 = vxpose.xlu0.b32.cont [4/16] %v87, 128
    %3343 = vxpose.xlu0.b32.cont [5/16] 0.0, 128
    %3344 = vxpose.xlu0.b32.cont [6/16] 0.0, 128
    %3345 = vxpose.xlu0.b32.cont [7/16] 0.0, 128
    %3346 = vxpose.xlu0.b32.cont [8/16] 0.0, 128
    %3347 = vxpose.xlu0.b32.cont [9/16] 0.0, 128
    %3348 = vxpose.xlu0.b32.cont [10/16] 0.0, 128
    %3349 = vxpose.xlu0.b32.cont [11/16] 0.0, 128
    %3350 = vxpose.xlu0.b32.cont [12/16] 0.0, 128
    %3351 = vxpose.xlu0.b32.cont [13/16] 0.0, 128
    %3352 = vxpose.xlu0.b32.cont [14/16] 0.0, 128
    %3353 = vxpose.xlu0.b32.cont [15/16] 0.0, 128
    %3354 = vxpose.xlu0.b32.end [16/16] 0.0, 128
    %v3355 = vpop.trf.xlu0
    %v3356 = vpop.trf.xlu0
    %v3357 = vpop.trf.xlu0
    %v3358 = vpop.trf.xlu0
    %v3359 = vpop.trf.xlu0
    %v3360 = vpop.trf.xlu0
    %v3361 = vpop.trf.xlu0
    %v3362 = vpop.trf.xlu0
    %v3363 = vpop.trf.xlu0
    %v3364 = vpop.trf.xlu0
    %v3365 = vpop.trf.xlu0
    %v3366 = vpop.trf.xlu0
    %v3367 = vpop.trf.xlu0
    %v3368 = vpop.trf.xlu0
    %v3369 = vpop.trf.xlu0
    %v3370 = vpop.trf.xlu0
    %v3372 = vsel %vm2596, %v3355, 0
    %v3375 = vsel %vm2596, %v3356, 0
    %v3378 = vsel %vm2596, %v3357, 0
    %v3381 = vsel %vm2596, %v3358, 0
    %3383 = vmatprep.subr.mxu0 0.0
    %3384 = vmatpush1.msra.mxu0 %v1610
    %3385 = vmatprep.subr.mxu0 0.0
    %3386 = vmatpush1.msra.mxu0 %v1746
    %3387 = vmatprep.subr.mxu0 0.0
    %3388 = vmatpush1.msra.mxu0 %v1882
    %3389 = vmatprep.subr.mxu0 0.0
    %3390 = vmatpush1.msra.mxu0 %v2018
    %3391 = vmatprep.subr.mxu0 0.0
    %3392 = vmatpush1.msra.mxu0 0.0
    %3393 = vmatprep.subr.mxu0 0.0
    %3394 = vmatpush1.msra.mxu0 0.0
    %3395 = vmatprep.subr.mxu0 0.0
    %3396 = vmatpush1.msra.mxu0 0.0
    %3397 = vmatprep.subr.mxu0 0.0
    %3398 = vmatpush1.msra.mxu0 0.0
    %3399 = vmatprep.subr.mxu0 0.0
    %3400 = vmatpush1.msra.mxu0 0.0
    %3401 = vmatprep.subr.mxu0 0.0
    %3402 = vmatpush1.msra.mxu0 0.0
    %3403 = vmatprep.subr.mxu0 0.0
    %3404 = vmatpush1.msra.mxu0 0.0
    %3405 = vmatprep.subr.mxu0 0.0
    %3406 = vmatpush1.msra.mxu0 0.0
    %3407 = vmatprep.subr.mxu0 0.0
    %3408 = vmatpush1.msra.mxu0 0.0
    %3409 = vmatprep.subr.mxu0 0.0
    %3410 = vmatpush1.msra.mxu0 0.0
    %3411 = vmatprep.subr.mxu0 0.0
    %3412 = vmatpush1.msra.mxu0 0.0
    %3413 = vmatprep.subr.mxu0 0.0
    %3414 = vmatpush1.msra.mxu0 0.0
    %3415 = vmatprep.subr.mxu0 0.0
    %3416 = vmatpush1.msra.mxu0 0.0
    %3417 = vmatprep.subr.mxu0 0.0
    %3418 = vmatpush1.msra.mxu0 0.0
    %3419 = vmatprep.subr.mxu0 0.0
    %3420 = vmatpush1.msra.mxu0 0.0
    %3421 = vmatprep.subr.mxu0 0.0
    %3422 = vmatpush1.msra.mxu0 0.0
    %3423 = vmatprep.subr.mxu0 0.0
    %3424 = vmatpush1.msra.mxu0 0.0
    %3425 = vmatprep.subr.mxu0 0.0
    %3426 = vmatpush1.msra.mxu0 0.0
    %3427 = vmatprep.subr.mxu0 0.0
    %3428 = vmatpush1.msra.mxu0 0.0
    %3429 = vmatprep.subr.mxu0 0.0
    %3430 = vmatpush1.msra.mxu0 0.0
    %3431 = vmatprep.subr.mxu0 0.0
    %3432 = vmatpush1.msra.mxu0 0.0
    %3433 = vmatprep.subr.mxu0 0.0
    %3434 = vmatpush1.msra.mxu0 0.0
    %3435 = vmatprep.subr.mxu0 0.0
    %3436 = vmatpush1.msra.mxu0 0.0
    %3437 = vmatprep.subr.mxu0 0.0
    %3438 = vmatpush1.msra.mxu0 0.0
    %3439 = vmatprep.subr.mxu0 0.0
    %3440 = vmatpush1.msra.mxu0 0.0
    %3441 = vmatprep.subr.mxu0 0.0
    %3442 = vmatpush1.msra.mxu0 0.0
    %3443 = vmatprep.subr.mxu0 0.0
    %3444 = vmatpush1.msra.mxu0 0.0
    %3445 = vmatprep.subr.mxu0 0.0
    %3446 = vmatpush1.msra.mxu0 0.0
    %3447 = vmatprep.mubr.f32.mxu0 0.0
    %3448 = vmatmul.mubr.f32.gmra.mrb[0].mxu0 %v3372
    %v3449 = vpop.f32.mrb[0].mxu0
    %v3450 = vadd.f32 0.0, %v3449
    %v3451 = vpop.f32.mrb[0].mxu0
    %3452 = vmatprep.mubr.f32.mxu0 0.0
    %3453 = vmatmul.mubr.f32.gmra.mrb[0].mxu0 %v3375
    %v3454 = vpop.f32.mrb[0].mxu0
    %v3455 = vadd.f32 0.0, %v3454
    %v3456 = vpop.f32.mrb[0].mxu0
    %3457 = vmatprep.mubr.f32.mxu0 0.0
    %3458 = vmatmul.mubr.f32.gmra.mrb[0].mxu0 %v3378
    %v3459 = vpop.f32.mrb[0].mxu0
    %v3460 = vadd.f32 0.0, %v3459
    %v3461 = vpop.f32.mrb[0].mxu0
    %3462 = vmatprep.mubr.f32.mxu0 0.0
    %3463 = vmatmul.mubr.f32.gmra.mrb[0].mxu0 %v3381
    %v3464 = vpop.f32.mrb[0].mxu0
    %v3465 = vadd.f32 0.0, %v3464
    %v3466 = vpop.f32.mrb[0].mxu0
    %3467 = vdwg.mxu0
    %3468 = vxpose.xlu0.b32.start [1/16] %v88, 128
    %3469 = vxpose.xlu0.b32.cont [2/16] %v89, 128
    %3470 = vxpose.xlu0.b32.cont [3/16] %v90, 128
    %3471 = vxpose.xlu0.b32.cont [4/16] %v91, 128
    %3472 = vxpose.xlu0.b32.cont [5/16] 0.0, 128
    %3473 = vxpose.xlu0.b32.cont [6/16] 0.0, 128
    %3474 = vxpose.xlu0.b32.cont [7/16] 0.0, 128
    %3475 = vxpose.xlu0.b32.cont [8/16] 0.0, 128
    %3476 = vxpose.xlu0.b32.cont [9/16] 0.0, 128
    %3477 = vxpose.xlu0.b32.cont [10/16] 0.0, 128
    %3478 = vxpose.xlu0.b32.cont [11/16] 0.0, 128
    %3479 = vxpose.xlu0.b32.cont [12/16] 0.0, 128
    %3480 = vxpose.xlu0.b32.cont [13/16] 0.0, 128
    %3481 = vxpose.xlu0.b32.cont [14/16] 0.0, 128
    %3482 = vxpose.xlu0.b32.cont [15/16] 0.0, 128
    %3483 = vxpose.xlu0.b32.end [16/16] 0.0, 128
    %v3484 = vpop.trf.xlu0
    %v3485 = vpop.trf.xlu0
    %v3486 = vpop.trf.xlu0
    %v3487 = vpop.trf.xlu0
    %v3488 = vpop.trf.xlu0
    %v3489 = vpop.trf.xlu0
    %v3490 = vpop.trf.xlu0
    %v3491 = vpop.trf.xlu0
    %v3492 = vpop.trf.xlu0
    %v3493 = vpop.trf.xlu0
    %v3494 = vpop.trf.xlu0
    %v3495 = vpop.trf.xlu0
    %v3496 = vpop.trf.xlu0
    %v3497 = vpop.trf.xlu0
    %v3498 = vpop.trf.xlu0
    %v3499 = vpop.trf.xlu0
    %v3501 = vsel %vm2596, %v3484, 0
    %v3504 = vsel %vm2596, %v3485, 0
    %v3507 = vsel %vm2596, %v3486, 0
    %v3510 = vsel %vm2596, %v3487, 0
    %3512 = vmatprep.subr.mxu0 0.0
    %3513 = vmatpush1.msra.mxu0 %v1611
    %3514 = vmatprep.subr.mxu0 0.0
    %3515 = vmatpush1.msra.mxu0 %v1747
    %3516 = vmatprep.subr.mxu0 0.0
    %3517 = vmatpush1.msra.mxu0 %v1883
    %3518 = vmatprep.subr.mxu0 0.0
    %3519 = vmatpush1.msra.mxu0 %v2019
    %3520 = vmatprep.subr.mxu0 0.0
    %3521 = vmatpush1.msra.mxu0 0.0
    %3522 = vmatprep.subr.mxu0 0.0
    %3523 = vmatpush1.msra.mxu0 0.0
    %3524 = vmatprep.subr.mxu0 0.0
    %3525 = vmatpush1.msra.mxu0 0.0
    %3526 = vmatprep.subr.mxu0 0.0
    %3527 = vmatpush1.msra.mxu0 0.0
    %3528 = vmatprep.subr.mxu0 0.0
    %3529 = vmatpush1.msra.mxu0 0.0
    %3530 = vmatprep.subr.mxu0 0.0
    %3531 = vmatpush1.msra.mxu0 0.0
    %3532 = vmatprep.subr.mxu0 0.0
    %3533 = vmatpush1.msra.mxu0 0.0
    %3534 = vmatprep.subr.mxu0 0.0
    %3535 = vmatpush1.msra.mxu0 0.0
    %3536 = vmatprep.subr.mxu0 0.0
    %3537 = vmatpush1.msra.mxu0 0.0
    %3538 = vmatprep.subr.mxu0 0.0
    %3539 = vmatpush1.msra.mxu0 0.0
    %3540 = vmatprep.subr.mxu0 0.0
    %3541 = vmatpush1.msra.mxu0 0.0
    %3542 = vmatprep.subr.mxu0 0.0
    %3543 = vmatpush1.msra.mxu0 0.0
    %3544 = vmatprep.subr.mxu0 0.0
    %3545 = vmatpush1.msra.mxu0 0.0
    %3546 = vmatprep.subr.mxu0 0.0
    %3547 = vmatpush1.msra.mxu0 0.0
    %3548 = vmatprep.subr.mxu0 0.0
    %3549 = vmatpush1.msra.mxu0 0.0
    %3550 = vmatprep.subr.mxu0 0.0
    %3551 = vmatpush1.msra.mxu0 0.0
    %3552 = vmatprep.subr.mxu0 0.0
    %3553 = vmatpush1.msra.mxu0 0.0
    %3554 = vmatprep.subr.mxu0 0.0
    %3555 = vmatpush1.msra.mxu0 0.0
    %3556 = vmatprep.subr.mxu0 0.0
    %3557 = vmatpush1.msra.mxu0 0.0
    %3558 = vmatprep.subr.mxu0 0.0
    %3559 = vmatpush1.msra.mxu0 0.0
    %3560 = vmatprep.subr.mxu0 0.0
    %3561 = vmatpush1.msra.mxu0 0.0
    %3562 = vmatprep.subr.mxu0 0.0
    %3563 = vmatpush1.msra.mxu0 0.0
    %3564 = vmatprep.subr.mxu0 0.0
    %3565 = vmatpush1.msra.mxu0 0.0
    %3566 = vmatprep.subr.mxu0 0.0
    %3567 = vmatpush1.msra.mxu0 0.0
    %3568 = vmatprep.subr.mxu0 0.0
    %3569 = vmatpush1.msra.mxu0 0.0
    %3570 = vmatprep.subr.mxu0 0.0
    %3571 = vmatpush1.msra.mxu0 0.0
    %3572 = vmatprep.subr.mxu0 0.0
    %3573 = vmatpush1.msra.mxu0 0.0
    %3574 = vmatprep.subr.mxu0 0.0
    %3575 = vmatpush1.msra.mxu0 0.0
    %3576 = vmatprep.mubr.f32.mxu0 0.0
    %3577 = vmatmul.mubr.f32.gmra.mrb[0].mxu0 %v3501
    %v3578 = vpop.f32.mrb[0].mxu0
    %v3579 = vadd.f32 0.0, %v3578
    %v3580 = vpop.f32.mrb[0].mxu0
    %3581 = vmatprep.mubr.f32.mxu0 0.0
    %3582 = vmatmul.mubr.f32.gmra.mrb[0].mxu0 %v3504
    %v3583 = vpop.f32.mrb[0].mxu0
    %v3584 = vadd.f32 0.0, %v3583
    %v3585 = vpop.f32.mrb[0].mxu0
    %3586 = vmatprep.mubr.f32.mxu0 0.0
    %3587 = vmatmul.mubr.f32.gmra.mrb[0].mxu0 %v3507
    %v3588 = vpop.f32.mrb[0].mxu0
    %v3589 = vadd.f32 0.0, %v3588
    %v3590 = vpop.f32.mrb[0].mxu0
    %3591 = vmatprep.mubr.f32.mxu0 0.0
    %3592 = vmatmul.mubr.f32.gmra.mrb[0].mxu0 %v3510
    %v3593 = vpop.f32.mrb[0].mxu0
    %v3594 = vadd.f32 0.0, %v3593
    %v3595 = vpop.f32.mrb[0].mxu0
    %3596 = vdwg.mxu0
    %3597 = vxpose.xlu0.b32.start [1/16] %v92, 128
    %3598 = vxpose.xlu0.b32.cont [2/16] %v93, 128
    %3599 = vxpose.xlu0.b32.cont [3/16] %v94, 128
    %3600 = vxpose.xlu0.b32.cont [4/16] %v95, 128
    %3601 = vxpose.xlu0.b32.cont [5/16] 0.0, 128
    %3602 = vxpose.xlu0.b32.cont [6/16] 0.0, 128
    %3603 = vxpose.xlu0.b32.cont [7/16] 0.0, 128
    %3604 = vxpose.xlu0.b32.cont [8/16] 0.0, 128
    %3605 = vxpose.xlu0.b32.cont [9/16] 0.0, 128
    %3606 = vxpose.xlu0.b32.cont [10/16] 0.0, 128
    %3607 = vxpose.xlu0.b32.cont [11/16] 0.0, 128
    %3608 = vxpose.xlu0.b32.cont [12/16] 0.0, 128
    %3609 = vxpose.xlu0.b32.cont [13/16] 0.0, 128
    %3610 = vxpose.xlu0.b32.cont [14/16] 0.0, 128
    %3611 = vxpose.xlu0.b32.cont [15/16] 0.0, 128
    %3612 = vxpose.xlu0.b32.end [16/16] 0.0, 128
    %v3613 = vpop.trf.xlu0
    %v3614 = vpop.trf.xlu0
    %v3615 = vpop.trf.xlu0
    %v3616 = vpop.trf.xlu0
    %v3617 = vpop.trf.xlu0
    %v3618 = vpop.trf.xlu0
    %v3619 = vpop.trf.xlu0
    %v3620 = vpop.trf.xlu0
    %v3621 = vpop.trf.xlu0
    %v3622 = vpop.trf.xlu0
    %v3623 = vpop.trf.xlu0
    %v3624 = vpop.trf.xlu0
    %v3625 = vpop.trf.xlu0
    %v3626 = vpop.trf.xlu0
    %v3627 = vpop.trf.xlu0
    %v3628 = vpop.trf.xlu0
    %v3630 = vsel %vm2596, %v3613, 0
    %v3633 = vsel %vm2596, %v3614, 0
    %v3636 = vsel %vm2596, %v3615, 0
    %v3639 = vsel %vm2596, %v3616, 0
    %3641 = vmatprep.subr.mxu0 0.0
    %3642 = vmatpush1.msra.mxu0 %v2148
    %3643 = vmatprep.subr.mxu0 0.0
    %3644 = vmatpush1.msra.mxu0 %v2284
    %3645 = vmatprep.subr.mxu0 0.0
    %3646 = vmatpush1.msra.mxu0 %v2420
    %3647 = vmatprep.subr.mxu0 0.0
    %3648 = vmatpush1.msra.mxu0 %v2556
    %3649 = vmatprep.subr.mxu0 0.0
    %3650 = vmatpush1.msra.mxu0 0.0
    %3651 = vmatprep.subr.mxu0 0.0
    %3652 = vmatpush1.msra.mxu0 0.0
    %3653 = vmatprep.subr.mxu0 0.0
    %3654 = vmatpush1.msra.mxu0 0.0
    %3655 = vmatprep.subr.mxu0 0.0
    %3656 = vmatpush1.msra.mxu0 0.0
    %3657 = vmatprep.subr.mxu0 0.0
    %3658 = vmatpush1.msra.mxu0 0.0
    %3659 = vmatprep.subr.mxu0 0.0
    %3660 = vmatpush1.msra.mxu0 0.0
    %3661 = vmatprep.subr.mxu0 0.0
    %3662 = vmatpush1.msra.mxu0 0.0
    %3663 = vmatprep.subr.mxu0 0.0
    %3664 = vmatpush1.msra.mxu0 0.0
    %3665 = vmatprep.subr.mxu0 0.0
    %3666 = vmatpush1.msra.mxu0 0.0
    %3667 = vmatprep.subr.mxu0 0.0
    %3668 = vmatpush1.msra.mxu0 0.0
    %3669 = vmatprep.subr.mxu0 0.0
    %3670 = vmatpush1.msra.mxu0 0.0
    %3671 = vmatprep.subr.mxu0 0.0
    %3672 = vmatpush1.msra.mxu0 0.0
    %3673 = vmatprep.subr.mxu0 0.0
    %3674 = vmatpush1.msra.mxu0 0.0
    %3675 = vmatprep.subr.mxu0 0.0
    %3676 = vmatpush1.msra.mxu0 0.0
    %3677 = vmatprep.subr.mxu0 0.0
    %3678 = vmatpush1.msra.mxu0 0.0
    %3679 = vmatprep.subr.mxu0 0.0
    %3680 = vmatpush1.msra.mxu0 0.0
    %3681 = vmatprep.subr.mxu0 0.0
    %3682 = vmatpush1.msra.mxu0 0.0
    %3683 = vmatprep.subr.mxu0 0.0
    %3684 = vmatpush1.msra.mxu0 0.0
    %3685 = vmatprep.subr.mxu0 0.0
    %3686 = vmatpush1.msra.mxu0 0.0
    %3687 = vmatprep.subr.mxu0 0.0
    %3688 = vmatpush1.msra.mxu0 0.0
    %3689 = vmatprep.subr.mxu0 0.0
    %3690 = vmatpush1.msra.mxu0 0.0
    %3691 = vmatprep.subr.mxu0 0.0
    %3692 = vmatpush1.msra.mxu0 0.0
    %3693 = vmatprep.subr.mxu0 0.0
    %3694 = vmatpush1.msra.mxu0 0.0
    %3695 = vmatprep.subr.mxu0 0.0
    %3696 = vmatpush1.msra.mxu0 0.0
    %3697 = vmatprep.subr.mxu0 0.0
    %3698 = vmatpush1.msra.mxu0 0.0
    %3699 = vmatprep.subr.mxu0 0.0
    %3700 = vmatpush1.msra.mxu0 0.0
    %3701 = vmatprep.subr.mxu0 0.0
    %3702 = vmatpush1.msra.mxu0 0.0
    %3703 = vmatprep.subr.mxu0 0.0
    %3704 = vmatpush1.msra.mxu0 0.0
    %3705 = vmatprep.mubr.f32.mxu0 0.0
    %3706 = vmatmul.mubr.f32.gmra.mrb[0].mxu0 %v3630
    %v3707 = vpop.f32.mrb[0].mxu0
    %v3708 = vadd.f32 0.0, %v3707
    %v3709 = vpop.f32.mrb[0].mxu0
    %3710 = vmatprep.mubr.f32.mxu0 0.0
    %3711 = vmatmul.mubr.f32.gmra.mrb[0].mxu0 %v3633
    %v3712 = vpop.f32.mrb[0].mxu0
    %v3713 = vadd.f32 0.0, %v3712
    %v3714 = vpop.f32.mrb[0].mxu0
    %3715 = vmatprep.mubr.f32.mxu0 0.0
    %3716 = vmatmul.mubr.f32.gmra.mrb[0].mxu0 %v3636
    %v3717 = vpop.f32.mrb[0].mxu0
    %v3718 = vadd.f32 0.0, %v3717
    %v3719 = vpop.f32.mrb[0].mxu0
    %3720 = vmatprep.mubr.f32.mxu0 0.0
    %3721 = vmatmul.mubr.f32.gmra.mrb[0].mxu0 %v3639
    %v3722 = vpop.f32.mrb[0].mxu0
    %v3723 = vadd.f32 0.0, %v3722
    %v3724 = vpop.f32.mrb[0].mxu0
    %3725 = vdwg.mxu0
    %3726 = vxpose.xlu0.b32.start [1/16] %v96, 128
    %3727 = vxpose.xlu0.b32.cont [2/16] %v97, 128
    %3728 = vxpose.xlu0.b32.cont [3/16] %v98, 128
    %3729 = vxpose.xlu0.b32.cont [4/16] %v99, 128
    %3730 = vxpose.xlu0.b32.cont [5/16] 0.0, 128
    %3731 = vxpose.xlu0.b32.cont [6/16] 0.0, 128
    %3732 = vxpose.xlu0.b32.cont [7/16] 0.0, 128
    %3733 = vxpose.xlu0.b32.cont [8/16] 0.0, 128
    %3734 = vxpose.xlu0.b32.cont [9/16] 0.0, 128
    %3735 = vxpose.xlu0.b32.cont [10/16] 0.0, 128
    %3736 = vxpose.xlu0.b32.cont [11/16] 0.0, 128
    %3737 = vxpose.xlu0.b32.cont [12/16] 0.0, 128
    %3738 = vxpose.xlu0.b32.cont [13/16] 0.0, 128
    %3739 = vxpose.xlu0.b32.cont [14/16] 0.0, 128
    %3740 = vxpose.xlu0.b32.cont [15/16] 0.0, 128
    %3741 = vxpose.xlu0.b32.end [16/16] 0.0, 128
    %v3742 = vpop.trf.xlu0
    %v3743 = vpop.trf.xlu0
    %v3744 = vpop.trf.xlu0
    %v3745 = vpop.trf.xlu0
    %v3746 = vpop.trf.xlu0
    %v3747 = vpop.trf.xlu0
    %v3748 = vpop.trf.xlu0
    %v3749 = vpop.trf.xlu0
    %v3750 = vpop.trf.xlu0
    %v3751 = vpop.trf.xlu0
    %v3752 = vpop.trf.xlu0
    %v3753 = vpop.trf.xlu0
    %v3754 = vpop.trf.xlu0
    %v3755 = vpop.trf.xlu0
    %v3756 = vpop.trf.xlu0
    %v3757 = vpop.trf.xlu0
    %v3759 = vsel %vm2596, %v3742, 0
    %v3762 = vsel %vm2596, %v3743, 0
    %v3765 = vsel %vm2596, %v3744, 0
    %v3768 = vsel %vm2596, %v3745, 0
    %3770 = vmatprep.subr.mxu0 0.0
    %3771 = vmatpush1.msra.mxu0 %v2149
    %3772 = vmatprep.subr.mxu0 0.0
    %3773 = vmatpush1.msra.mxu0 %v2285
    %3774 = vmatprep.subr.mxu0 0.0
    %3775 = vmatpush1.msra.mxu0 %v2421
    %3776 = vmatprep.subr.mxu0 0.0
    %3777 = vmatpush1.msra.mxu0 %v2557
    %3778 = vmatprep.subr.mxu0 0.0
    %3779 = vmatpush1.msra.mxu0 0.0
    %3780 = vmatprep.subr.mxu0 0.0
    %3781 = vmatpush1.msra.mxu0 0.0
    %3782 = vmatprep.subr.mxu0 0.0
    %3783 = vmatpush1.msra.mxu0 0.0
    %3784 = vmatprep.subr.mxu0 0.0
    %3785 = vmatpush1.msra.mxu0 0.0
    %3786 = vmatprep.subr.mxu0 0.0
    %3787 = vmatpush1.msra.mxu0 0.0
    %3788 = vmatprep.subr.mxu0 0.0
    %3789 = vmatpush1.msra.mxu0 0.0
    %3790 = vmatprep.subr.mxu0 0.0
    %3791 = vmatpush1.msra.mxu0 0.0
    %3792 = vmatprep.subr.mxu0 0.0
    %3793 = vmatpush1.msra.mxu0 0.0
    %3794 = vmatprep.subr.mxu0 0.0
    %3795 = vmatpush1.msra.mxu0 0.0
    %3796 = vmatprep.subr.mxu0 0.0
    %3797 = vmatpush1.msra.mxu0 0.0
    %3798 = vmatprep.subr.mxu0 0.0
    %3799 = vmatpush1.msra.mxu0 0.0
    %3800 = vmatprep.subr.mxu0 0.0
    %3801 = vmatpush1.msra.mxu0 0.0
    %3802 = vmatprep.subr.mxu0 0.0
    %3803 = vmatpush1.msra.mxu0 0.0
    %3804 = vmatprep.subr.mxu0 0.0
    %3805 = vmatpush1.msra.mxu0 0.0
    %3806 = vmatprep.subr.mxu0 0.0
    %3807 = vmatpush1.msra.mxu0 0.0
    %3808 = vmatprep.subr.mxu0 0.0
    %3809 = vmatpush1.msra.mxu0 0.0
    %3810 = vmatprep.subr.mxu0 0.0
    %3811 = vmatpush1.msra.mxu0 0.0
    %3812 = vmatprep.subr.mxu0 0.0
    %3813 = vmatpush1.msra.mxu0 0.0
    %3814 = vmatprep.subr.mxu0 0.0
    %3815 = vmatpush1.msra.mxu0 0.0
    %3816 = vmatprep.subr.mxu0 0.0
    %3817 = vmatpush1.msra.mxu0 0.0
    %3818 = vmatprep.subr.mxu0 0.0
    %3819 = vmatpush1.msra.mxu0 0.0
    %3820 = vmatprep.subr.mxu0 0.0
    %3821 = vmatpush1.msra.mxu0 0.0
    %3822 = vmatprep.subr.mxu0 0.0
    %3823 = vmatpush1.msra.mxu0 0.0
    %3824 = vmatprep.subr.mxu0 0.0
    %3825 = vmatpush1.msra.mxu0 0.0
    %3826 = vmatprep.subr.mxu0 0.0
    %3827 = vmatpush1.msra.mxu0 0.0
    %3828 = vmatprep.subr.mxu0 0.0
    %3829 = vmatpush1.msra.mxu0 0.0
    %3830 = vmatprep.subr.mxu0 0.0
    %3831 = vmatpush1.msra.mxu0 0.0
    %3832 = vmatprep.subr.mxu0 0.0
    %3833 = vmatpush1.msra.mxu0 0.0
    %3834 = vmatprep.mubr.f32.mxu0 0.0
    %3835 = vmatmul.mubr.f32.gmra.mrb[0].mxu0 %v3759
    %v3836 = vpop.f32.mrb[0].mxu0
    %v3837 = vadd.f32 0.0, %v3836
    %v3838 = vpop.f32.mrb[0].mxu0
    %3839 = vmatprep.mubr.f32.mxu0 0.0
    %3840 = vmatmul.mubr.f32.gmra.mrb[0].mxu0 %v3762
    %v3841 = vpop.f32.mrb[0].mxu0
    %v3842 = vadd.f32 0.0, %v3841
    %v3843 = vpop.f32.mrb[0].mxu0
    %3844 = vmatprep.mubr.f32.mxu0 0.0
    %3845 = vmatmul.mubr.f32.gmra.mrb[0].mxu0 %v3765
    %v3846 = vpop.f32.mrb[0].mxu0
    %v3847 = vadd.f32 0.0, %v3846
    %v3848 = vpop.f32.mrb[0].mxu0
    %3849 = vmatprep.mubr.f32.mxu0 0.0
    %3850 = vmatmul.mubr.f32.gmra.mrb[0].mxu0 %v3768
    %v3851 = vpop.f32.mrb[0].mxu0
    %v3852 = vadd.f32 0.0, %v3851
    %v3853 = vpop.f32.mrb[0].mxu0
    %3854 = vdwg.mxu0
    %3855 = vxpose.xlu0.b32.start [1/16] %v100, 128
    %3856 = vxpose.xlu0.b32.cont [2/16] %v101, 128
    %3857 = vxpose.xlu0.b32.cont [3/16] %v102, 128
    %3858 = vxpose.xlu0.b32.cont [4/16] %v103, 128
    %3859 = vxpose.xlu0.b32.cont [5/16] 0.0, 128
    %3860 = vxpose.xlu0.b32.cont [6/16] 0.0, 128
    %3861 = vxpose.xlu0.b32.cont [7/16] 0.0, 128
    %3862 = vxpose.xlu0.b32.cont [8/16] 0.0, 128
    %3863 = vxpose.xlu0.b32.cont [9/16] 0.0, 128
    %3864 = vxpose.xlu0.b32.cont [10/16] 0.0, 128
    %3865 = vxpose.xlu0.b32.cont [11/16] 0.0, 128
    %3866 = vxpose.xlu0.b32.cont [12/16] 0.0, 128
    %3867 = vxpose.xlu0.b32.cont [13/16] 0.0, 128
    %3868 = vxpose.xlu0.b32.cont [14/16] 0.0, 128
    %3869 = vxpose.xlu0.b32.cont [15/16] 0.0, 128
    %3870 = vxpose.xlu0.b32.end [16/16] 0.0, 128
    %v3871 = vpop.trf.xlu0
    %v3872 = vpop.trf.xlu0
    %v3873 = vpop.trf.xlu0
    %v3874 = vpop.trf.xlu0
    %v3875 = vpop.trf.xlu0
    %v3876 = vpop.trf.xlu0
    %v3877 = vpop.trf.xlu0
    %v3878 = vpop.trf.xlu0
    %v3879 = vpop.trf.xlu0
    %v3880 = vpop.trf.xlu0
    %v3881 = vpop.trf.xlu0
    %v3882 = vpop.trf.xlu0
    %v3883 = vpop.trf.xlu0
    %v3884 = vpop.trf.xlu0
    %v3885 = vpop.trf.xlu0
    %v3886 = vpop.trf.xlu0
    %v3888 = vsel %vm2596, %v3871, 0
    %v3891 = vsel %vm2596, %v3872, 0
    %v3894 = vsel %vm2596, %v3873, 0
    %v3897 = vsel %vm2596, %v3874, 0
    %3899 = vmatprep.subr.mxu0 0.0
    %3900 = vmatpush1.msra.mxu0 %v2150
    %3901 = vmatprep.subr.mxu0 0.0
    %3902 = vmatpush1.msra.mxu0 %v2286
    %3903 = vmatprep.subr.mxu0 0.0
    %3904 = vmatpush1.msra.mxu0 %v2422
    %3905 = vmatprep.subr.mxu0 0.0
    %3906 = vmatpush1.msra.mxu0 %v2558
    %3907 = vmatprep.subr.mxu0 0.0
    %3908 = vmatpush1.msra.mxu0 0.0
    %3909 = vmatprep.subr.mxu0 0.0
    %3910 = vmatpush1.msra.mxu0 0.0
    %3911 = vmatprep.subr.mxu0 0.0
    %3912 = vmatpush1.msra.mxu0 0.0
    %3913 = vmatprep.subr.mxu0 0.0
    %3914 = vmatpush1.msra.mxu0 0.0
    %3915 = vmatprep.subr.mxu0 0.0
    %3916 = vmatpush1.msra.mxu0 0.0
    %3917 = vmatprep.subr.mxu0 0.0
    %3918 = vmatpush1.msra.mxu0 0.0
    %3919 = vmatprep.subr.mxu0 0.0
    %3920 = vmatpush1.msra.mxu0 0.0
    %3921 = vmatprep.subr.mxu0 0.0
    %3922 = vmatpush1.msra.mxu0 0.0
    %3923 = vmatprep.subr.mxu0 0.0
    %3924 = vmatpush1.msra.mxu0 0.0
    %3925 = vmatprep.subr.mxu0 0.0
    %3926 = vmatpush1.msra.mxu0 0.0
    %3927 = vmatprep.subr.mxu0 0.0
    %3928 = vmatpush1.msra.mxu0 0.0
    %3929 = vmatprep.subr.mxu0 0.0
    %3930 = vmatpush1.msra.mxu0 0.0
    %3931 = vmatprep.subr.mxu0 0.0
    %3932 = vmatpush1.msra.mxu0 0.0
    %3933 = vmatprep.subr.mxu0 0.0
    %3934 = vmatpush1.msra.mxu0 0.0
    %3935 = vmatprep.subr.mxu0 0.0
    %3936 = vmatpush1.msra.mxu0 0.0
    %3937 = vmatprep.subr.mxu0 0.0
    %3938 = vmatpush1.msra.mxu0 0.0
    %3939 = vmatprep.subr.mxu0 0.0
    %3940 = vmatpush1.msra.mxu0 0.0
    %3941 = vmatprep.subr.mxu0 0.0
    %3942 = vmatpush1.msra.mxu0 0.0
    %3943 = vmatprep.subr.mxu0 0.0
    %3944 = vmatpush1.msra.mxu0 0.0
    %3945 = vmatprep.subr.mxu0 0.0
    %3946 = vmatpush1.msra.mxu0 0.0
    %3947 = vmatprep.subr.mxu0 0.0
    %3948 = vmatpush1.msra.mxu0 0.0
    %3949 = vmatprep.subr.mxu0 0.0
    %3950 = vmatpush1.msra.mxu0 0.0
    %3951 = vmatprep.subr.mxu0 0.0
    %3952 = vmatpush1.msra.mxu0 0.0
    %3953 = vmatprep.subr.mxu0 0.0
    %3954 = vmatpush1.msra.mxu0 0.0
    %3955 = vmatprep.subr.mxu0 0.0
    %3956 = vmatpush1.msra.mxu0 0.0
    %3957 = vmatprep.subr.mxu0 0.0
    %3958 = vmatpush1.msra.mxu0 0.0
    %3959 = vmatprep.subr.mxu0 0.0
    %3960 = vmatpush1.msra.mxu0 0.0
    %3961 = vmatprep.subr.mxu0 0.0
    %3962 = vmatpush1.msra.mxu0 0.0
    %3963 = vmatprep.mubr.f32.mxu0 0.0
    %3964 = vmatmul.mubr.f32.gmra.mrb[0].mxu0 %v3888
    %v3965 = vpop.f32.mrb[0].mxu0
    %v3966 = vadd.f32 0.0, %v3965
    %v3967 = vpop.f32.mrb[0].mxu0
    %3968 = vmatprep.mubr.f32.mxu0 0.0
    %3969 = vmatmul.mubr.f32.gmra.mrb[0].mxu0 %v3891
    %v3970 = vpop.f32.mrb[0].mxu0
    %v3971 = vadd.f32 0.0, %v3970
    %v3972 = vpop.f32.mrb[0].mxu0
    %3973 = vmatprep.mubr.f32.mxu0 0.0
    %3974 = vmatmul.mubr.f32.gmra.mrb[0].mxu0 %v3894
    %v3975 = vpop.f32.mrb[0].mxu0
    %v3976 = vadd.f32 0.0, %v3975
    %v3977 = vpop.f32.mrb[0].mxu0
    %3978 = vmatprep.mubr.f32.mxu0 0.0
    %3979 = vmatmul.mubr.f32.gmra.mrb[0].mxu0 %v3897
    %v3980 = vpop.f32.mrb[0].mxu0
    %v3981 = vadd.f32 0.0, %v3980
    %v3982 = vpop.f32.mrb[0].mxu0
    %3983 = vdwg.mxu0
    %3984 = vxpose.xlu0.b32.start [1/16] %v104, 128
    %3985 = vxpose.xlu0.b32.cont [2/16] %v105, 128
    %3986 = vxpose.xlu0.b32.cont [3/16] %v106, 128
    %3987 = vxpose.xlu0.b32.cont [4/16] %v107, 128
    %3988 = vxpose.xlu0.b32.cont [5/16] 0.0, 128
    %3989 = vxpose.xlu0.b32.cont [6/16] 0.0, 128
    %3990 = vxpose.xlu0.b32.cont [7/16] 0.0, 128
    %3991 = vxpose.xlu0.b32.cont [8/16] 0.0, 128
    %3992 = vxpose.xlu0.b32.cont [9/16] 0.0, 128
    %3993 = vxpose.xlu0.b32.cont [10/16] 0.0, 128
    %3994 = vxpose.xlu0.b32.cont [11/16] 0.0, 128
    %3995 = vxpose.xlu0.b32.cont [12/16] 0.0, 128
    %3996 = vxpose.xlu0.b32.cont [13/16] 0.0, 128
    %3997 = vxpose.xlu0.b32.cont [14/16] 0.0, 128
    %3998 = vxpose.xlu0.b32.cont [15/16] 0.0, 128
    %3999 = vxpose.xlu0.b32.end [16/16] 0.0, 128
    %v4000 = vpop.trf.xlu0
    %v4001 = vpop.trf.xlu0
    %v4002 = vpop.trf.xlu0
    %v4003 = vpop.trf.xlu0
    %v4004 = vpop.trf.xlu0
    %v4005 = vpop.trf.xlu0
    %v4006 = vpop.trf.xlu0
    %v4007 = vpop.trf.xlu0
    %v4008 = vpop.trf.xlu0
    %v4009 = vpop.trf.xlu0
    %v4010 = vpop.trf.xlu0
    %v4011 = vpop.trf.xlu0
    %v4012 = vpop.trf.xlu0
    %v4013 = vpop.trf.xlu0
    %v4014 = vpop.trf.xlu0
    %v4015 = vpop.trf.xlu0
    %v4017 = vsel %vm2596, %v4000, 0
    %v4020 = vsel %vm2596, %v4001, 0
    %v4023 = vsel %vm2596, %v4002, 0
    %v4026 = vsel %vm2596, %v4003, 0
    %4028 = vmatprep.subr.mxu0 0.0
    %4029 = vmatpush1.msra.mxu0 %v2151
    %4030 = vmatprep.subr.mxu0 0.0
    %4031 = vmatpush1.msra.mxu0 %v2287
    %4032 = vmatprep.subr.mxu0 0.0
    %4033 = vmatpush1.msra.mxu0 %v2423
    %4034 = vmatprep.subr.mxu0 0.0
    %4035 = vmatpush1.msra.mxu0 %v2559
    %4036 = vmatprep.subr.mxu0 0.0
    %4037 = vmatpush1.msra.mxu0 0.0
    %4038 = vmatprep.subr.mxu0 0.0
    %4039 = vmatpush1.msra.mxu0 0.0
    %4040 = vmatprep.subr.mxu0 0.0
    %4041 = vmatpush1.msra.mxu0 0.0
    %4042 = vmatprep.subr.mxu0 0.0
    %4043 = vmatpush1.msra.mxu0 0.0
    %4044 = vmatprep.subr.mxu0 0.0
    %4045 = vmatpush1.msra.mxu0 0.0
    %4046 = vmatprep.subr.mxu0 0.0
    %4047 = vmatpush1.msra.mxu0 0.0
    %4048 = vmatprep.subr.mxu0 0.0
    %4049 = vmatpush1.msra.mxu0 0.0
    %4050 = vmatprep.subr.mxu0 0.0
    %4051 = vmatpush1.msra.mxu0 0.0
    %4052 = vmatprep.subr.mxu0 0.0
    %4053 = vmatpush1.msra.mxu0 0.0
    %4054 = vmatprep.subr.mxu0 0.0
    %4055 = vmatpush1.msra.mxu0 0.0
    %4056 = vmatprep.subr.mxu0 0.0
    %4057 = vmatpush1.msra.mxu0 0.0
    %4058 = vmatprep.subr.mxu0 0.0
    %4059 = vmatpush1.msra.mxu0 0.0
    %4060 = vmatprep.subr.mxu0 0.0
    %4061 = vmatpush1.msra.mxu0 0.0
    %4062 = vmatprep.subr.mxu0 0.0
    %4063 = vmatpush1.msra.mxu0 0.0
    %4064 = vmatprep.subr.mxu0 0.0
    %4065 = vmatpush1.msra.mxu0 0.0
    %4066 = vmatprep.subr.mxu0 0.0
    %4067 = vmatpush1.msra.mxu0 0.0
    %4068 = vmatprep.subr.mxu0 0.0
    %4069 = vmatpush1.msra.mxu0 0.0
    %4070 = vmatprep.subr.mxu0 0.0
    %4071 = vmatpush1.msra.mxu0 0.0
    %4072 = vmatprep.subr.mxu0 0.0
    %4073 = vmatpush1.msra.mxu0 0.0
    %4074 = vmatprep.subr.mxu0 0.0
    %4075 = vmatpush1.msra.mxu0 0.0
    %4076 = vmatprep.subr.mxu0 0.0
    %4077 = vmatpush1.msra.mxu0 0.0
    %4078 = vmatprep.subr.mxu0 0.0
    %4079 = vmatpush1.msra.mxu0 0.0
    %4080 = vmatprep.subr.mxu0 0.0
    %4081 = vmatpush1.msra.mxu0 0.0
    %4082 = vmatprep.subr.mxu0 0.0
    %4083 = vmatpush1.msra.mxu0 0.0
    %4084 = vmatprep.subr.mxu0 0.0
    %4085 = vmatpush1.msra.mxu0 0.0
    %4086 = vmatprep.subr.mxu0 0.0
    %4087 = vmatpush1.msra.mxu0 0.0
    %4088 = vmatprep.subr.mxu0 0.0
    %4089 = vmatpush1.msra.mxu0 0.0
    %4090 = vmatprep.subr.mxu0 0.0
    %4091 = vmatpush1.msra.mxu0 0.0
    %4092 = vmatprep.mubr.f32.mxu0 0.0
    %4093 = vmatmul.mubr.f32.gmra.mrb[0].mxu0 %v4017
    %v4094 = vpop.f32.mrb[0].mxu0
    %v4095 = vadd.f32 0.0, %v4094
    %v4096 = vpop.f32.mrb[0].mxu0
    %4097 = vmatprep.mubr.f32.mxu0 0.0
    %4098 = vmatmul.mubr.f32.gmra.mrb[0].mxu0 %v4020
    %v4099 = vpop.f32.mrb[0].mxu0
    %v4100 = vadd.f32 0.0, %v4099
    %v4101 = vpop.f32.mrb[0].mxu0
    %4102 = vmatprep.mubr.f32.mxu0 0.0
    %4103 = vmatmul.mubr.f32.gmra.mrb[0].mxu0 %v4023
    %v4104 = vpop.f32.mrb[0].mxu0
    %v4105 = vadd.f32 0.0, %v4104
    %v4106 = vpop.f32.mrb[0].mxu0
    %4107 = vmatprep.mubr.f32.mxu0 0.0
    %4108 = vmatmul.mubr.f32.gmra.mrb[0].mxu0 %v4026
    %v4109 = vpop.f32.mrb[0].mxu0
    %v4110 = vadd.f32 0.0, %v4109
    %v4111 = vpop.f32.mrb[0].mxu0
    %4112 = vdwg.mxu0
    %4113 = vxpose.xlu0.b32.start [1/16] %v108, 128
    %4114 = vxpose.xlu0.b32.cont [2/16] %v109, 128
    %4115 = vxpose.xlu0.b32.cont [3/16] %v110, 128
    %4116 = vxpose.xlu0.b32.cont [4/16] %v111, 128
    %4117 = vxpose.xlu0.b32.cont [5/16] 0.0, 128
    %4118 = vxpose.xlu0.b32.cont [6/16] 0.0, 128
    %4119 = vxpose.xlu0.b32.cont [7/16] 0.0, 128
    %4120 = vxpose.xlu0.b32.cont [8/16] 0.0, 128
    %4121 = vxpose.xlu0.b32.cont [9/16] 0.0, 128
    %4122 = vxpose.xlu0.b32.cont [10/16] 0.0, 128
    %4123 = vxpose.xlu0.b32.cont [11/16] 0.0, 128
    %4124 = vxpose.xlu0.b32.cont [12/16] 0.0, 128
    %4125 = vxpose.xlu0.b32.cont [13/16] 0.0, 128
    %4126 = vxpose.xlu0.b32.cont [14/16] 0.0, 128
    %4127 = vxpose.xlu0.b32.cont [15/16] 0.0, 128
    %4128 = vxpose.xlu0.b32.end [16/16] 0.0, 128
    %v4129 = vpop.trf.xlu0
    %v4130 = vpop.trf.xlu0
    %v4131 = vpop.trf.xlu0
    %v4132 = vpop.trf.xlu0
    %v4133 = vpop.trf.xlu0
    %v4134 = vpop.trf.xlu0
    %v4135 = vpop.trf.xlu0
    %v4136 = vpop.trf.xlu0
    %v4137 = vpop.trf.xlu0
    %v4138 = vpop.trf.xlu0
    %v4139 = vpop.trf.xlu0
    %v4140 = vpop.trf.xlu0
    %v4141 = vpop.trf.xlu0
    %v4142 = vpop.trf.xlu0
    %v4143 = vpop.trf.xlu0
    %v4144 = vpop.trf.xlu0
    %v4146 = vsel %vm2596, %v4129, 0
    %v4149 = vsel %vm2596, %v4130, 0
    %v4152 = vsel %vm2596, %v4131, 0
    %v4155 = vsel %vm2596, %v4132, 0
    %4157 = vmatprep.subr.mxu0 0.0
    %4158 = vmatpush1.msra.mxu0 %v2152
    %4159 = vmatprep.subr.mxu0 0.0
    %4160 = vmatpush1.msra.mxu0 %v2288
    %4161 = vmatprep.subr.mxu0 0.0
    %4162 = vmatpush1.msra.mxu0 %v2424
    %4163 = vmatprep.subr.mxu0 0.0
    %4164 = vmatpush1.msra.mxu0 %v2560
    %4165 = vmatprep.subr.mxu0 0.0
    %4166 = vmatpush1.msra.mxu0 0.0
    %4167 = vmatprep.subr.mxu0 0.0
    %4168 = vmatpush1.msra.mxu0 0.0
    %4169 = vmatprep.subr.mxu0 0.0
    %4170 = vmatpush1.msra.mxu0 0.0
    %4171 = vmatprep.subr.mxu0 0.0
    %4172 = vmatpush1.msra.mxu0 0.0
    %4173 = vmatprep.subr.mxu0 0.0
    %4174 = vmatpush1.msra.mxu0 0.0
    %4175 = vmatprep.subr.mxu0 0.0
    %4176 = vmatpush1.msra.mxu0 0.0
    %4177 = vmatprep.subr.mxu0 0.0
    %4178 = vmatpush1.msra.mxu0 0.0
    %4179 = vmatprep.subr.mxu0 0.0
    %4180 = vmatpush1.msra.mxu0 0.0
    %4181 = vmatprep.subr.mxu0 0.0
    %4182 = vmatpush1.msra.mxu0 0.0
    %4183 = vmatprep.subr.mxu0 0.0
    %4184 = vmatpush1.msra.mxu0 0.0
    %4185 = vmatprep.subr.mxu0 0.0
    %4186 = vmatpush1.msra.mxu0 0.0
    %4187 = vmatprep.subr.mxu0 0.0
    %4188 = vmatpush1.msra.mxu0 0.0
    %4189 = vmatprep.subr.mxu0 0.0
    %4190 = vmatpush1.msra.mxu0 0.0
    %4191 = vmatprep.subr.mxu0 0.0
    %4192 = vmatpush1.msra.mxu0 0.0
    %4193 = vmatprep.subr.mxu0 0.0
    %4194 = vmatpush1.msra.mxu0 0.0
    %4195 = vmatprep.subr.mxu0 0.0
    %4196 = vmatpush1.msra.mxu0 0.0
    %4197 = vmatprep.subr.mxu0 0.0
    %4198 = vmatpush1.msra.mxu0 0.0
    %4199 = vmatprep.subr.mxu0 0.0
    %4200 = vmatpush1.msra.mxu0 0.0
    %4201 = vmatprep.subr.mxu0 0.0
    %4202 = vmatpush1.msra.mxu0 0.0
    %4203 = vmatprep.subr.mxu0 0.0
    %4204 = vmatpush1.msra.mxu0 0.0
    %4205 = vmatprep.subr.mxu0 0.0
    %4206 = vmatpush1.msra.mxu0 0.0
    %4207 = vmatprep.subr.mxu0 0.0
    %4208 = vmatpush1.msra.mxu0 0.0
    %4209 = vmatprep.subr.mxu0 0.0
    %4210 = vmatpush1.msra.mxu0 0.0
    %4211 = vmatprep.subr.mxu0 0.0
    %4212 = vmatpush1.msra.mxu0 0.0
    %4213 = vmatprep.subr.mxu0 0.0
    %4214 = vmatpush1.msra.mxu0 0.0
    %4215 = vmatprep.subr.mxu0 0.0
    %4216 = vmatpush1.msra.mxu0 0.0
    %4217 = vmatprep.subr.mxu0 0.0
    %4218 = vmatpush1.msra.mxu0 0.0
    %4219 = vmatprep.subr.mxu0 0.0
    %4220 = vmatpush1.msra.mxu0 0.0
    %4221 = vmatprep.mubr.f32.mxu0 0.0
    %4222 = vmatmul.mubr.f32.gmra.mrb[0].mxu0 %v4146
    %v4223 = vpop.f32.mrb[0].mxu0
    %v4224 = vadd.f32 0.0, %v4223
    %v4225 = vpop.f32.mrb[0].mxu0
    %4226 = vmatprep.mubr.f32.mxu0 0.0
    %4227 = vmatmul.mubr.f32.gmra.mrb[0].mxu0 %v4149
    %v4228 = vpop.f32.mrb[0].mxu0
    %v4229 = vadd.f32 0.0, %v4228
    %v4230 = vpop.f32.mrb[0].mxu0
    %4231 = vmatprep.mubr.f32.mxu0 0.0
    %4232 = vmatmul.mubr.f32.gmra.mrb[0].mxu0 %v4152
    %v4233 = vpop.f32.mrb[0].mxu0
    %v4234 = vadd.f32 0.0, %v4233
    %v4235 = vpop.f32.mrb[0].mxu0
    %4236 = vmatprep.mubr.f32.mxu0 0.0
    %4237 = vmatmul.mubr.f32.gmra.mrb[0].mxu0 %v4155
    %v4238 = vpop.f32.mrb[0].mxu0
    %v4239 = vadd.f32 0.0, %v4238
    %v4240 = vpop.f32.mrb[0].mxu0
    %4241 = vdwg.mxu0
    %4242 = vxpose.xlu0.b32.start [1/16] %v112, 128
    %4243 = vxpose.xlu0.b32.cont [2/16] %v113, 128
    %4244 = vxpose.xlu0.b32.cont [3/16] %v114, 128
    %4245 = vxpose.xlu0.b32.cont [4/16] %v115, 128
    %4246 = vxpose.xlu0.b32.cont [5/16] 0.0, 128
    %4247 = vxpose.xlu0.b32.cont [6/16] 0.0, 128
    %4248 = vxpose.xlu0.b32.cont [7/16] 0.0, 128
    %4249 = vxpose.xlu0.b32.cont [8/16] 0.0, 128
    %4250 = vxpose.xlu0.b32.cont [9/16] 0.0, 128
    %4251 = vxpose.xlu0.b32.cont [10/16] 0.0, 128
    %4252 = vxpose.xlu0.b32.cont [11/16] 0.0, 128
    %4253 = vxpose.xlu0.b32.cont [12/16] 0.0, 128
    %4254 = vxpose.xlu0.b32.cont [13/16] 0.0, 128
    %4255 = vxpose.xlu0.b32.cont [14/16] 0.0, 128
    %4256 = vxpose.xlu0.b32.cont [15/16] 0.0, 128
    %4257 = vxpose.xlu0.b32.end [16/16] 0.0, 128
    %v4258 = vpop.trf.xlu0
    %v4259 = vpop.trf.xlu0
    %v4260 = vpop.trf.xlu0
    %v4261 = vpop.trf.xlu0
    %v4262 = vpop.trf.xlu0
    %v4263 = vpop.trf.xlu0
    %v4264 = vpop.trf.xlu0
    %v4265 = vpop.trf.xlu0
    %v4266 = vpop.trf.xlu0
    %v4267 = vpop.trf.xlu0
    %v4268 = vpop.trf.xlu0
    %v4269 = vpop.trf.xlu0
    %v4270 = vpop.trf.xlu0
    %v4271 = vpop.trf.xlu0
    %v4272 = vpop.trf.xlu0
    %v4273 = vpop.trf.xlu0
    %v4275 = vsel %vm2596, %v4258, 0
    %v4278 = vsel %vm2596, %v4259, 0
    %v4281 = vsel %vm2596, %v4260, 0
    %v4284 = vsel %vm2596, %v4261, 0
    %4286 = vmatprep.subr.mxu0 0.0
    %4287 = vmatpush1.msra.mxu0 %v2153
    %4288 = vmatprep.subr.mxu0 0.0
    %4289 = vmatpush1.msra.mxu0 %v2289
    %4290 = vmatprep.subr.mxu0 0.0
    %4291 = vmatpush1.msra.mxu0 %v2425
    %4292 = vmatprep.subr.mxu0 0.0
    %4293 = vmatpush1.msra.mxu0 %v2561
    %4294 = vmatprep.subr.mxu0 0.0
    %4295 = vmatpush1.msra.mxu0 0.0
    %4296 = vmatprep.subr.mxu0 0.0
    %4297 = vmatpush1.msra.mxu0 0.0
    %4298 = vmatprep.subr.mxu0 0.0
    %4299 = vmatpush1.msra.mxu0 0.0
    %4300 = vmatprep.subr.mxu0 0.0
    %4301 = vmatpush1.msra.mxu0 0.0
    %4302 = vmatprep.subr.mxu0 0.0
    %4303 = vmatpush1.msra.mxu0 0.0
    %4304 = vmatprep.subr.mxu0 0.0
    %4305 = vmatpush1.msra.mxu0 0.0
    %4306 = vmatprep.subr.mxu0 0.0
    %4307 = vmatpush1.msra.mxu0 0.0
    %4308 = vmatprep.subr.mxu0 0.0
    %4309 = vmatpush1.msra.mxu0 0.0
    %4310 = vmatprep.subr.mxu0 0.0
    %4311 = vmatpush1.msra.mxu0 0.0
    %4312 = vmatprep.subr.mxu0 0.0
    %4313 = vmatpush1.msra.mxu0 0.0
    %4314 = vmatprep.subr.mxu0 0.0
    %4315 = vmatpush1.msra.mxu0 0.0
    %4316 = vmatprep.subr.mxu0 0.0
    %4317 = vmatpush1.msra.mxu0 0.0
    %4318 = vmatprep.subr.mxu0 0.0
    %4319 = vmatpush1.msra.mxu0 0.0
    %4320 = vmatprep.subr.mxu0 0.0
    %4321 = vmatpush1.msra.mxu0 0.0
    %4322 = vmatprep.subr.mxu0 0.0
    %4323 = vmatpush1.msra.mxu0 0.0
    %4324 = vmatprep.subr.mxu0 0.0
    %4325 = vmatpush1.msra.mxu0 0.0
    %4326 = vmatprep.subr.mxu0 0.0
    %4327 = vmatpush1.msra.mxu0 0.0
    %4328 = vmatprep.subr.mxu0 0.0
    %4329 = vmatpush1.msra.mxu0 0.0
    %4330 = vmatprep.subr.mxu0 0.0
    %4331 = vmatpush1.msra.mxu0 0.0
    %4332 = vmatprep.subr.mxu0 0.0
    %4333 = vmatpush1.msra.mxu0 0.0
    %4334 = vmatprep.subr.mxu0 0.0
    %4335 = vmatpush1.msra.mxu0 0.0
    %4336 = vmatprep.subr.mxu0 0.0
    %4337 = vmatpush1.msra.mxu0 0.0
    %4338 = vmatprep.subr.mxu0 0.0
    %4339 = vmatpush1.msra.mxu0 0.0
    %4340 = vmatprep.subr.mxu0 0.0
    %4341 = vmatpush1.msra.mxu0 0.0
    %4342 = vmatprep.subr.mxu0 0.0
    %4343 = vmatpush1.msra.mxu0 0.0
    %4344 = vmatprep.subr.mxu0 0.0
    %4345 = vmatpush1.msra.mxu0 0.0
    %4346 = vmatprep.subr.mxu0 0.0
    %4347 = vmatpush1.msra.mxu0 0.0
    %4348 = vmatprep.subr.mxu0 0.0
    %4349 = vmatpush1.msra.mxu0 0.0
    %4350 = vmatprep.mubr.f32.mxu0 0.0
    %4351 = vmatmul.mubr.f32.gmra.mrb[0].mxu0 %v4275
    %v4352 = vpop.f32.mrb[0].mxu0
    %v4353 = vadd.f32 0.0, %v4352
    %v4354 = vpop.f32.mrb[0].mxu0
    %4355 = vmatprep.mubr.f32.mxu0 0.0
    %4356 = vmatmul.mubr.f32.gmra.mrb[0].mxu0 %v4278
    %v4357 = vpop.f32.mrb[0].mxu0
    %v4358 = vadd.f32 0.0, %v4357
    %v4359 = vpop.f32.mrb[0].mxu0
    %4360 = vmatprep.mubr.f32.mxu0 0.0
    %4361 = vmatmul.mubr.f32.gmra.mrb[0].mxu0 %v4281
    %v4362 = vpop.f32.mrb[0].mxu0
    %v4363 = vadd.f32 0.0, %v4362
    %v4364 = vpop.f32.mrb[0].mxu0
    %4365 = vmatprep.mubr.f32.mxu0 0.0
    %4366 = vmatmul.mubr.f32.gmra.mrb[0].mxu0 %v4284
    %v4367 = vpop.f32.mrb[0].mxu0
    %v4368 = vadd.f32 0.0, %v4367
    %v4369 = vpop.f32.mrb[0].mxu0
    %4370 = vdwg.mxu0
    %4371 = vxpose.xlu0.b32.start [1/16] %v116, 128
    %4372 = vxpose.xlu0.b32.cont [2/16] %v117, 128
    %4373 = vxpose.xlu0.b32.cont [3/16] %v118, 128
    %4374 = vxpose.xlu0.b32.cont [4/16] %v119, 128
    %4375 = vxpose.xlu0.b32.cont [5/16] 0.0, 128
    %4376 = vxpose.xlu0.b32.cont [6/16] 0.0, 128
    %4377 = vxpose.xlu0.b32.cont [7/16] 0.0, 128
    %4378 = vxpose.xlu0.b32.cont [8/16] 0.0, 128
    %4379 = vxpose.xlu0.b32.cont [9/16] 0.0, 128
    %4380 = vxpose.xlu0.b32.cont [10/16] 0.0, 128
    %4381 = vxpose.xlu0.b32.cont [11/16] 0.0, 128
    %4382 = vxpose.xlu0.b32.cont [12/16] 0.0, 128
    %4383 = vxpose.xlu0.b32.cont [13/16] 0.0, 128
    %4384 = vxpose.xlu0.b32.cont [14/16] 0.0, 128
    %4385 = vxpose.xlu0.b32.cont [15/16] 0.0, 128
    %4386 = vxpose.xlu0.b32.end [16/16] 0.0, 128
    %v4387 = vpop.trf.xlu0
    %v4388 = vpop.trf.xlu0
    %v4389 = vpop.trf.xlu0
    %v4390 = vpop.trf.xlu0
    %v4391 = vpop.trf.xlu0
    %v4392 = vpop.trf.xlu0
    %v4393 = vpop.trf.xlu0
    %v4394 = vpop.trf.xlu0
    %v4395 = vpop.trf.xlu0
    %v4396 = vpop.trf.xlu0
    %v4397 = vpop.trf.xlu0
    %v4398 = vpop.trf.xlu0
    %v4399 = vpop.trf.xlu0
    %v4400 = vpop.trf.xlu0
    %v4401 = vpop.trf.xlu0
    %v4402 = vpop.trf.xlu0
    %v4404 = vsel %vm2596, %v4387, 0
    %v4407 = vsel %vm2596, %v4388, 0
    %v4410 = vsel %vm2596, %v4389, 0
    %v4413 = vsel %vm2596, %v4390, 0
    %4415 = vmatprep.subr.mxu0 0.0
    %4416 = vmatpush1.msra.mxu0 %v2154
    %4417 = vmatprep.subr.mxu0 0.0
    %4418 = vmatpush1.msra.mxu0 %v2290
    %4419 = vmatprep.subr.mxu0 0.0
    %4420 = vmatpush1.msra.mxu0 %v2426
    %4421 = vmatprep.subr.mxu0 0.0
    %4422 = vmatpush1.msra.mxu0 %v2562
    %4423 = vmatprep.subr.mxu0 0.0
    %4424 = vmatpush1.msra.mxu0 0.0
    %4425 = vmatprep.subr.mxu0 0.0
    %4426 = vmatpush1.msra.mxu0 0.0
    %4427 = vmatprep.subr.mxu0 0.0
    %4428 = vmatpush1.msra.mxu0 0.0
    %4429 = vmatprep.subr.mxu0 0.0
    %4430 = vmatpush1.msra.mxu0 0.0
    %4431 = vmatprep.subr.mxu0 0.0
    %4432 = vmatpush1.msra.mxu0 0.0
    %4433 = vmatprep.subr.mxu0 0.0
    %4434 = vmatpush1.msra.mxu0 0.0
    %4435 = vmatprep.subr.mxu0 0.0
    %4436 = vmatpush1.msra.mxu0 0.0
    %4437 = vmatprep.subr.mxu0 0.0
    %4438 = vmatpush1.msra.mxu0 0.0
    %4439 = vmatprep.subr.mxu0 0.0
    %4440 = vmatpush1.msra.mxu0 0.0
    %4441 = vmatprep.subr.mxu0 0.0
    %4442 = vmatpush1.msra.mxu0 0.0
    %4443 = vmatprep.subr.mxu0 0.0
    %4444 = vmatpush1.msra.mxu0 0.0
    %4445 = vmatprep.subr.mxu0 0.0
    %4446 = vmatpush1.msra.mxu0 0.0
    %4447 = vmatprep.subr.mxu0 0.0
    %4448 = vmatpush1.msra.mxu0 0.0
    %4449 = vmatprep.subr.mxu0 0.0
    %4450 = vmatpush1.msra.mxu0 0.0
    %4451 = vmatprep.subr.mxu0 0.0
    %4452 = vmatpush1.msra.mxu0 0.0
    %4453 = vmatprep.subr.mxu0 0.0
    %4454 = vmatpush1.msra.mxu0 0.0
    %4455 = vmatprep.subr.mxu0 0.0
    %4456 = vmatpush1.msra.mxu0 0.0
    %4457 = vmatprep.subr.mxu0 0.0
    %4458 = vmatpush1.msra.mxu0 0.0
    %4459 = vmatprep.subr.mxu0 0.0
    %4460 = vmatpush1.msra.mxu0 0.0
    %4461 = vmatprep.subr.mxu0 0.0
    %4462 = vmatpush1.msra.mxu0 0.0
    %4463 = vmatprep.subr.mxu0 0.0
    %4464 = vmatpush1.msra.mxu0 0.0
    %4465 = vmatprep.subr.mxu0 0.0
    %4466 = vmatpush1.msra.mxu0 0.0
    %4467 = vmatprep.subr.mxu0 0.0
    %4468 = vmatpush1.msra.mxu0 0.0
    %4469 = vmatprep.subr.mxu0 0.0
    %4470 = vmatpush1.msra.mxu0 0.0
    %4471 = vmatprep.subr.mxu0 0.0
    %4472 = vmatpush1.msra.mxu0 0.0
    %4473 = vmatprep.subr.mxu0 0.0
    %4474 = vmatpush1.msra.mxu0 0.0
    %4475 = vmatprep.subr.mxu0 0.0
    %4476 = vmatpush1.msra.mxu0 0.0
    %4477 = vmatprep.subr.mxu0 0.0
    %4478 = vmatpush1.msra.mxu0 0.0
    %4479 = vmatprep.mubr.f32.mxu0 0.0
    %4480 = vmatmul.mubr.f32.gmra.mrb[0].mxu0 %v4404
    %v4481 = vpop.f32.mrb[0].mxu0
    %v4482 = vadd.f32 0.0, %v4481
    %v4483 = vpop.f32.mrb[0].mxu0
    %4484 = vmatprep.mubr.f32.mxu0 0.0
    %4485 = vmatmul.mubr.f32.gmra.mrb[0].mxu0 %v4407
    %v4486 = vpop.f32.mrb[0].mxu0
    %v4487 = vadd.f32 0.0, %v4486
    %v4488 = vpop.f32.mrb[0].mxu0
    %4489 = vmatprep.mubr.f32.mxu0 0.0
    %4490 = vmatmul.mubr.f32.gmra.mrb[0].mxu0 %v4410
    %v4491 = vpop.f32.mrb[0].mxu0
    %v4492 = vadd.f32 0.0, %v4491
    %v4493 = vpop.f32.mrb[0].mxu0
    %4494 = vmatprep.mubr.f32.mxu0 0.0
    %4495 = vmatmul.mubr.f32.gmra.mrb[0].mxu0 %v4413
    %v4496 = vpop.f32.mrb[0].mxu0
    %v4497 = vadd.f32 0.0, %v4496
    %v4498 = vpop.f32.mrb[0].mxu0
    %4499 = vdwg.mxu0
    %4500 = vxpose.xlu0.b32.start [1/16] %v120, 128
    %4501 = vxpose.xlu0.b32.cont [2/16] %v121, 128
    %4502 = vxpose.xlu0.b32.cont [3/16] %v122, 128
    %4503 = vxpose.xlu0.b32.cont [4/16] %v123, 128
    %4504 = vxpose.xlu0.b32.cont [5/16] 0.0, 128
    %4505 = vxpose.xlu0.b32.cont [6/16] 0.0, 128
    %4506 = vxpose.xlu0.b32.cont [7/16] 0.0, 128
    %4507 = vxpose.xlu0.b32.cont [8/16] 0.0, 128
    %4508 = vxpose.xlu0.b32.cont [9/16] 0.0, 128
    %4509 = vxpose.xlu0.b32.cont [10/16] 0.0, 128
    %4510 = vxpose.xlu0.b32.cont [11/16] 0.0, 128
    %4511 = vxpose.xlu0.b32.cont [12/16] 0.0, 128
    %4512 = vxpose.xlu0.b32.cont [13/16] 0.0, 128
    %4513 = vxpose.xlu0.b32.cont [14/16] 0.0, 128
    %4514 = vxpose.xlu0.b32.cont [15/16] 0.0, 128
    %4515 = vxpose.xlu0.b32.end [16/16] 0.0, 128
    %v4516 = vpop.trf.xlu0
    %v4517 = vpop.trf.xlu0
    %v4518 = vpop.trf.xlu0
    %v4519 = vpop.trf.xlu0
    %v4520 = vpop.trf.xlu0
    %v4521 = vpop.trf.xlu0
    %v4522 = vpop.trf.xlu0
    %v4523 = vpop.trf.xlu0
    %v4524 = vpop.trf.xlu0
    %v4525 = vpop.trf.xlu0
    %v4526 = vpop.trf.xlu0
    %v4527 = vpop.trf.xlu0
    %v4528 = vpop.trf.xlu0
    %v4529 = vpop.trf.xlu0
    %v4530 = vpop.trf.xlu0
    %v4531 = vpop.trf.xlu0
    %v4533 = vsel %vm2596, %v4516, 0
    %v4536 = vsel %vm2596, %v4517, 0
    %v4539 = vsel %vm2596, %v4518, 0
    %v4542 = vsel %vm2596, %v4519, 0
    %4544 = vmatprep.subr.mxu0 0.0
    %4545 = vmatpush1.msra.mxu0 %v2155
    %4546 = vmatprep.subr.mxu0 0.0
    %4547 = vmatpush1.msra.mxu0 %v2291
    %4548 = vmatprep.subr.mxu0 0.0
    %4549 = vmatpush1.msra.mxu0 %v2427
    %4550 = vmatprep.subr.mxu0 0.0
    %4551 = vmatpush1.msra.mxu0 %v2563
    %4552 = vmatprep.subr.mxu0 0.0
    %4553 = vmatpush1.msra.mxu0 0.0
    %4554 = vmatprep.subr.mxu0 0.0
    %4555 = vmatpush1.msra.mxu0 0.0
    %4556 = vmatprep.subr.mxu0 0.0
    %4557 = vmatpush1.msra.mxu0 0.0
    %4558 = vmatprep.subr.mxu0 0.0
    %4559 = vmatpush1.msra.mxu0 0.0
    %4560 = vmatprep.subr.mxu0 0.0
    %4561 = vmatpush1.msra.mxu0 0.0
    %4562 = vmatprep.subr.mxu0 0.0
    %4563 = vmatpush1.msra.mxu0 0.0
    %4564 = vmatprep.subr.mxu0 0.0
    %4565 = vmatpush1.msra.mxu0 0.0
    %4566 = vmatprep.subr.mxu0 0.0
    %4567 = vmatpush1.msra.mxu0 0.0
    %4568 = vmatprep.subr.mxu0 0.0
    %4569 = vmatpush1.msra.mxu0 0.0
    %4570 = vmatprep.subr.mxu0 0.0
    %4571 = vmatpush1.msra.mxu0 0.0
    %4572 = vmatprep.subr.mxu0 0.0
    %4573 = vmatpush1.msra.mxu0 0.0
    %4574 = vmatprep.subr.mxu0 0.0
    %4575 = vmatpush1.msra.mxu0 0.0
    %4576 = vmatprep.subr.mxu0 0.0
    %4577 = vmatpush1.msra.mxu0 0.0
    %4578 = vmatprep.subr.mxu0 0.0
    %4579 = vmatpush1.msra.mxu0 0.0
    %4580 = vmatprep.subr.mxu0 0.0
    %4581 = vmatpush1.msra.mxu0 0.0
    %4582 = vmatprep.subr.mxu0 0.0
    %4583 = vmatpush1.msra.mxu0 0.0
    %4584 = vmatprep.subr.mxu0 0.0
    %4585 = vmatpush1.msra.mxu0 0.0
    %4586 = vmatprep.subr.mxu0 0.0
    %4587 = vmatpush1.msra.mxu0 0.0
    %4588 = vmatprep.subr.mxu0 0.0
    %4589 = vmatpush1.msra.mxu0 0.0
    %4590 = vmatprep.subr.mxu0 0.0
    %4591 = vmatpush1.msra.mxu0 0.0
    %4592 = vmatprep.subr.mxu0 0.0
    %4593 = vmatpush1.msra.mxu0 0.0
    %4594 = vmatprep.subr.mxu0 0.0
    %4595 = vmatpush1.msra.mxu0 0.0
    %4596 = vmatprep.subr.mxu0 0.0
    %4597 = vmatpush1.msra.mxu0 0.0
    %4598 = vmatprep.subr.mxu0 0.0
    %4599 = vmatpush1.msra.mxu0 0.0
    %4600 = vmatprep.subr.mxu0 0.0
    %4601 = vmatpush1.msra.mxu0 0.0
    %4602 = vmatprep.subr.mxu0 0.0
    %4603 = vmatpush1.msra.mxu0 0.0
    %4604 = vmatprep.subr.mxu0 0.0
    %4605 = vmatpush1.msra.mxu0 0.0
    %4606 = vmatprep.subr.mxu0 0.0
    %4607 = vmatpush1.msra.mxu0 0.0
    %4608 = vmatprep.mubr.f32.mxu0 0.0
    %4609 = vmatmul.mubr.f32.gmra.mrb[0].mxu0 %v4533
    %v4610 = vpop.f32.mrb[0].mxu0
    %v4611 = vadd.f32 0.0, %v4610
    %v4612 = vpop.f32.mrb[0].mxu0
    %4613 = vmatprep.mubr.f32.mxu0 0.0
    %4614 = vmatmul.mubr.f32.gmra.mrb[0].mxu0 %v4536
    %v4615 = vpop.f32.mrb[0].mxu0
    %v4616 = vadd.f32 0.0, %v4615
    %v4617 = vpop.f32.mrb[0].mxu0
    %4618 = vmatprep.mubr.f32.mxu0 0.0
    %4619 = vmatmul.mubr.f32.gmra.mrb[0].mxu0 %v4539
    %v4620 = vpop.f32.mrb[0].mxu0
    %v4621 = vadd.f32 0.0, %v4620
    %v4622 = vpop.f32.mrb[0].mxu0
    %4623 = vmatprep.mubr.f32.mxu0 0.0
    %4624 = vmatmul.mubr.f32.gmra.mrb[0].mxu0 %v4542
    %v4625 = vpop.f32.mrb[0].mxu0
    %v4626 = vadd.f32 0.0, %v4625
    %v4627 = vpop.f32.mrb[0].mxu0
    %4628 = vdwg.mxu0
    %4629 = vxpose.xlu0.b32.start [1/16] %v2676, 128
    %4630 = vxpose.xlu0.b32.cont [2/16] %v2681, 128
    %4631 = vxpose.xlu0.b32.cont [3/16] %v2686, 128
    %4632 = vxpose.xlu0.b32.cont [4/16] %v2691, 128
    %4633 = vxpose.xlu0.b32.cont [5/16] 0.0, 128
    %4634 = vxpose.xlu0.b32.cont [6/16] 0.0, 128
    %4635 = vxpose.xlu0.b32.cont [7/16] 0.0, 128
    %4636 = vxpose.xlu0.b32.cont [8/16] 0.0, 128
    %4637 = vxpose.xlu0.b32.cont [9/16] 0.0, 128
    %4638 = vxpose.xlu0.b32.cont [10/16] 0.0, 128
    %4639 = vxpose.xlu0.b32.cont [11/16] 0.0, 128
    %4640 = vxpose.xlu0.b32.cont [12/16] 0.0, 128
    %4641 = vxpose.xlu0.b32.cont [13/16] 0.0, 128
    %4642 = vxpose.xlu0.b32.cont [14/16] 0.0, 128
    %4643 = vxpose.xlu0.b32.cont [15/16] 0.0, 128
    %4644 = vxpose.xlu0.b32.end [16/16] 0.0, 128
    %v4645 = vpop.trf.xlu0
    %v4646 = vpop.trf.xlu0
    %v4647 = vpop.trf.xlu0
    %v4648 = vpop.trf.xlu0
    %v4649 = vpop.trf.xlu0
    %v4650 = vpop.trf.xlu0
    %v4651 = vpop.trf.xlu0
    %v4652 = vpop.trf.xlu0
    %v4653 = vpop.trf.xlu0
    %v4654 = vpop.trf.xlu0
    %v4655 = vpop.trf.xlu0
    %v4656 = vpop.trf.xlu0
    %v4657 = vpop.trf.xlu0
    %v4658 = vpop.trf.xlu0
    %v4659 = vpop.trf.xlu0
    %v4660 = vpop.trf.xlu0
    %4661 = vxpose.xlu0.b32.start [1/16] %v2805, 128
    %4662 = vxpose.xlu0.b32.cont [2/16] %v2810, 128
    %4663 = vxpose.xlu0.b32.cont [3/16] %v2815, 128
    %4664 = vxpose.xlu0.b32.cont [4/16] %v2820, 128
    %4665 = vxpose.xlu0.b32.cont [5/16] 0.0, 128
    %4666 = vxpose.xlu0.b32.cont [6/16] 0.0, 128
    %4667 = vxpose.xlu0.b32.cont [7/16] 0.0, 128
    %4668 = vxpose.xlu0.b32.cont [8/16] 0.0, 128
    %4669 = vxpose.xlu0.b32.cont [9/16] 0.0, 128
    %4670 = vxpose.xlu0.b32.cont [10/16] 0.0, 128
    %4671 = vxpose.xlu0.b32.cont [11/16] 0.0, 128
    %4672 = vxpose.xlu0.b32.cont [12/16] 0.0, 128
    %4673 = vxpose.xlu0.b32.cont [13/16] 0.0, 128
    %4674 = vxpose.xlu0.b32.cont [14/16] 0.0, 128
    %4675 = vxpose.xlu0.b32.cont [15/16] 0.0, 128
    %4676 = vxpose.xlu0.b32.end [16/16] 0.0, 128
    %v4677 = vpop.trf.xlu0
    %v4678 = vpop.trf.xlu0
    %v4679 = vpop.trf.xlu0
    %v4680 = vpop.trf.xlu0
    %v4681 = vpop.trf.xlu0
    %v4682 = vpop.trf.xlu0
    %v4683 = vpop.trf.xlu0
    %v4684 = vpop.trf.xlu0
    %v4685 = vpop.trf.xlu0
    %v4686 = vpop.trf.xlu0
    %v4687 = vpop.trf.xlu0
    %v4688 = vpop.trf.xlu0
    %v4689 = vpop.trf.xlu0
    %v4690 = vpop.trf.xlu0
    %v4691 = vpop.trf.xlu0
    %v4692 = vpop.trf.xlu0
    %4693 = vxpose.xlu0.b32.start [1/16] %v2934, 128
    %4694 = vxpose.xlu0.b32.cont [2/16] %v2939, 128
    %4695 = vxpose.xlu0.b32.cont [3/16] %v2944, 128
    %4696 = vxpose.xlu0.b32.cont [4/16] %v2949, 128
    %4697 = vxpose.xlu0.b32.cont [5/16] 0.0, 128
    %4698 = vxpose.xlu0.b32.cont [6/16] 0.0, 128
    %4699 = vxpose.xlu0.b32.cont [7/16] 0.0, 128
    %4700 = vxpose.xlu0.b32.cont [8/16] 0.0, 128
    %4701 = vxpose.xlu0.b32.cont [9/16] 0.0, 128
    %4702 = vxpose.xlu0.b32.cont [10/16] 0.0, 128
    %4703 = vxpose.xlu0.b32.cont [11/16] 0.0, 128
    %4704 = vxpose.xlu0.b32.cont [12/16] 0.0, 128
    %4705 = vxpose.xlu0.b32.cont [13/16] 0.0, 128
    %4706 = vxpose.xlu0.b32.cont [14/16] 0.0, 128
    %4707 = vxpose.xlu0.b32.cont [15/16] 0.0, 128
    %4708 = vxpose.xlu0.b32.end [16/16] 0.0, 128
    %v4709 = vpop.trf.xlu0
    %v4710 = vpop.trf.xlu0
    %v4711 = vpop.trf.xlu0
    %v4712 = vpop.trf.xlu0
    %v4713 = vpop.trf.xlu0
    %v4714 = vpop.trf.xlu0
    %v4715 = vpop.trf.xlu0
    %v4716 = vpop.trf.xlu0
    %v4717 = vpop.trf.xlu0
    %v4718 = vpop.trf.xlu0
    %v4719 = vpop.trf.xlu0
    %v4720 = vpop.trf.xlu0
    %v4721 = vpop.trf.xlu0
    %v4722 = vpop.trf.xlu0
    %v4723 = vpop.trf.xlu0
    %v4724 = vpop.trf.xlu0
    %4725 = vxpose.xlu0.b32.start [1/16] %v3063, 128
    %4726 = vxpose.xlu0.b32.cont [2/16] %v3068, 128
    %4727 = vxpose.xlu0.b32.cont [3/16] %v3073, 128
    %4728 = vxpose.xlu0.b32.cont [4/16] %v3078, 128
    %4729 = vxpose.xlu0.b32.cont [5/16] 0.0, 128
    %4730 = vxpose.xlu0.b32.cont [6/16] 0.0, 128
    %4731 = vxpose.xlu0.b32.cont [7/16] 0.0, 128
    %4732 = vxpose.xlu0.b32.cont [8/16] 0.0, 128
    %4733 = vxpose.xlu0.b32.cont [9/16] 0.0, 128
    %4734 = vxpose.xlu0.b32.cont [10/16] 0.0, 128
    %4735 = vxpose.xlu0.b32.cont [11/16] 0.0, 128
    %4736 = vxpose.xlu0.b32.cont [12/16] 0.0, 128
    %4737 = vxpose.xlu0.b32.cont [13/16] 0.0, 128
    %4738 = vxpose.xlu0.b32.cont [14/16] 0.0, 128
    %4739 = vxpose.xlu0.b32.cont [15/16] 0.0, 128
    %4740 = vxpose.xlu0.b32.end [16/16] 0.0, 128
    %v4741 = vpop.trf.xlu0
    %v4742 = vpop.trf.xlu0
    %v4743 = vpop.trf.xlu0
    %v4744 = vpop.trf.xlu0
    %v4745 = vpop.trf.xlu0
    %v4746 = vpop.trf.xlu0
    %v4747 = vpop.trf.xlu0
    %v4748 = vpop.trf.xlu0
    %v4749 = vpop.trf.xlu0
    %v4750 = vpop.trf.xlu0
    %v4751 = vpop.trf.xlu0
    %v4752 = vpop.trf.xlu0
    %v4753 = vpop.trf.xlu0
    %v4754 = vpop.trf.xlu0
    %v4755 = vpop.trf.xlu0
    %v4756 = vpop.trf.xlu0
    %4757 = vxpose.xlu0.b32.start [1/16] %v3192, 128
    %4758 = vxpose.xlu0.b32.cont [2/16] %v3197, 128
    %4759 = vxpose.xlu0.b32.cont [3/16] %v3202, 128
    %4760 = vxpose.xlu0.b32.cont [4/16] %v3207, 128
    %4761 = vxpose.xlu0.b32.cont [5/16] 0.0, 128
    %4762 = vxpose.xlu0.b32.cont [6/16] 0.0, 128
    %4763 = vxpose.xlu0.b32.cont [7/16] 0.0, 128
    %4764 = vxpose.xlu0.b32.cont [8/16] 0.0, 128
    %4765 = vxpose.xlu0.b32.cont [9/16] 0.0, 128
    %4766 = vxpose.xlu0.b32.cont [10/16] 0.0, 128
    %4767 = vxpose.xlu0.b32.cont [11/16] 0.0, 128
    %4768 = vxpose.xlu0.b32.cont [12/16] 0.0, 128
    %4769 = vxpose.xlu0.b32.cont [13/16] 0.0, 128
    %4770 = vxpose.xlu0.b32.cont [14/16] 0.0, 128
    %4771 = vxpose.xlu0.b32.cont [15/16] 0.0, 128
    %4772 = vxpose.xlu0.b32.end [16/16] 0.0, 128
    %v4773 = vpop.trf.xlu0
    %v4774 = vpop.trf.xlu0
    %v4775 = vpop.trf.xlu0
    %v4776 = vpop.trf.xlu0
    %v4777 = vpop.trf.xlu0
    %v4778 = vpop.trf.xlu0
    %v4779 = vpop.trf.xlu0
    %v4780 = vpop.trf.xlu0
    %v4781 = vpop.trf.xlu0
    %v4782 = vpop.trf.xlu0
    %v4783 = vpop.trf.xlu0
    %v4784 = vpop.trf.xlu0
    %v4785 = vpop.trf.xlu0
    %v4786 = vpop.trf.xlu0
    %v4787 = vpop.trf.xlu0
    %v4788 = vpop.trf.xlu0
    %4789 = vxpose.xlu0.b32.start [1/16] %v3321, 128
    %4790 = vxpose.xlu0.b32.cont [2/16] %v3326, 128
    %4791 = vxpose.xlu0.b32.cont [3/16] %v3331, 128
    %4792 = vxpose.xlu0.b32.cont [4/16] %v3336, 128
    %4793 = vxpose.xlu0.b32.cont [5/16] 0.0, 128
    %4794 = vxpose.xlu0.b32.cont [6/16] 0.0, 128
    %4795 = vxpose.xlu0.b32.cont [7/16] 0.0, 128
    %4796 = vxpose.xlu0.b32.cont [8/16] 0.0, 128
    %4797 = vxpose.xlu0.b32.cont [9/16] 0.0, 128
    %4798 = vxpose.xlu0.b32.cont [10/16] 0.0, 128
    %4799 = vxpose.xlu0.b32.cont [11/16] 0.0, 128
    %4800 = vxpose.xlu0.b32.cont [12/16] 0.0, 128
    %4801 = vxpose.xlu0.b32.cont [13/16] 0.0, 128
    %4802 = vxpose.xlu0.b32.cont [14/16] 0.0, 128
    %4803 = vxpose.xlu0.b32.cont [15/16] 0.0, 128
    %4804 = vxpose.xlu0.b32.end [16/16] 0.0, 128
    %v4805 = vpop.trf.xlu0
    %v4806 = vpop.trf.xlu0
    %v4807 = vpop.trf.xlu0
    %v4808 = vpop.trf.xlu0
    %v4809 = vpop.trf.xlu0
    %v4810 = vpop.trf.xlu0
    %v4811 = vpop.trf.xlu0
    %v4812 = vpop.trf.xlu0
    %v4813 = vpop.trf.xlu0
    %v4814 = vpop.trf.xlu0
    %v4815 = vpop.trf.xlu0
    %v4816 = vpop.trf.xlu0
    %v4817 = vpop.trf.xlu0
    %v4818 = vpop.trf.xlu0
    %v4819 = vpop.trf.xlu0
    %v4820 = vpop.trf.xlu0
    %4821 = vxpose.xlu0.b32.start [1/16] %v3450, 128
    %4822 = vxpose.xlu0.b32.cont [2/16] %v3455, 128
    %4823 = vxpose.xlu0.b32.cont [3/16] %v3460, 128
    %4824 = vxpose.xlu0.b32.cont [4/16] %v3465, 128
    %4825 = vxpose.xlu0.b32.cont [5/16] 0.0, 128
    %4826 = vxpose.xlu0.b32.cont [6/16] 0.0, 128
    %4827 = vxpose.xlu0.b32.cont [7/16] 0.0, 128
    %4828 = vxpose.xlu0.b32.cont [8/16] 0.0, 128
    %4829 = vxpose.xlu0.b32.cont [9/16] 0.0, 128
    %4830 = vxpose.xlu0.b32.cont [10/16] 0.0, 128
    %4831 = vxpose.xlu0.b32.cont [11/16] 0.0, 128
    %4832 = vxpose.xlu0.b32.cont [12/16] 0.0, 128
    %4833 = vxpose.xlu0.b32.cont [13/16] 0.0, 128
    %4834 = vxpose.xlu0.b32.cont [14/16] 0.0, 128
    %4835 = vxpose.xlu0.b32.cont [15/16] 0.0, 128
    %4836 = vxpose.xlu0.b32.end [16/16] 0.0, 128
    %v4837 = vpop.trf.xlu0
    %v4838 = vpop.trf.xlu0
    %v4839 = vpop.trf.xlu0
    %v4840 = vpop.trf.xlu0
    %v4841 = vpop.trf.xlu0
    %v4842 = vpop.trf.xlu0
    %v4843 = vpop.trf.xlu0
    %v4844 = vpop.trf.xlu0
    %v4845 = vpop.trf.xlu0
    %v4846 = vpop.trf.xlu0
    %v4847 = vpop.trf.xlu0
    %v4848 = vpop.trf.xlu0
    %v4849 = vpop.trf.xlu0
    %v4850 = vpop.trf.xlu0
    %v4851 = vpop.trf.xlu0
    %v4852 = vpop.trf.xlu0
    %4853 = vxpose.xlu0.b32.start [1/16] %v3579, 128
    %4854 = vxpose.xlu0.b32.cont [2/16] %v3584, 128
    %4855 = vxpose.xlu0.b32.cont [3/16] %v3589, 128
    %4856 = vxpose.xlu0.b32.cont [4/16] %v3594, 128
    %4857 = vxpose.xlu0.b32.cont [5/16] 0.0, 128
    %4858 = vxpose.xlu0.b32.cont [6/16] 0.0, 128
    %4859 = vxpose.xlu0.b32.cont [7/16] 0.0, 128
    %4860 = vxpose.xlu0.b32.cont [8/16] 0.0, 128
    %4861 = vxpose.xlu0.b32.cont [9/16] 0.0, 128
    %4862 = vxpose.xlu0.b32.cont [10/16] 0.0, 128
    %4863 = vxpose.xlu0.b32.cont [11/16] 0.0, 128
    %4864 = vxpose.xlu0.b32.cont [12/16] 0.0, 128
    %4865 = vxpose.xlu0.b32.cont [13/16] 0.0, 128
    %4866 = vxpose.xlu0.b32.cont [14/16] 0.0, 128
    %4867 = vxpose.xlu0.b32.cont [15/16] 0.0, 128
    %4868 = vxpose.xlu0.b32.end [16/16] 0.0, 128
    %v4869 = vpop.trf.xlu0
    %v4870 = vpop.trf.xlu0
    %v4871 = vpop.trf.xlu0
    %v4872 = vpop.trf.xlu0
    %v4873 = vpop.trf.xlu0
    %v4874 = vpop.trf.xlu0
    %v4875 = vpop.trf.xlu0
    %v4876 = vpop.trf.xlu0
    %v4877 = vpop.trf.xlu0
    %v4878 = vpop.trf.xlu0
    %v4879 = vpop.trf.xlu0
    %v4880 = vpop.trf.xlu0
    %v4881 = vpop.trf.xlu0
    %v4882 = vpop.trf.xlu0
    %v4883 = vpop.trf.xlu0
    %v4884 = vpop.trf.xlu0
    %4885 = vxpose.xlu0.b32.start [1/16] %v3708, 128
    %4886 = vxpose.xlu0.b32.cont [2/16] %v3713, 128
    %4887 = vxpose.xlu0.b32.cont [3/16] %v3718, 128
    %4888 = vxpose.xlu0.b32.cont [4/16] %v3723, 128
    %4889 = vxpose.xlu0.b32.cont [5/16] 0.0, 128
    %4890 = vxpose.xlu0.b32.cont [6/16] 0.0, 128
    %4891 = vxpose.xlu0.b32.cont [7/16] 0.0, 128
    %4892 = vxpose.xlu0.b32.cont [8/16] 0.0, 128
    %4893 = vxpose.xlu0.b32.cont [9/16] 0.0, 128
    %4894 = vxpose.xlu0.b32.cont [10/16] 0.0, 128
    %4895 = vxpose.xlu0.b32.cont [11/16] 0.0, 128
    %4896 = vxpose.xlu0.b32.cont [12/16] 0.0, 128
    %4897 = vxpose.xlu0.b32.cont [13/16] 0.0, 128
    %4898 = vxpose.xlu0.b32.cont [14/16] 0.0, 128
    %4899 = vxpose.xlu0.b32.cont [15/16] 0.0, 128
    %4900 = vxpose.xlu0.b32.end [16/16] 0.0, 128
    %v4901 = vpop.trf.xlu0
    %v4902 = vpop.trf.xlu0
    %v4903 = vpop.trf.xlu0
    %v4904 = vpop.trf.xlu0
    %v4905 = vpop.trf.xlu0
    %v4906 = vpop.trf.xlu0
    %v4907 = vpop.trf.xlu0
    %v4908 = vpop.trf.xlu0
    %v4909 = vpop.trf.xlu0
    %v4910 = vpop.trf.xlu0
    %v4911 = vpop.trf.xlu0
    %v4912 = vpop.trf.xlu0
    %v4913 = vpop.trf.xlu0
    %v4914 = vpop.trf.xlu0
    %v4915 = vpop.trf.xlu0
    %v4916 = vpop.trf.xlu0
    %4917 = vxpose.xlu0.b32.start [1/16] %v3837, 128
    %4918 = vxpose.xlu0.b32.cont [2/16] %v3842, 128
    %4919 = vxpose.xlu0.b32.cont [3/16] %v3847, 128
    %4920 = vxpose.xlu0.b32.cont [4/16] %v3852, 128
    %4921 = vxpose.xlu0.b32.cont [5/16] 0.0, 128
    %4922 = vxpose.xlu0.b32.cont [6/16] 0.0, 128
    %4923 = vxpose.xlu0.b32.cont [7/16] 0.0, 128
    %4924 = vxpose.xlu0.b32.cont [8/16] 0.0, 128
    %4925 = vxpose.xlu0.b32.cont [9/16] 0.0, 128
    %4926 = vxpose.xlu0.b32.cont [10/16] 0.0, 128
    %4927 = vxpose.xlu0.b32.cont [11/16] 0.0, 128
    %4928 = vxpose.xlu0.b32.cont [12/16] 0.0, 128
    %4929 = vxpose.xlu0.b32.cont [13/16] 0.0, 128
    %4930 = vxpose.xlu0.b32.cont [14/16] 0.0, 128
    %4931 = vxpose.xlu0.b32.cont [15/16] 0.0, 128
    %4932 = vxpose.xlu0.b32.end [16/16] 0.0, 128
    %v4933 = vpop.trf.xlu0
    %v4934 = vpop.trf.xlu0
    %v4935 = vpop.trf.xlu0
    %v4936 = vpop.trf.xlu0
    %v4937 = vpop.trf.xlu0
    %v4938 = vpop.trf.xlu0
    %v4939 = vpop.trf.xlu0
    %v4940 = vpop.trf.xlu0
    %v4941 = vpop.trf.xlu0
    %v4942 = vpop.trf.xlu0
    %v4943 = vpop.trf.xlu0
    %v4944 = vpop.trf.xlu0
    %v4945 = vpop.trf.xlu0
    %v4946 = vpop.trf.xlu0
    %v4947 = vpop.trf.xlu0
    %v4948 = vpop.trf.xlu0
    %4949 = vxpose.xlu0.b32.start [1/16] %v3966, 128
    %4950 = vxpose.xlu0.b32.cont [2/16] %v3971, 128
    %4951 = vxpose.xlu0.b32.cont [3/16] %v3976, 128
    %4952 = vxpose.xlu0.b32.cont [4/16] %v3981, 128
    %4953 = vxpose.xlu0.b32.cont [5/16] 0.0, 128
    %4954 = vxpose.xlu0.b32.cont [6/16] 0.0, 128
    %4955 = vxpose.xlu0.b32.cont [7/16] 0.0, 128
    %4956 = vxpose.xlu0.b32.cont [8/16] 0.0, 128
    %4957 = vxpose.xlu0.b32.cont [9/16] 0.0, 128
    %4958 = vxpose.xlu0.b32.cont [10/16] 0.0, 128
    %4959 = vxpose.xlu0.b32.cont [11/16] 0.0, 128
    %4960 = vxpose.xlu0.b32.cont [12/16] 0.0, 128
    %4961 = vxpose.xlu0.b32.cont [13/16] 0.0, 128
    %4962 = vxpose.xlu0.b32.cont [14/16] 0.0, 128
    %4963 = vxpose.xlu0.b32.cont [15/16] 0.0, 128
    %4964 = vxpose.xlu0.b32.end [16/16] 0.0, 128
    %v4965 = vpop.trf.xlu0
    %v4966 = vpop.trf.xlu0
    %v4967 = vpop.trf.xlu0
    %v4968 = vpop.trf.xlu0
    %v4969 = vpop.trf.xlu0
    %v4970 = vpop.trf.xlu0
    %v4971 = vpop.trf.xlu0
    %v4972 = vpop.trf.xlu0
    %v4973 = vpop.trf.xlu0
    %v4974 = vpop.trf.xlu0
    %v4975 = vpop.trf.xlu0
    %v4976 = vpop.trf.xlu0
    %v4977 = vpop.trf.xlu0
    %v4978 = vpop.trf.xlu0
    %v4979 = vpop.trf.xlu0
    %v4980 = vpop.trf.xlu0
    %4981 = vxpose.xlu0.b32.start [1/16] %v4095, 128
    %4982 = vxpose.xlu0.b32.cont [2/16] %v4100, 128
    %4983 = vxpose.xlu0.b32.cont [3/16] %v4105, 128
    %4984 = vxpose.xlu0.b32.cont [4/16] %v4110, 128
    %4985 = vxpose.xlu0.b32.cont [5/16] 0.0, 128
    %4986 = vxpose.xlu0.b32.cont [6/16] 0.0, 128
    %4987 = vxpose.xlu0.b32.cont [7/16] 0.0, 128
    %4988 = vxpose.xlu0.b32.cont [8/16] 0.0, 128
    %4989 = vxpose.xlu0.b32.cont [9/16] 0.0, 128
    %4990 = vxpose.xlu0.b32.cont [10/16] 0.0, 128
    %4991 = vxpose.xlu0.b32.cont [11/16] 0.0, 128
    %4992 = vxpose.xlu0.b32.cont [12/16] 0.0, 128
    %4993 = vxpose.xlu0.b32.cont [13/16] 0.0, 128
    %4994 = vxpose.xlu0.b32.cont [14/16] 0.0, 128
    %4995 = vxpose.xlu0.b32.cont [15/16] 0.0, 128
    %4996 = vxpose.xlu0.b32.end [16/16] 0.0, 128
    %v4997 = vpop.trf.xlu0
    %v4998 = vpop.trf.xlu0
    %v4999 = vpop.trf.xlu0
    %v5000 = vpop.trf.xlu0
    %v5001 = vpop.trf.xlu0
    %v5002 = vpop.trf.xlu0
    %v5003 = vpop.trf.xlu0
    %v5004 = vpop.trf.xlu0
    %v5005 = vpop.trf.xlu0
    %v5006 = vpop.trf.xlu0
    %v5007 = vpop.trf.xlu0
    %v5008 = vpop.trf.xlu0
    %v5009 = vpop.trf.xlu0
    %v5010 = vpop.trf.xlu0
    %v5011 = vpop.trf.xlu0
    %v5012 = vpop.trf.xlu0
    %5013 = vxpose.xlu0.b32.start [1/16] %v4224, 128
    %5014 = vxpose.xlu0.b32.cont [2/16] %v4229, 128
    %5015 = vxpose.xlu0.b32.cont [3/16] %v4234, 128
    %5016 = vxpose.xlu0.b32.cont [4/16] %v4239, 128
    %5017 = vxpose.xlu0.b32.cont [5/16] 0.0, 128
    %5018 = vxpose.xlu0.b32.cont [6/16] 0.0, 128
    %5019 = vxpose.xlu0.b32.cont [7/16] 0.0, 128
    %5020 = vxpose.xlu0.b32.cont [8/16] 0.0, 128
    %5021 = vxpose.xlu0.b32.cont [9/16] 0.0, 128
    %5022 = vxpose.xlu0.b32.cont [10/16] 0.0, 128
    %5023 = vxpose.xlu0.b32.cont [11/16] 0.0, 128
    %5024 = vxpose.xlu0.b32.cont [12/16] 0.0, 128
    %5025 = vxpose.xlu0.b32.cont [13/16] 0.0, 128
    %5026 = vxpose.xlu0.b32.cont [14/16] 0.0, 128
    %5027 = vxpose.xlu0.b32.cont [15/16] 0.0, 128
    %5028 = vxpose.xlu0.b32.end [16/16] 0.0, 128
    %v5029 = vpop.trf.xlu0
    %v5030 = vpop.trf.xlu0
    %v5031 = vpop.trf.xlu0
    %v5032 = vpop.trf.xlu0
    %v5033 = vpop.trf.xlu0
    %v5034 = vpop.trf.xlu0
    %v5035 = vpop.trf.xlu0
    %v5036 = vpop.trf.xlu0
    %v5037 = vpop.trf.xlu0
    %v5038 = vpop.trf.xlu0
    %v5039 = vpop.trf.xlu0
    %v5040 = vpop.trf.xlu0
    %v5041 = vpop.trf.xlu0
    %v5042 = vpop.trf.xlu0
    %v5043 = vpop.trf.xlu0
    %v5044 = vpop.trf.xlu0
    %5045 = vxpose.xlu0.b32.start [1/16] %v4353, 128
    %5046 = vxpose.xlu0.b32.cont [2/16] %v4358, 128
    %5047 = vxpose.xlu0.b32.cont [3/16] %v4363, 128
    %5048 = vxpose.xlu0.b32.cont [4/16] %v4368, 128
    %5049 = vxpose.xlu0.b32.cont [5/16] 0.0, 128
    %5050 = vxpose.xlu0.b32.cont [6/16] 0.0, 128
    %5051 = vxpose.xlu0.b32.cont [7/16] 0.0, 128
    %5052 = vxpose.xlu0.b32.cont [8/16] 0.0, 128
    %5053 = vxpose.xlu0.b32.cont [9/16] 0.0, 128
    %5054 = vxpose.xlu0.b32.cont [10/16] 0.0, 128
    %5055 = vxpose.xlu0.b32.cont [11/16] 0.0, 128
    %5056 = vxpose.xlu0.b32.cont [12/16] 0.0, 128
    %5057 = vxpose.xlu0.b32.cont [13/16] 0.0, 128
    %5058 = vxpose.xlu0.b32.cont [14/16] 0.0, 128
    %5059 = vxpose.xlu0.b32.cont [15/16] 0.0, 128
    %5060 = vxpose.xlu0.b32.end [16/16] 0.0, 128
    %v5061 = vpop.trf.xlu0
    %v5062 = vpop.trf.xlu0
    %v5063 = vpop.trf.xlu0
    %v5064 = vpop.trf.xlu0
    %v5065 = vpop.trf.xlu0
    %v5066 = vpop.trf.xlu0
    %v5067 = vpop.trf.xlu0
    %v5068 = vpop.trf.xlu0
    %v5069 = vpop.trf.xlu0
    %v5070 = vpop.trf.xlu0
    %v5071 = vpop.trf.xlu0
    %v5072 = vpop.trf.xlu0
    %v5073 = vpop.trf.xlu0
    %v5074 = vpop.trf.xlu0
    %v5075 = vpop.trf.xlu0
    %v5076 = vpop.trf.xlu0
    %5077 = vxpose.xlu0.b32.start [1/16] %v4482, 128
    %5078 = vxpose.xlu0.b32.cont [2/16] %v4487, 128
    %5079 = vxpose.xlu0.b32.cont [3/16] %v4492, 128
    %5080 = vxpose.xlu0.b32.cont [4/16] %v4497, 128
    %5081 = vxpose.xlu0.b32.cont [5/16] 0.0, 128
    %5082 = vxpose.xlu0.b32.cont [6/16] 0.0, 128
    %5083 = vxpose.xlu0.b32.cont [7/16] 0.0, 128
    %5084 = vxpose.xlu0.b32.cont [8/16] 0.0, 128
    %5085 = vxpose.xlu0.b32.cont [9/16] 0.0, 128
    %5086 = vxpose.xlu0.b32.cont [10/16] 0.0, 128
    %5087 = vxpose.xlu0.b32.cont [11/16] 0.0, 128
    %5088 = vxpose.xlu0.b32.cont [12/16] 0.0, 128
    %5089 = vxpose.xlu0.b32.cont [13/16] 0.0, 128
    %5090 = vxpose.xlu0.b32.cont [14/16] 0.0, 128
    %5091 = vxpose.xlu0.b32.cont [15/16] 0.0, 128
    %5092 = vxpose.xlu0.b32.end [16/16] 0.0, 128
    %v5093 = vpop.trf.xlu0
    %v5094 = vpop.trf.xlu0
    %v5095 = vpop.trf.xlu0
    %v5096 = vpop.trf.xlu0
    %v5097 = vpop.trf.xlu0
    %v5098 = vpop.trf.xlu0
    %v5099 = vpop.trf.xlu0
    %v5100 = vpop.trf.xlu0
    %v5101 = vpop.trf.xlu0
    %v5102 = vpop.trf.xlu0
    %v5103 = vpop.trf.xlu0
    %v5104 = vpop.trf.xlu0
    %v5105 = vpop.trf.xlu0
    %v5106 = vpop.trf.xlu0
    %v5107 = vpop.trf.xlu0
    %v5108 = vpop.trf.xlu0
    %5109 = vxpose.xlu0.b32.start [1/16] %v4611, 128
    %5110 = vxpose.xlu0.b32.cont [2/16] %v4616, 128
    %5111 = vxpose.xlu0.b32.cont [3/16] %v4621, 128
    %5112 = vxpose.xlu0.b32.cont [4/16] %v4626, 128
    %5113 = vxpose.xlu0.b32.cont [5/16] 0.0, 128
    %5114 = vxpose.xlu0.b32.cont [6/16] 0.0, 128
    %5115 = vxpose.xlu0.b32.cont [7/16] 0.0, 128
    %5116 = vxpose.xlu0.b32.cont [8/16] 0.0, 128
    %5117 = vxpose.xlu0.b32.cont [9/16] 0.0, 128
    %5118 = vxpose.xlu0.b32.cont [10/16] 0.0, 128
    %5119 = vxpose.xlu0.b32.cont [11/16] 0.0, 128
    %5120 = vxpose.xlu0.b32.cont [12/16] 0.0, 128
    %5121 = vxpose.xlu0.b32.cont [13/16] 0.0, 128
    %5122 = vxpose.xlu0.b32.cont [14/16] 0.0, 128
    %5123 = vxpose.xlu0.b32.cont [15/16] 0.0, 128
    %5124 = vxpose.xlu0.b32.end [16/16] 0.0, 128
    %v5125 = vpop.trf.xlu0
    %v5126 = vpop.trf.xlu0
    %v5127 = vpop.trf.xlu0
    %v5128 = vpop.trf.xlu0
    %v5129 = vpop.trf.xlu0
    %v5130 = vpop.trf.xlu0
    %v5131 = vpop.trf.xlu0
    %v5132 = vpop.trf.xlu0
    %v5133 = vpop.trf.xlu0
    %v5134 = vpop.trf.xlu0
    %v5135 = vpop.trf.xlu0
    %v5136 = vpop.trf.xlu0
    %v5137 = vpop.trf.xlu0
    %v5138 = vpop.trf.xlu0
    %v5139 = vpop.trf.xlu0
    %v5140 = vpop.trf.xlu0
    %v5141 = vcombine.low %v4645, %v4709
    %v5143 = vunpack.c.l.s4 1983009808
    %v5144 = vunpack.c.0.s8 %v5143
    %v5145 = vlaneseq
    %v5146 = vshrl.u32 %v5145, 7
    %v5147 = vsub.s32 %v5144, %v5146
    %v5148 = vrot.slane %v5141, %v5147
    %v5149 = vcombine.low %v4677, %v4741
    %v5151 = vunpack.c.l.s4 1983009808
    %v5152 = vunpack.c.0.s8 %v5151
    %v5153 = vlaneseq
    %v5154 = vshrl.u32 %v5153, 7
    %v5155 = vsub.s32 %v5152, %v5154
    %v5156 = vrot.slane %v5149, %v5155
    %v5157 = vcombine.low %v4773, %v4837
    %v5159 = vunpack.c.l.s4 1983009808
    %v5160 = vunpack.c.0.s8 %v5159
    %v5161 = vlaneseq
    %v5162 = vshrl.u32 %v5161, 7
    %v5163 = vsub.s32 %v5160, %v5162
    %v5164 = vrot.slane %v5157, %v5163
    %v5165 = vcombine.low %v4805, %v4869
    %v5167 = vunpack.c.l.s4 1983009808
    %v5168 = vunpack.c.0.s8 %v5167
    %v5169 = vlaneseq
    %v5170 = vshrl.u32 %v5169, 7
    %v5171 = vsub.s32 %v5168, %v5170
    %v5172 = vrot.slane %v5165, %v5171
    %v5173 = vcombine.low %v5148, %v5156
    %v5175 = vunpack.c.l.s4 1934713408
    %v5176 = vunpack.c.0.s8 %v5175
    %v5177 = vlaneseq
    %v5178 = vshrl.u32 %v5177, 7
    %v5179 = vsub.s32 %v5176, %v5178
    %v5180 = vrot.slane %v5173, %v5179
    %v5181 = vcombine.low %v5164, %v5172
    %v5183 = vunpack.c.l.s4 1934713408
    %v5184 = vunpack.c.0.s8 %v5183
    %v5185 = vlaneseq
    %v5186 = vshrl.u32 %v5185, 7
    %v5187 = vsub.s32 %v5184, %v5186
    %v5188 = vrot.slane %v5181, %v5187
    %v5189 = vcombine.low %v5180, %v5188
    %v5190 = vcombine.high %v5180, %v5188
    %v5191 = vcombine.low %v4901, %v4965
    %v5193 = vunpack.c.l.s4 1983009808
    %v5194 = vunpack.c.0.s8 %v5193
    %v5195 = vlaneseq
    %v5196 = vshrl.u32 %v5195, 7
    %v5197 = vsub.s32 %v5194, %v5196
    %v5198 = vrot.slane %v5191, %v5197
    %v5199 = vcombine.low %v4933, %v4997
    %v5201 = vunpack.c.l.s4 1983009808
    %v5202 = vunpack.c.0.s8 %v5201
    %v5203 = vlaneseq
    %v5204 = vshrl.u32 %v5203, 7
    %v5205 = vsub.s32 %v5202, %v5204
    %v5206 = vrot.slane %v5199, %v5205
    %v5207 = vcombine.low %v5029, %v5093
    %v5209 = vunpack.c.l.s4 1983009808
    %v5210 = vunpack.c.0.s8 %v5209
    %v5211 = vlaneseq
    %v5212 = vshrl.u32 %v5211, 7
    %v5213 = vsub.s32 %v5210, %v5212
    %v5214 = vrot.slane %v5207, %v5213
    %v5215 = vcombine.low %v5061, %v5125
    %v5217 = vunpack.c.l.s4 1983009808
    %v5218 = vunpack.c.0.s8 %v5217
    %v5219 = vlaneseq
    %v5220 = vshrl.u32 %v5219, 7
    %v5221 = vsub.s32 %v5218, %v5220
    %v5222 = vrot.slane %v5215, %v5221
    %v5223 = vcombine.low %v5198, %v5206
    %v5225 = vunpack.c.l.s4 1934713408
    %v5226 = vunpack.c.0.s8 %v5225
    %v5227 = vlaneseq
    %v5228 = vshrl.u32 %v5227, 7
    %v5229 = vsub.s32 %v5226, %v5228
    %v5230 = vrot.slane %v5223, %v5229
    %v5231 = vcombine.low %v5214, %v5222
    %v5233 = vunpack.c.l.s4 1934713408
    %v5234 = vunpack.c.0.s8 %v5233
    %v5235 = vlaneseq
    %v5236 = vshrl.u32 %v5235, 7
    %v5237 = vsub.s32 %v5234, %v5236
    %v5238 = vrot.slane %v5231, %v5237
    %v5239 = vcombine.low %v5230, %v5238
    %v5240 = vcombine.high %v5230, %v5238
    %v5241 = vld [vmem:[#allocation7] sm:$0xff]
    %v5242 = vld [vmem:[#allocation7 + $0x8] sm:$0xff]
    %v5243 = vadd.f32 %v5189, %v5241
    %v5244 = vadd.f32 %v5239, %v5242
    %v5245 = vadd.f32 %v5190, %v5241
    %v5246 = vadd.f32 %v5240, %v5242
    %5247 = vst.msk [vmem:[#allocation8] sm:$0xff] %vm2596, %v5243
    %5248 = vst.msk [vmem:[#allocation8 + $0x8] sm:$0xff] %vm2596, %v5244
    %5249 = vst.msk [vmem:[#allocation8 + $0x10] sm:$0xff] %vm2596, %v5245
    %5250 = vst.msk [vmem:[#allocation8 + $0x18] sm:$0xff] %vm2596, %v5246
    // Predicated region
    $region26: #{tpu_custom_call.1} parent=1 // pred_check
      _
    $region27: #{tpu_custom_call.1} parent=1 // pred_check_branch
      %5252 = sbr.rel (0) target = $region29
    $region28: #{tpu_custom_call.1} parent=1 // pred_region
      %s5254 = ssub.s32 512, 512
      %5255 = vsyncadd [#allocation4], %s5254
      %s5256 = sshll.u32 [#allocation8], 4
      %s5257 = int_to_ptr.vmem [resolvable:$true] %s5256
      %5262 = dma.vmem_to_hbm [thread:$0]  %s5257, 512, %s3, [#allocation4], 128, 128, 8
    $region29: #{tpu_custom_call.1} parent=1 // pred_fallthru
      _
    // Predicated region
    $region30: #{tpu_custom_call.1} parent=1 // pred_check
      _
    $region31: #{tpu_custom_call.1} parent=1 // pred_check_branch
      %5264 = sbr.rel (0) target = $region33
    $region32: #{tpu_custom_call.1} parent=1 // pred_region
      %5265 = dma.done [#allocation4], 512
    $region33: #{tpu_custom_call.1} parent=1 // pred_fallthru
      _
    %5266 = vsyncpa [#allocation3], 1
    %5267 = vsyncpa [#allocation6], 1
    %5268 = vsyncpa [#allocation4], 1

</llo_original>
